<compile_context>
chip_gen: v6e
topology: v6e:2x2x1
jax: 0.10.0
libtpu: 0.0.40
codegen_flags: <defaults>
</compile_context>

<pallas_src>
import jax
import jax.numpy as jnp
from jax import lax
from jax.experimental import pallas as pl
from jax.experimental.pallas import tpu as pltpu  # noqa: F401  (kept for TPU-specific tuning)

NEG_SLOPE = 0.01   # F.leaky_relu default
BN_EPS = 1e-5      # nn.BatchNorm2d default
DROP_P = 0.5       # F.dropout(x, 0.5), training=True (functional default)


# ---------------------------------------------------------------------------
# Kernels
# ---------------------------------------------------------------------------
def conv_bn_pool_lrelu_kernel(p_ref, w_ref, g_ref, beta_ref, out_ref):
    """Fused im2col conv (4 corner matmuls) + training-mode BN + 2x2 maxpool + LeakyReLU.

    p_ref:   (4, M, K)  bf16  im2col patches, one slab per 2x2 pool-window corner,
                              M = N*(H//2)*(W//2), K = 9*Cin
    w_ref:   (K, Cout)  bf16
    g_ref, beta_ref: (1, Cout) f32  BN affine params
    out_ref: (M, Cout)  bf16  pooled + activated output
    """
    a0 = jnp.dot(p_ref[0], w_ref[...], preferred_element_type=jnp.float32)
    a1 = jnp.dot(p_ref[1], w_ref[...], preferred_element_type=jnp.float32)
    a2 = jnp.dot(p_ref[2], w_ref[...], preferred_element_type=jnp.float32)
    a3 = jnp.dot(p_ref[3], w_ref[...], preferred_element_type=jnp.float32)

    # One-pass, biased BN statistics over all N*H*W conv outputs (all 4 corner slabs),
    # matching torch training-mode BatchNorm2d.  The conv bias is dropped entirely:
    # a per-channel constant is cancelled by the mean subtraction.
    inv_m = 1.0 / (4.0 * a0.shape[0])
    s = (jnp.sum(a0, axis=0, keepdims=True) + jnp.sum(a1, axis=0, keepdims=True)
         + jnp.sum(a2, axis=0, keepdims=True) + jnp.sum(a3, axis=0, keepdims=True))
    ss = (jnp.sum(a0 * a0, axis=0, keepdims=True) + jnp.sum(a1 * a1, axis=0, keepdims=True)
          + jnp.sum(a2 * a2, axis=0, keepdims=True) + jnp.sum(a3 * a3, axis=0, keepdims=True))
    mean = s * inv_m
    var = jnp.maximum(ss * inv_m - mean * mean, 0.0)
    scale = g_ref[...] * lax.rsqrt(var + BN_EPS)
    shift = beta_ref[...] - mean * scale

    # Normalize each corner, max over the 2x2 window, LeakyReLU (same op order as torch).
    y = jnp.maximum(jnp.maximum(a0 * scale + shift, a1 * scale + shift),
                    jnp.maximum(a2 * scale + shift, a3 * scale + shift))
    out_ref[...] = jnp.where(y > 0, y, NEG_SLOPE * y).astype(out_ref.dtype)


def mlp_kernel(x_ref, w1_ref, b1_ref, mask_ref, w2_ref, b2_ref, out_ref):
    """fc1 -> dropout(0.5, train) -> LeakyReLU -> fc2, lane-dense (128-column) layout.

    x: (N, 784) bf16   w1: (784, 128) bf16   b1: (1, 128) f32
    mask: (N, 128) f32 (values in {0, 1/(1-p)})
    w2: (128, 128) bf16  b2: (1, 128) f32   out: (N, 128) f32 (logits in cols 0..9)
    """
    h = jnp.dot(x_ref[...], w1_ref[...], preferred_element_type=jnp.float32) + b1_ref[...]
    h = h * mask_ref[...]                                  # inverted dropout
    h = jnp.where(h > 0, h, NEG_SLOPE * h)                 # LeakyReLU
    out_ref[...] = (jnp.dot(h.astype(w2_ref.dtype), w2_ref[...],
                            preferred_element_type=jnp.float32) + b2_ref[...])


# ---------------------------------------------------------------------------
# pallas_call wrappers (whole arrays fit in VMEM at these sizes; gridless)
# ---------------------------------------------------------------------------
def conv_bn_pool_lrelu(patches, w, gamma, beta):
    _, M, _ = patches.shape
    Cout = w.shape[1]
    return pl.pallas_call(
        conv_bn_pool_lrelu_kernel,
        out_shape=jax.ShapeDtypeStruct((M, Cout), jnp.bfloat16),
    )(patches, w, gamma, beta)


def mlp(x, w1, b1, mask, w2, b2):
    return pl.pallas_call(
        mlp_kernel,
        out_shape=jax.ShapeDtypeStruct((x.shape[0], w2.shape[1]), jnp.float32),
    )(x, w1, b1, mask, w2, b2)


# ---------------------------------------------------------------------------
# Plain-JAX glue (layout only: padding / slicing / reshapes)
# ---------------------------------------------------------------------------
def corner_patches_3x3_pad1_pool2(x_nhwc):
    """(N,H,W,C) -> (4, N*(H//2)*(W//2), 9*C): 3x3/pad=1 im2col grouped by 2x2-pool corner."""
    N, H, W, C = x_nhwc.shape
    xp = jnp.pad(x_nhwc, ((0, 0), (1, 1), (1, 1), (0, 0)))
    cols = jnp.concatenate(
        [xp[:, dy:dy + H, dx:dx + W, :] for dy in range(3) for dx in range(3)], axis=-1)
    corners = jnp.stack([cols[:, 0::2, 0::2, :], cols[:, 0::2, 1::2, :],
                         cols[:, 1::2, 0::2, :], cols[:, 1::2, 1::2, :]], axis=0)
    return corners.reshape(4, N * (H // 2) * (W // 2), 9 * C)


def model_forward(x_nchw, params, dropout_key):
    N = x_nchw.shape[0]
    x = jnp.transpose(x_nchw, (0, 2, 3, 1)).astype(jnp.bfloat16)      # NHWC (N,28,28,1)

    # block 1: conv1(1->32,3x3,p=1) + bn1 + maxpool2 + leaky_relu -- one fused kernel
    p1 = corner_patches_3x3_pad1_pool2(x)                             # (4, N*196, 9)
    y = conv_bn_pool_lrelu(p1, params["w1"], params["g1"], params["be1"])  # (N*196, 32)
    y = y.reshape(N, 14, 14, 32)

    # block 2: conv2(32->16,3x3,p=1) + bn2 + maxpool2 + leaky_relu -- one fused kernel
    # TODO(synk): conv2 patches are still materialized by XLA (9x activation duplication);
    # an in-kernel shifted-window conv would remove it but needs a cross-tile reshape.
    p2 = corner_patches_3x3_pad1_pool2(y)                             # (4, N*49, 288)
    y = conv_bn_pool_lrelu(p2, params["w2"], params["g2"], params["be2"])  # (N*49, 16)

    # flatten in NHWC order; the NCHW permutation of torch's x.view(-1, 7*7*16) is
    # folded into fw1's rows at init time (no per-forward transpose).
    flat = y.reshape(N, 7 * 7 * 16)                                   # (N, 784) bf16

    # dropout mask built with jax.random (Bernoulli keep-prob 0.5, inverted scaling).
    # TODO(synk): matches torch dropout distribution/scaling, not torch's exact RNG stream.
    mask = (jax.random.bernoulli(dropout_key, 1.0 - DROP_P, (N, 128))
            .astype(jnp.float32) * (1.0 / (1.0 - DROP_P)))

    logits = mlp(flat, params["fw1"], params["fb1"], mask, params["fw2"], params["fb2"])
    return logits[:, :10]                                             # drop lane padding


def init_params(key):
    ks = jax.random.split(key, 8)
    f32, bf16 = jnp.float32, jnp.bfloat16

    # conv weights generated in torch layout (Cout, Cin, 3, 3), converted to the im2col
    # matmul layout (9*Cin, Cout) with K index (dy*3 + dx)*Cin + ci.
    def conv_w(k, cout, cin, scale):
        w_t = jax.random.normal(k, (cout, cin, 3, 3), f32) * scale
        return jnp.transpose(w_t, (2, 3, 1, 0)).reshape(9 * cin, cout).astype(bf16)

    # fc1 in torch layout (100, 784) with column order c*49 + h*7 + w (NCHW flatten).
    # Permute its columns once to the kernel's NHWC flatten order (h*112 + w*16 + c),
    # transpose, and zero-pad the 100 output units to 128 lanes.
    w1_t = jax.random.normal(ks[4], (100, 784), f32) * 0.03
    hh, ww, cc = jnp.meshgrid(jnp.arange(7), jnp.arange(7), jnp.arange(16), indexing="ij")
    perm = (cc * 49 + hh * 7 + ww).reshape(-1)          # NHWC feature idx -> NCHW feature idx
    fw1 = jnp.zeros((784, 128), f32).at[:, :100].set(w1_t.T[perm, :]).astype(bf16)
    fb1 = jnp.zeros((1, 128), f32).at[:, :100].set(
        jax.random.normal(ks[5], (1, 100), f32) * 0.03)

    # fc2 in torch layout (10, 100): transpose and zero-pad to lane-dense (128, 128).
    w2_t = jax.random.normal(ks[6], (10, 100), f32) * 0.1
    fw2 = jnp.zeros((128, 128), f32).at[:100, :10].set(w2_t.T).astype(bf16)
    fb2 = jnp.zeros((1, 128), f32).at[:, :10].set(
        jax.random.normal(ks[7], (1, 10), f32) * 0.1)

    return {
        # conv biases omitted on purpose: cancelled exactly by training-mode BN.
        "w1": conv_w(ks[0], 32, 1, 0.1),
        "g1": jnp.ones((1, 32), f32), "be1": jnp.zeros((1, 32), f32),
        "w2": conv_w(ks[2], 16, 32, 0.05),
        "g2": jnp.ones((1, 16), f32), "be2": jnp.zeros((1, 16), f32),
        "fw1": fw1, "fb1": fb1, "fw2": fw2, "fb2": fb2,
    }


if __name__ == "__main__":
    key = jax.random.PRNGKey(0)
    pkey, dkey, xkey = jax.random.split(key, 3)
    params = init_params(pkey)
    # fc1 expects 7*7*16 features => input must be (N, 1, 28, 28).
    x = jax.random.normal(xkey, (2, 1, 28, 28), jnp.float32)

    logits = jax.jit(model_forward)(x, params, dkey)
    jax.block_until_ready(logits)
    assert logits.shape == (2, 10) and logits.dtype == jnp.float32
    print("KERNEL_OK")
</pallas_src>

<mosaic_0001>
module attributes {stable_mosaic.version = 11 : i64} {
  func.func @conv_bn_pool_lrelu_kernel(%arg0: memref<4x392x9xbf16, #tpu.memory_space<vmem>>, %arg1: memref<9x32xbf16, #tpu.memory_space<vmem>>, %arg2: memref<1x32xf32, #tpu.memory_space<vmem>>, %arg3: memref<1x32xf32, #tpu.memory_space<vmem>>, %arg4: memref<392x32xbf16, #tpu.memory_space<vmem>>) attributes {dimension_semantics = [], scalar_prefetch = 0 : i64, scratch_operands = 0 : i64, tpu.core_type = #tpu.core_type<tc>} {
    %c0 = arith.constant 0 : index
    %c0_0 = arith.constant 0 : index
    %c0_1 = arith.constant 0 : index
    %0 = vector.load %arg0[%c0, %c0_0, %c0_1] : memref<4x392x9xbf16, #tpu.memory_space<vmem>>, vector<1x392x9xbf16>
    %1 = vector.shape_cast %0 : vector<1x392x9xbf16> to vector<392x9xbf16>
    %c0_2 = arith.constant 0 : index
    %c0_3 = arith.constant 0 : index
    %2 = vector.load %arg1[%c0_2, %c0_3] : memref<9x32xbf16, #tpu.memory_space<vmem>>, vector<9x32xbf16>
    %cst = arith.constant dense<0.000000e+00> : vector<392x32xf32>
    %3 = tpu.matmul %1, %2, %cst {dimension_numbers = #tpu.dot_dimension_numbers<[1], [0], [0], [1], [0, 0, 1, 1], [], []>} : vector<392x9xbf16>, vector<9x32xbf16>, vector<392x32xf32> -> vector<392x32xf32>
    %c1 = arith.constant 1 : index
    %c0_4 = arith.constant 0 : index
    %c0_5 = arith.constant 0 : index
    %4 = vector.load %arg0[%c1, %c0_4, %c0_5] : memref<4x392x9xbf16, #tpu.memory_space<vmem>>, vector<1x392x9xbf16>
    %5 = vector.shape_cast %4 : vector<1x392x9xbf16> to vector<392x9xbf16>
    %c0_6 = arith.constant 0 : index
    %c0_7 = arith.constant 0 : index
    %6 = vector.load %arg1[%c0_6, %c0_7] : memref<9x32xbf16, #tpu.memory_space<vmem>>, vector<9x32xbf16>
    %cst_8 = arith.constant dense<0.000000e+00> : vector<392x32xf32>
    %7 = tpu.matmul %5, %6, %cst_8 {dimension_numbers = #tpu.dot_dimension_numbers<[1], [0], [0], [1], [0, 0, 1, 1], [], []>} : vector<392x9xbf16>, vector<9x32xbf16>, vector<392x32xf32> -> vector<392x32xf32>
    %c2 = arith.constant 2 : index
    %c0_9 = arith.constant 0 : index
    %c0_10 = arith.constant 0 : index
    %8 = vector.load %arg0[%c2, %c0_9, %c0_10] : memref<4x392x9xbf16, #tpu.memory_space<vmem>>, vector<1x392x9xbf16>
    %9 = vector.shape_cast %8 : vector<1x392x9xbf16> to vector<392x9xbf16>
    %c0_11 = arith.constant 0 : index
    %c0_12 = arith.constant 0 : index
    %10 = vector.load %arg1[%c0_11, %c0_12] : memref<9x32xbf16, #tpu.memory_space<vmem>>, vector<9x32xbf16>
    %cst_13 = arith.constant dense<0.000000e+00> : vector<392x32xf32>
    %11 = tpu.matmul %9, %10, %cst_13 {dimension_numbers = #tpu.dot_dimension_numbers<[1], [0], [0], [1], [0, 0, 1, 1], [], []>} : vector<392x9xbf16>, vector<9x32xbf16>, vector<392x32xf32> -> vector<392x32xf32>
    %c3 = arith.constant 3 : index
    %c0_14 = arith.constant 0 : index
    %c0_15 = arith.constant 0 : index
    %12 = vector.load %arg0[%c3, %c0_14, %c0_15] : memref<4x392x9xbf16, #tpu.memory_space<vmem>>, vector<1x392x9xbf16>
    %13 = vector.shape_cast %12 : vector<1x392x9xbf16> to vector<392x9xbf16>
    %c0_16 = arith.constant 0 : index
    %c0_17 = arith.constant 0 : index
    %14 = vector.load %arg1[%c0_16, %c0_17] : memref<9x32xbf16, #tpu.memory_space<vmem>>, vector<9x32xbf16>
    %cst_18 = arith.constant dense<0.000000e+00> : vector<392x32xf32>
    %15 = tpu.matmul %13, %14, %cst_18 {dimension_numbers = #tpu.dot_dimension_numbers<[1], [0], [0], [1], [0, 0, 1, 1], [], []>} : vector<392x9xbf16>, vector<9x32xbf16>, vector<392x32xf32> -> vector<392x32xf32>
    %cst_19 = arith.constant dense<0.000000e+00> : vector<32xf32>
    %16 = vector.multi_reduction <add>, %3, %cst_19 [0] : vector<392x32xf32> to vector<32xf32>
    %17 = vector.shape_cast %16 : vector<32xf32> to vector<1x32xf32>
    %cst_20 = arith.constant dense<0.000000e+00> : vector<32xf32>
    %18 = vector.multi_reduction <add>, %7, %cst_20 [0] : vector<392x32xf32> to vector<32xf32>
    %19 = vector.shape_cast %18 : vector<32xf32> to vector<1x32xf32>
    %20 = arith.addf %17, %19 : vector<1x32xf32>
    %cst_21 = arith.constant dense<0.000000e+00> : vector<32xf32>
    %21 = vector.multi_reduction <add>, %11, %cst_21 [0] : vector<392x32xf32> to vector<32xf32>
    %22 = vector.shape_cast %21 : vector<32xf32> to vector<1x32xf32>
    %23 = arith.addf %20, %22 : vector<1x32xf32>
    %cst_22 = arith.constant dense<0.000000e+00> : vector<32xf32>
    %24 = vector.multi_reduction <add>, %15, %cst_22 [0] : vector<392x32xf32> to vector<32xf32>
    %25 = vector.shape_cast %24 : vector<32xf32> to vector<1x32xf32>
    %26 = arith.addf %23, %25 : vector<1x32xf32>
    %27 = arith.mulf %3, %3 : vector<392x32xf32>
    %cst_23 = arith.constant dense<0.000000e+00> : vector<32xf32>
    %28 = vector.multi_reduction <add>, %27, %cst_23 [0] : vector<392x32xf32> to vector<32xf32>
    %29 = vector.shape_cast %28 : vector<32xf32> to vector<1x32xf32>
    %30 = arith.mulf %7, %7 : vector<392x32xf32>
    %cst_24 = arith.constant dense<0.000000e+00> : vector<32xf32>
    %31 = vector.multi_reduction <add>, %30, %cst_24 [0] : vector<392x32xf32> to vector<32xf32>
    %32 = vector.shape_cast %31 : vector<32xf32> to vector<1x32xf32>
    %33 = arith.addf %29, %32 : vector<1x32xf32>
    %34 = arith.mulf %11, %11 : vector<392x32xf32>
    %cst_25 = arith.constant dense<0.000000e+00> : vector<32xf32>
    %35 = vector.multi_reduction <add>, %34, %cst_25 [0] : vector<392x32xf32> to vector<32xf32>
    %36 = vector.shape_cast %35 : vector<32xf32> to vector<1x32xf32>
    %37 = arith.addf %33, %36 : vector<1x32xf32>
    %38 = arith.mulf %15, %15 : vector<392x32xf32>
    %cst_26 = arith.constant dense<0.000000e+00> : vector<32xf32>
    %39 = vector.multi_reduction <add>, %38, %cst_26 [0] : vector<392x32xf32> to vector<32xf32>
    %40 = vector.shape_cast %39 : vector<32xf32> to vector<1x32xf32>
    %41 = arith.addf %37, %40 : vector<1x32xf32>
    %cst_27 = arith.constant 6.37755089E-4 : f32
    %42 = vector.broadcast %cst_27 : f32 to vector<1x32xf32>
    %43 = arith.mulf %26, %42 : vector<1x32xf32>
    %cst_28 = arith.constant 6.37755089E-4 : f32
    %44 = vector.broadcast %cst_28 : f32 to vector<1x32xf32>
    %45 = arith.mulf %41, %44 : vector<1x32xf32>
    %46 = arith.mulf %43, %43 : vector<1x32xf32>
    %47 = arith.subf %45, %46 : vector<1x32xf32>
    %cst_29 = arith.constant 0.000000e+00 : f32
    %48 = vector.broadcast %cst_29 : f32 to vector<1x32xf32>
    %49 = arith.maximumf %47, %48 : vector<1x32xf32>
    %c0_30 = arith.constant 0 : index
    %c0_31 = arith.constant 0 : index
    %50 = vector.load %arg2[%c0_30, %c0_31] : memref<1x32xf32, #tpu.memory_space<vmem>>, vector<1x32xf32>
    %cst_32 = arith.constant 9.99999974E-6 : f32
    %51 = vector.broadcast %cst_32 : f32 to vector<1x32xf32>
    %52 = arith.addf %49, %51 : vector<1x32xf32>
    %53 = math.rsqrt %52 : vector<1x32xf32>
    %54 = arith.mulf %50, %53 : vector<1x32xf32>
    %c0_33 = arith.constant 0 : index
    %c0_34 = arith.constant 0 : index
    %55 = vector.load %arg3[%c0_33, %c0_34] : memref<1x32xf32, #tpu.memory_space<vmem>>, vector<1x32xf32>
    %56 = arith.mulf %43, %54 : vector<1x32xf32>
    %57 = arith.subf %55, %56 : vector<1x32xf32>
    %58 = vector.broadcast %54 : vector<1x32xf32> to vector<392x32xf32>
    %59 = arith.mulf %3, %58 : vector<392x32xf32>
    %60 = vector.broadcast %57 : vector<1x32xf32> to vector<392x32xf32>
    %61 = arith.addf %59, %60 : vector<392x32xf32>
    %62 = vector.broadcast %54 : vector<1x32xf32> to vector<392x32xf32>
    %63 = arith.mulf %7, %62 : vector<392x32xf32>
    %64 = vector.broadcast %57 : vector<1x32xf32> to vector<392x32xf32>
    %65 = arith.addf %63, %64 : vector<392x32xf32>
    %66 = arith.maximumf %61, %65 : vector<392x32xf32>
    %67 = vector.broadcast %54 : vector<1x32xf32> to vector<392x32xf32>
    %68 = arith.mulf %11, %67 : vector<392x32xf32>
    %69 = vector.broadcast %57 : vector<1x32xf32> to vector<392x32xf32>
    %70 = arith.addf %68, %69 : vector<392x32xf32>
    %71 = vector.broadcast %54 : vector<1x32xf32> to vector<392x32xf32>
    %72 = arith.mulf %15, %71 : vector<392x32xf32>
    %73 = vector.broadcast %57 : vector<1x32xf32> to vector<392x32xf32>
    %74 = arith.addf %72, %73 : vector<392x32xf32>
    %75 = arith.maximumf %70, %74 : vector<392x32xf32>
    %76 = arith.maximumf %66, %75 : vector<392x32xf32>
    %cst_35 = arith.constant 0.000000e+00 : f32
    %77 = vector.broadcast %cst_35 : f32 to vector<392x32xf32>
    %78 = arith.cmpf ogt, %76, %77 : vector<392x32xf32>
    %cst_36 = arith.constant 0.00999999977 : f32
    %79 = vector.broadcast %cst_36 : f32 to vector<392x32xf32>
    %80 = arith.mulf %79, %76 : vector<392x32xf32>
    %81 = arith.select %78, %76, %80 : vector<392x32xi1>, vector<392x32xf32>
    %82 = arith.truncf %81 : vector<392x32xf32> to vector<392x32xbf16>
    %c0_37 = arith.constant 0 : index
    %c0_38 = arith.constant 0 : index
    %83 = vector.load %arg4[%c0_37, %c0_38] : memref<392x32xbf16, #tpu.memory_space<vmem>>, vector<392x32xbf16>
    tpu.vector_store %arg4[%c0_37, %c0_38], %82 {strides = array<i32>} : memref<392x32xbf16, #tpu.memory_space<vmem>>, vector<392x32xbf16>,
    return
  }
}

module attributes {stable_mosaic.version = 11 : i64} {
  func.func @conv_bn_pool_lrelu_kernel(%arg0: memref<4x98x288xbf16, #tpu.memory_space<vmem>>, %arg1: memref<288x16xbf16, #tpu.memory_space<vmem>>, %arg2: memref<1x16xf32, #tpu.memory_space<vmem>>, %arg3: memref<1x16xf32, #tpu.memory_space<vmem>>, %arg4: memref<98x16xbf16, #tpu.memory_space<vmem>>) attributes {dimension_semantics = [], scalar_prefetch = 0 : i64, scratch_operands = 0 : i64, tpu.core_type = #tpu.core_type<tc>} {
    %c0 = arith.constant 0 : index
    %c0_0 = arith.constant 0 : index
    %c0_1 = arith.constant 0 : index
    %0 = vector.load %arg0[%c0, %c0_0, %c0_1] : memref<4x98x288xbf16, #tpu.memory_space<vmem>>, vector<1x98x288xbf16>
    %1 = vector.shape_cast %0 : vector<1x98x288xbf16> to vector<98x288xbf16>
    %c0_2 = arith.constant 0 : index
    %c0_3 = arith.constant 0 : index
    %2 = vector.load %arg1[%c0_2, %c0_3] : memref<288x16xbf16, #tpu.memory_space<vmem>>, vector<288x16xbf16>
    %cst = arith.constant dense<0.000000e+00> : vector<98x16xf32>
    %3 = tpu.matmul %1, %2, %cst {dimension_numbers = #tpu.dot_dimension_numbers<[1], [0], [0], [1], [0, 0, 1, 1], [], []>} : vector<98x288xbf16>, vector<288x16xbf16>, vector<98x16xf32> -> vector<98x16xf32>
    %c1 = arith.constant 1 : index
    %c0_4 = arith.constant 0 : index
    %c0_5 = arith.constant 0 : index
    %4 = vector.load %arg0[%c1, %c0_4, %c0_5] : memref<4x98x288xbf16, #tpu.memory_space<vmem>>, vector<1x98x288xbf16>
    %5 = vector.shape_cast %4 : vector<1x98x288xbf16> to vector<98x288xbf16>
    %c0_6 = arith.constant 0 : index
    %c0_7 = arith.constant 0 : index
    %6 = vector.load %arg1[%c0_6, %c0_7] : memref<288x16xbf16, #tpu.memory_space<vmem>>, vector<288x16xbf16>
    %cst_8 = arith.constant dense<0.000000e+00> : vector<98x16xf32>
    %7 = tpu.matmul %5, %6, %cst_8 {dimension_numbers = #tpu.dot_dimension_numbers<[1], [0], [0], [1], [0, 0, 1, 1], [], []>} : vector<98x288xbf16>, vector<288x16xbf16>, vector<98x16xf32> -> vector<98x16xf32>
    %c2 = arith.constant 2 : index
    %c0_9 = arith.constant 0 : index
    %c0_10 = arith.constant 0 : index
    %8 = vector.load %arg0[%c2, %c0_9, %c0_10] : memref<4x98x288xbf16, #tpu.memory_space<vmem>>, vector<1x98x288xbf16>
    %9 = vector.shape_cast %8 : vector<1x98x288xbf16> to vector<98x288xbf16>
    %c0_11 = arith.constant 0 : index
    %c0_12 = arith.constant 0 : index
    %10 = vector.load %arg1[%c0_11, %c0_12] : memref<288x16xbf16, #tpu.memory_space<vmem>>, vector<288x16xbf16>
    %cst_13 = arith.constant dense<0.000000e+00> : vector<98x16xf32>
    %11 = tpu.matmul %9, %10, %cst_13 {dimension_numbers = #tpu.dot_dimension_numbers<[1], [0], [0], [1], [0, 0, 1, 1], [], []>} : vector<98x288xbf16>, vector<288x16xbf16>, vector<98x16xf32> -> vector<98x16xf32>
    %c3 = arith.constant 3 : index
    %c0_14 = arith.constant 0 : index
    %c0_15 = arith.constant 0 : index
    %12 = vector.load %arg0[%c3, %c0_14, %c0_15] : memref<4x98x288xbf16, #tpu.memory_space<vmem>>, vector<1x98x288xbf16>
    %13 = vector.shape_cast %12 : vector<1x98x288xbf16> to vector<98x288xbf16>
    %c0_16 = arith.constant 0 : index
    %c0_17 = arith.constant 0 : index
    %14 = vector.load %arg1[%c0_16, %c0_17] : memref<288x16xbf16, #tpu.memory_space<vmem>>, vector<288x16xbf16>
    %cst_18 = arith.constant dense<0.000000e+00> : vector<98x16xf32>
    %15 = tpu.matmul %13, %14, %cst_18 {dimension_numbers = #tpu.dot_dimension_numbers<[1], [0], [0], [1], [0, 0, 1, 1], [], []>} : vector<98x288xbf16>, vector<288x16xbf16>, vector<98x16xf32> -> vector<98x16xf32>
    %cst_19 = arith.constant dense<0.000000e+00> : vector<16xf32>
    %16 = vector.multi_reduction <add>, %3, %cst_19 [0] : vector<98x16xf32> to vector<16xf32>
    %17 = vector.shape_cast %16 : vector<16xf32> to vector<1x16xf32>
    %cst_20 = arith.constant dense<0.000000e+00> : vector<16xf32>
    %18 = vector.multi_reduction <add>, %7, %cst_20 [0] : vector<98x16xf32> to vector<16xf32>
    %19 = vector.shape_cast %18 : vector<16xf32> to vector<1x16xf32>
    %20 = arith.addf %17, %19 : vector<1x16xf32>
    %cst_21 = arith.constant dense<0.000000e+00> : vector<16xf32>
    %21 = vector.multi_reduction <add>, %11, %cst_21 [0] : vector<98x16xf32> to vector<16xf32>
    %22 = vector.shape_cast %21 : vector<16xf32> to vector<1x16xf32>
    %23 = arith.addf %20, %22 : vector<1x16xf32>
    %cst_22 = arith.constant dense<0.000000e+00> : vector<16xf32>
    %24 = vector.multi_reduction <add>, %15, %cst_22 [0] : vector<98x16xf32> to vector<16xf32>
    %25 = vector.shape_cast %24 : vector<16xf32> to vector<1x16xf32>
    %26 = arith.addf %23, %25 : vector<1x16xf32>
    %27 = arith.mulf %3, %3 : vector<98x16xf32>
    %cst_23 = arith.constant dense<0.000000e+00> : vector<16xf32>
    %28 = vector.multi_reduction <add>, %27, %cst_23 [0] : vector<98x16xf32> to vector<16xf32>
    %29 = vector.shape_cast %28 : vector<16xf32> to vector<1x16xf32>
    %30 = arith.mulf %7, %7 : vector<98x16xf32>
    %cst_24 = arith.constant dense<0.000000e+00> : vector<16xf32>
    %31 = vector.multi_reduction <add>, %30, %cst_24 [0] : vector<98x16xf32> to vector<16xf32>
    %32 = vector.shape_cast %31 : vector<16xf32> to vector<1x16xf32>
    %33 = arith.addf %29, %32 : vector<1x16xf32>
    %34 = arith.mulf %11, %11 : vector<98x16xf32>
    %cst_25 = arith.constant dense<0.000000e+00> : vector<16xf32>
    %35 = vector.multi_reduction <add>, %34, %cst_25 [0] : vector<98x16xf32> to vector<16xf32>
    %36 = vector.shape_cast %35 : vector<16xf32> to vector<1x16xf32>
    %37 = arith.addf %33, %36 : vector<1x16xf32>
    %38 = arith.mulf %15, %15 : vector<98x16xf32>
    %cst_26 = arith.constant dense<0.000000e+00> : vector<16xf32>
    %39 = vector.multi_reduction <add>, %38, %cst_26 [0] : vector<98x16xf32> to vector<16xf32>
    %40 = vector.shape_cast %39 : vector<16xf32> to vector<1x16xf32>
    %41 = arith.addf %37, %40 : vector<1x16xf32>
    %cst_27 = arith.constant 0.00255102036 : f32
    %42 = vector.broadcast %cst_27 : f32 to vector<1x16xf32>
    %43 = arith.mulf %26, %42 : vector<1x16xf32>
    %cst_28 = arith.constant 0.00255102036 : f32
    %44 = vector.broadcast %cst_28 : f32 to vector<1x16xf32>
    %45 = arith.mulf %41, %44 : vector<1x16xf32>
    %46 = arith.mulf %43, %43 : vector<1x16xf32>
    %47 = arith.subf %45, %46 : vector<1x16xf32>
    %cst_29 = arith.constant 0.000000e+00 : f32
    %48 = vector.broadcast %cst_29 : f32 to vector<1x16xf32>
    %49 = arith.maximumf %47, %48 : vector<1x16xf32>
    %c0_30 = arith.constant 0 : index
    %c0_31 = arith.constant 0 : index
    %50 = vector.load %arg2[%c0_30, %c0_31] : memref<1x16xf32, #tpu.memory_space<vmem>>, vector<1x16xf32>
    %cst_32 = arith.constant 9.99999974E-6 : f32
    %51 = vector.broadcast %cst_32 : f32 to vector<1x16xf32>
    %52 = arith.addf %49, %51 : vector<1x16xf32>
    %53 = math.rsqrt %52 : vector<1x16xf32>
    %54 = arith.mulf %50, %53 : vector<1x16xf32>
    %c0_33 = arith.constant 0 : index
    %c0_34 = arith.constant 0 : index
    %55 = vector.load %arg3[%c0_33, %c0_34] : memref<1x16xf32, #tpu.memory_space<vmem>>, vector<1x16xf32>
    %56 = arith.mulf %43, %54 : vector<1x16xf32>
    %57 = arith.subf %55, %56 : vector<1x16xf32>
    %58 = vector.broadcast %54 : vector<1x16xf32> to vector<98x16xf32>
    %59 = arith.mulf %3, %58 : vector<98x16xf32>
    %60 = vector.broadcast %57 : vector<1x16xf32> to vector<98x16xf32>
    %61 = arith.addf %59, %60 : vector<98x16xf32>
    %62 = vector.broadcast %54 : vector<1x16xf32> to vector<98x16xf32>
    %63 = arith.mulf %7, %62 : vector<98x16xf32>
    %64 = vector.broadcast %57 : vector<1x16xf32> to vector<98x16xf32>
    %65 = arith.addf %63, %64 : vector<98x16xf32>
    %66 = arith.maximumf %61, %65 : vector<98x16xf32>
    %67 = vector.broadcast %54 : vector<1x16xf32> to vector<98x16xf32>
    %68 = arith.mulf %11, %67 : vector<98x16xf32>
    %69 = vector.broadcast %57 : vector<1x16xf32> to vector<98x16xf32>
    %70 = arith.addf %68, %69 : vector<98x16xf32>
    %71 = vector.broadcast %54 : vector<1x16xf32> to vector<98x16xf32>
    %72 = arith.mulf %15, %71 : vector<98x16xf32>
    %73 = vector.broadcast %57 : vector<1x16xf32> to vector<98x16xf32>
    %74 = arith.addf %72, %73 : vector<98x16xf32>
    %75 = arith.maximumf %70, %74 : vector<98x16xf32>
    %76 = arith.maximumf %66, %75 : vector<98x16xf32>
    %cst_35 = arith.constant 0.000000e+00 : f32
    %77 = vector.broadcast %cst_35 : f32 to vector<98x16xf32>
    %78 = arith.cmpf ogt, %76, %77 : vector<98x16xf32>
    %cst_36 = arith.constant 0.00999999977 : f32
    %79 = vector.broadcast %cst_36 : f32 to vector<98x16xf32>
    %80 = arith.mulf %79, %76 : vector<98x16xf32>
    %81 = arith.select %78, %76, %80 : vector<98x16xi1>, vector<98x16xf32>
    %82 = arith.truncf %81 : vector<98x16xf32> to vector<98x16xbf16>
    %c0_37 = arith.constant 0 : index
    %c0_38 = arith.constant 0 : index
    %83 = vector.load %arg4[%c0_37, %c0_38] : memref<98x16xbf16, #tpu.memory_space<vmem>>, vector<98x16xbf16>
    tpu.vector_store %arg4[%c0_37, %c0_38], %82 {strides = array<i32>} : memref<98x16xbf16, #tpu.memory_space<vmem>>, vector<98x16xbf16>,
    return
  }
}

module attributes {stable_mosaic.version = 11 : i64} {
  func.func @mlp_kernel(%arg0: memref<2x784xbf16, #tpu.memory_space<vmem>>, %arg1: memref<784x128xbf16, #tpu.memory_space<vmem>>, %arg2: memref<1x128xf32, #tpu.memory_space<vmem>>, %arg3: memref<2x128xf32, #tpu.memory_space<vmem>>, %arg4: memref<128x128xbf16, #tpu.memory_space<vmem>>, %arg5: memref<1x128xf32, #tpu.memory_space<vmem>>, %arg6: memref<2x128xf32, #tpu.memory_space<vmem>>) attributes {dimension_semantics = [], scalar_prefetch = 0 : i64, scratch_operands = 0 : i64, tpu.core_type = #tpu.core_type<tc>} {
    %c0 = arith.constant 0 : index
    %c0_0 = arith.constant 0 : index
    %0 = vector.load %arg0[%c0, %c0_0] : memref<2x784xbf16, #tpu.memory_space<vmem>>, vector<2x784xbf16>
    %c0_1 = arith.constant 0 : index
    %c0_2 = arith.constant 0 : index
    %1 = vector.load %arg1[%c0_1, %c0_2] : memref<784x128xbf16, #tpu.memory_space<vmem>>, vector<784x128xbf16>
    %cst = arith.constant dense<0.000000e+00> : vector<2x128xf32>
    %2 = tpu.matmul %0, %1, %cst {dimension_numbers = #tpu.dot_dimension_numbers<[1], [0], [0], [1], [0, 0, 1, 1], [], []>} : vector<2x784xbf16>, vector<784x128xbf16>, vector<2x128xf32> -> vector<2x128xf32>
    %c0_3 = arith.constant 0 : index
    %c0_4 = arith.constant 0 : index
    %3 = vector.load %arg2[%c0_3, %c0_4] : memref<1x128xf32, #tpu.memory_space<vmem>>, vector<1x128xf32>
    %4 = vector.broadcast %3 : vector<1x128xf32> to vector<2x128xf32>
    %5 = arith.addf %2, %4 : vector<2x128xf32>
    %c0_5 = arith.constant 0 : index
    %c0_6 = arith.constant 0 : index
    %6 = vector.load %arg3[%c0_5, %c0_6] : memref<2x128xf32, #tpu.memory_space<vmem>>, vector<2x128xf32>
    %7 = arith.mulf %5, %6 : vector<2x128xf32>
    %cst_7 = arith.constant 0.000000e+00 : f32
    %8 = vector.broadcast %cst_7 : f32 to vector<2x128xf32>
    %9 = arith.cmpf ogt, %7, %8 : vector<2x128xf32>
    %cst_8 = arith.constant 0.00999999977 : f32
    %10 = vector.broadcast %cst_8 : f32 to vector<2x128xf32>
    %11 = arith.mulf %10, %7 : vector<2x128xf32>
    %12 = arith.select %9, %7, %11 : vector<2x128xi1>, vector<2x128xf32>
    %13 = arith.truncf %12 : vector<2x128xf32> to vector<2x128xbf16>
    %c0_9 = arith.constant 0 : index
    %c0_10 = arith.constant 0 : index
    %14 = vector.load %arg4[%c0_9, %c0_10] : memref<128x128xbf16, #tpu.memory_space<vmem>>, vector<128x128xbf16>
    %cst_11 = arith.constant dense<0.000000e+00> : vector<2x128xf32>
    %15 = tpu.matmul %13, %14, %cst_11 {dimension_numbers = #tpu.dot_dimension_numbers<[1], [0], [0], [1], [0, 0, 1, 1], [], []>} : vector<2x128xbf16>, vector<128x128xbf16>, vector<2x128xf32> -> vector<2x128xf32>
    %c0_12 = arith.constant 0 : index
    %c0_13 = arith.constant 0 : index
    %16 = vector.load %arg5[%c0_12, %c0_13] : memref<1x128xf32, #tpu.memory_space<vmem>>, vector<1x128xf32>
    %17 = vector.broadcast %16 : vector<1x128xf32> to vector<2x128xf32>
    %18 = arith.addf %15, %17 : vector<2x128xf32>
    %c0_14 = arith.constant 0 : index
    %c0_15 = arith.constant 0 : index
    %19 = vector.load %arg6[%c0_14, %c0_15] : memref<2x128xf32, #tpu.memory_space<vmem>>, vector<2x128xf32>
    tpu.vector_store %arg6[%c0_14, %c0_15], %18 {strides = array<i32>} : memref<2x128xf32, #tpu.memory_space<vmem>>, vector<2x128xf32>,
    return
  }
}

</mosaic_0001>

<llo_original>
// kernel: model_forward.3
$region0: #{model_forward.3}
  #allocation0 [shape = 'u32[]', space=smem, size = 0x4, offset = 0x4, fixed_abs, tag = 'smem constant byte address 0x4 - core index']
  #allocation1 [shape = 'u32[144,128]{1,0:T(1,128)}', space=vmem, size = 0x12000, scoped, tag = 'internal scratch']
  %s0 = inlined_call_operand.vmem [shape: bf16[4,392,9], index: 0, kind: input, shape index: {}]
  %s1 = inlined_call_operand.vmem [shape: bf16[9,32], index: 1, kind: input, shape index: {}]
  %s2 = inlined_call_operand.vmem [shape: f32[1,32], index: 2, kind: input, shape index: {}]
  %s3 = inlined_call_operand.vmem [shape: f32[1,32], index: 3, kind: input, shape index: {}]
  %s4 = inlined_call_operand.vmem [shape: bf16[392,32], index: 4, kind: output, shape index: {}]
  %s5 = sld [smem:[#allocation0]]
  $region26: #{model_forward.3} parent=0
    _
  %s7 = ssub.s32 1, %s5
  %s8 = scalar_select 0, %s7, %s5
  // Predicated region
  $region2: #{model_forward.3} parent=0 // pred_check
    _
  $region3: #{model_forward.3} parent=0 // pred_check_branch
    %10 = sbr.rel (0) target = $region5
  $region4: #{model_forward.3} parent=0 // pred_region
    _
  $region5: #{model_forward.3} parent=0 // pred_fallthru
    _
  // Predicated region
  $region6: #{model_forward.3} parent=0 // pred_check
    _
  $region7: #{model_forward.3} parent=0 // pred_check_branch
    %12 = sbr.rel (0) target = $region9
  $region8: #{model_forward.3} parent=0 // pred_region
    _
  $region9: #{model_forward.3} parent=0 // pred_fallthru
    _
  // Predicated region
  $region10: #{model_forward.3} parent=0 // pred_check
    _
  $region11: #{model_forward.3} parent=0 // pred_check_branch
    %14 = sbr.rel (0) target = $region13
  $region12: #{model_forward.3} parent=0 // pred_region
    _
  $region13: #{model_forward.3} parent=0 // pred_fallthru
    _
  // Predicated region
  $region14: #{model_forward.3} parent=0 // pred_check
    _
  $region15: #{model_forward.3} parent=0 // pred_check_branch
    %16 = sbr.rel (0) target = $region17
  $region16: #{model_forward.3} parent=0 // pred_region
    _
  $region17: #{model_forward.3} parent=0 // pred_fallthru
    _
  %v18 = vld [vmem:[%s0] sm:$0xf]
  %v19 = vld [vmem:[%s0 + $0x4] sm:$0xf]
  %v20 = vld [vmem:[%s0 + $0x8] sm:$0xf]
  %v21 = vld [vmem:[%s0 + $0xc] sm:$0xf]
  %v22 = vld [vmem:[%s0 + $0x10] sm:$0xf]
  %v23 = vld [vmem:[%s0 + $0x14] sm:$0xf]
  %v24 = vld [vmem:[%s0 + $0x18] sm:$0xf]
  %v25 = vld [vmem:[%s0 + $0x1c] sm:$0xf]
  %v26 = vld [vmem:[%s0 + $0x20] sm:$0xf]
  %v27 = vld [vmem:[%s0 + $0x24] sm:$0xf]
  %v28 = vld [vmem:[%s0 + $0x28] sm:$0xf]
  %v29 = vld [vmem:[%s0 + $0x2c] sm:$0xf]
  %v30 = vld [vmem:[%s0 + $0x30] sm:$0xf]
  %v31 = vld [vmem:[%s0 + $0x34] sm:$0xf]
  %v32 = vld [vmem:[%s0 + $0x38] sm:$0xf]
  %v33 = vld [vmem:[%s0 + $0x3c] sm:$0xf]
  %v34 = vld [vmem:[%s0 + $0x40] sm:$0xf]
  %v35 = vld [vmem:[%s0 + $0x44] sm:$0xf]
  %v36 = vld [vmem:[%s0 + $0x48] sm:$0xf]
  %v37 = vld [vmem:[%s0 + $0x4c] sm:$0xf]
  %v38 = vld [vmem:[%s0 + $0x50] sm:$0xf]
  %v39 = vld [vmem:[%s0 + $0x54] sm:$0xf]
  %v40 = vld [vmem:[%s0 + $0x58] sm:$0xf]
  %v41 = vld [vmem:[%s0 + $0x5c] sm:$0xf]
  %v42 = vld [vmem:[%s0 + $0x60] sm:$0xf]
  %v43 = vld [vmem:[%s0 + $0x64] sm:$0xf]
  %v44 = vld [vmem:[%s0 + $0x68] sm:$0xf]
  %v45 = vld [vmem:[%s0 + $0x6c] sm:$0xf]
  %v46 = vld [vmem:[%s0 + $0x70] sm:$0xf]
  %v47 = vld [vmem:[%s0 + $0x74] sm:$0xf]
  %v48 = vld [vmem:[%s0 + $0x78] sm:$0xf]
  %v49 = vld [vmem:[%s0 + $0x7c] sm:$0xf]
  %v50 = vld [vmem:[%s0 + $0x80] sm:$0xf]
  %v51 = vld [vmem:[%s0 + $0x84] sm:$0xf]
  %v52 = vld [vmem:[%s0 + $0x88] sm:$0xf]
  %v53 = vld [vmem:[%s0 + $0x8c] sm:$0xf]
  %v54 = vld [vmem:[%s0 + $0x90] sm:$0xf]
  %v55 = vld [vmem:[%s0 + $0x94] sm:$0xf]
  %v56 = vld [vmem:[%s0 + $0x98] sm:$0xf]
  %v57 = vld [vmem:[%s0 + $0x9c] sm:$0xf]
  %v58 = vld [vmem:[%s0 + $0xa0] sm:$0xf]
  %v59 = vld [vmem:[%s0 + $0xa4] sm:$0xf]
  %v60 = vld [vmem:[%s0 + $0xa8] sm:$0xf]
  %v61 = vld [vmem:[%s0 + $0xac] sm:$0xf]
  %v62 = vld [vmem:[%s0 + $0xb0] sm:$0xf]
  %v63 = vld [vmem:[%s0 + $0xb4] sm:$0xf]
  %v64 = vld [vmem:[%s0 + $0xb8] sm:$0xf]
  %v65 = vld [vmem:[%s0 + $0xbc] sm:$0xf]
  %v66 = vld [vmem:[%s0 + $0xc0] sm:$0xf]
  %v67 = vld [vmem:[%s1] sm:$0xf]
  %v68 = vld [vmem:[%s1 + $0x4] sm:$0x1]
  %v118 = vunpack.c.l.b16 %v18
  %v119 = vunpack.c.l.b16 %v19
  %v120 = vunpack.c.l.b16 %v20
  %v121 = vunpack.c.l.b16 %v21
  %v122 = vunpack.c.l.b16 %v22
  %v123 = vunpack.c.l.b16 %v23
  %v124 = vunpack.c.l.b16 %v24
  %v125 = vunpack.c.l.b16 %v25
  %v126 = vunpack.c.l.b16 %v26
  %v127 = vunpack.c.l.b16 %v27
  %v128 = vunpack.c.l.b16 %v28
  %v129 = vunpack.c.l.b16 %v29
  %v130 = vunpack.c.l.b16 %v30
  %v131 = vunpack.c.l.b16 %v31
  %v132 = vunpack.c.l.b16 %v32
  %v133 = vunpack.c.l.b16 %v33
  %v134 = vunpack.c.l.b16 %v34
  %v135 = vunpack.c.l.b16 %v35
  %v136 = vunpack.c.l.b16 %v36
  %v137 = vunpack.c.l.b16 %v37
  %v138 = vunpack.c.l.b16 %v38
  %v139 = vunpack.c.l.b16 %v39
  %v140 = vunpack.c.l.b16 %v40
  %v141 = vunpack.c.l.b16 %v41
  %v142 = vunpack.c.l.b16 %v42
  %v143 = vunpack.c.l.b16 %v43
  %v144 = vunpack.c.l.b16 %v44
  %v145 = vunpack.c.l.b16 %v45
  %v146 = vunpack.c.l.b16 %v46
  %v147 = vunpack.c.l.b16 %v47
  %v148 = vunpack.c.l.b16 %v48
  %v149 = vunpack.c.l.b16 %v49
  %v150 = vunpack.c.l.b16 %v50
  %v151 = vunpack.c.l.b16 %v51
  %v152 = vunpack.c.l.b16 %v52
  %v153 = vunpack.c.l.b16 %v53
  %v154 = vunpack.c.l.b16 %v54
  %v155 = vunpack.c.l.b16 %v55
  %v156 = vunpack.c.l.b16 %v56
  %v157 = vunpack.c.l.b16 %v57
  %v158 = vunpack.c.l.b16 %v58
  %v159 = vunpack.c.l.b16 %v59
  %v160 = vunpack.c.l.b16 %v60
  %v161 = vunpack.c.l.b16 %v61
  %v162 = vunpack.c.l.b16 %v62
  %v163 = vunpack.c.l.b16 %v63
  %v164 = vunpack.c.l.b16 %v64
  %v165 = vunpack.c.l.b16 %v65
  %v166 = vunpack.c.l.b16 %v66
  %v167 = vpack.c.b16 %v119, %v118
  %v168 = vpack.c.b16 %v121, %v120
  %v169 = vpack.c.b16 %v123, %v122
  %v170 = vpack.c.b16 %v125, %v124
  %v171 = vpack.c.b16 %v127, %v126
  %v172 = vpack.c.b16 %v129, %v128
  %v173 = vpack.c.b16 %v131, %v130
  %v174 = vpack.c.b16 %v133, %v132
  %v175 = vpack.c.b16 %v135, %v134
  %v176 = vpack.c.b16 %v137, %v136
  %v177 = vpack.c.b16 %v139, %v138
  %v178 = vpack.c.b16 %v141, %v140
  %v179 = vpack.c.b16 %v143, %v142
  %v180 = vpack.c.b16 %v145, %v144
  %v181 = vpack.c.b16 %v147, %v146
  %v182 = vpack.c.b16 %v149, %v148
  %v183 = vpack.c.b16 %v151, %v150
  %v184 = vpack.c.b16 %v153, %v152
  %v185 = vpack.c.b16 %v155, %v154
  %v186 = vpack.c.b16 %v157, %v156
  %v187 = vpack.c.b16 %v159, %v158
  %v188 = vpack.c.b16 %v161, %v160
  %v189 = vpack.c.b16 %v163, %v162
  %v190 = vpack.c.b16 %v165, %v164
  %v191 = vpack.c.b16 %v166, %v166
  %v194 = vunpack.c.l.b16 %v67
  %v195 = vunpack.c.l.b16 %v68
  %v196 = vpack.c.b16 %v195, %v194
  %vm197 = vcmask 72704
  %v199 = vsel %vm197, %v167, 0
  %v202 = vsel %vm197, %v168, 0
  %v205 = vsel %vm197, %v169, 0
  %v208 = vsel %vm197, %v170, 0
  %v211 = vsel %vm197, %v171, 0
  %v214 = vsel %vm197, %v172, 0
  %v217 = vsel %vm197, %v173, 0
  %v220 = vsel %vm197, %v174, 0
  %v223 = vsel %vm197, %v175, 0
  %v226 = vsel %vm197, %v176, 0
  %v229 = vsel %vm197, %v177, 0
  %v232 = vsel %vm197, %v178, 0
  %v235 = vsel %vm197, %v179, 0
  %v238 = vsel %vm197, %v180, 0
  %v241 = vsel %vm197, %v181, 0
  %v244 = vsel %vm197, %v182, 0
  %v247 = vsel %vm197, %v183, 0
  %v250 = vsel %vm197, %v184, 0
  %v253 = vsel %vm197, %v185, 0
  %v256 = vsel %vm197, %v186, 0
  %v259 = vsel %vm197, %v187, 0
  %v262 = vsel %vm197, %v188, 0
  %v265 = vsel %vm197, %v189, 0
  %v268 = vsel %vm197, %v190, 0
  %v271 = vsel %vm197, %v191, 0
  %vm273 = vcmask 1043456
  %vm274 = vcmask 1044480
  %v275 = vsel %vm273, 4294967295, 65535
  %v276 = vsel %vm274, %v275, 0
  %v278 = vand.u32 %v196, %v276
  %280 = vmatprep.subr.bf16.mxu0 0
  %281 = vmatpush1.bf16.msra.mxu0 0
  %282 = vmatprep.subr.bf16.mxu0 0
  %283 = vmatpush1.bf16.msra.mxu0 0
  %284 = vmatprep.subr.bf16.mxu0 0
  %285 = vmatpush1.bf16.msra.mxu0 0
  %286 = vmatprep.subr.bf16.mxu0 0
  %287 = vmatpush1.bf16.msra.mxu0 0
  %288 = vmatprep.subr.bf16.mxu0 0
  %289 = vmatpush1.bf16.msra.mxu0 0
  %290 = vmatprep.subr.bf16.mxu0 0
  %291 = vmatpush1.bf16.msra.mxu0 0
  %292 = vmatprep.subr.bf16.mxu0 0
  %293 = vmatpush1.bf16.msra.mxu0 0
  %294 = vmatprep.subr.bf16.mxu0 0
  %295 = vmatpush1.bf16.msra.mxu0 %v278
  %296 = vmatprep.subr.bf16.mxu0 0
  %297 = vmatpush2.bf16.msra.mxu0 0
  %298 = vmatprep.subr.bf16.mxu0 0
  %299 = vmatpush2.bf16.msra.mxu0 0
  %300 = vmatprep.subr.bf16.mxu0 0
  %301 = vmatpush2.bf16.msra.mxu0 0
  %302 = vmatprep.subr.bf16.mxu0 0
  %303 = vmatpush2.bf16.msra.mxu0 0
  %304 = vmatprep.subr.bf16.mxu0 0
  %305 = vmatpush2.bf16.msra.mxu0 0
  %306 = vmatprep.subr.bf16.mxu0 0
  %307 = vmatpush2.bf16.msra.mxu0 0
  %308 = vmatprep.subr.bf16.mxu0 0
  %309 = vmatpush2.bf16.msra.mxu0 0
  %310 = vmatprep.subr.bf16.mxu0 0
  %311 = vmatpush2.bf16.msra.mxu0 0
  %312 = vmatprep.mubr.bf16.mxu0 0
  %313 = vmatmul.mubr.bf16.gmra.mxu0 %v199
  %v314 = vpop.f32.mrf.mxu0
  %v315 = vadd.f32 0.0, %v314
  %v316 = vpop.f32.mrf.mxu0
  %v317 = vpop.f32.mrf.mxu0
  %v318 = vadd.f32 0.0, %v317
  %v319 = vpop.f32.mrf.mxu0
  %320 = vmatprep.mubr.bf16.mxu0 0
  %321 = vmatmul.mubr.bf16.gmra.mxu0 %v202
  %v322 = vpop.f32.mrf.mxu0
  %v323 = vadd.f32 0.0, %v322
  %v324 = vpop.f32.mrf.mxu0
  %v325 = vpop.f32.mrf.mxu0
  %v326 = vadd.f32 0.0, %v325
  %v327 = vpop.f32.mrf.mxu0
  %328 = vmatprep.mubr.bf16.mxu0 0
  %329 = vmatmul.mubr.bf16.gmra.mxu0 %v205
  %v330 = vpop.f32.mrf.mxu0
  %v331 = vadd.f32 0.0, %v330
  %v332 = vpop.f32.mrf.mxu0
  %v333 = vpop.f32.mrf.mxu0
  %v334 = vadd.f32 0.0, %v333
  %v335 = vpop.f32.mrf.mxu0
  %336 = vmatprep.mubr.bf16.mxu0 0
  %337 = vmatmul.mubr.bf16.gmra.mxu0 %v208
  %v338 = vpop.f32.mrf.mxu0
  %v339 = vadd.f32 0.0, %v338
  %v340 = vpop.f32.mrf.mxu0
  %v341 = vpop.f32.mrf.mxu0
  %v342 = vadd.f32 0.0, %v341
  %v343 = vpop.f32.mrf.mxu0
  %344 = vmatprep.mubr.bf16.mxu0 0
  %345 = vmatmul.mubr.bf16.gmra.mxu0 %v211
  %v346 = vpop.f32.mrf.mxu0
  %v347 = vadd.f32 0.0, %v346
  %v348 = vpop.f32.mrf.mxu0
  %v349 = vpop.f32.mrf.mxu0
  %v350 = vadd.f32 0.0, %v349
  %v351 = vpop.f32.mrf.mxu0
  %352 = vmatprep.mubr.bf16.mxu0 0
  %353 = vmatmul.mubr.bf16.gmra.mxu0 %v214
  %v354 = vpop.f32.mrf.mxu0
  %v355 = vadd.f32 0.0, %v354
  %v356 = vpop.f32.mrf.mxu0
  %v357 = vpop.f32.mrf.mxu0
  %v358 = vadd.f32 0.0, %v357
  %v359 = vpop.f32.mrf.mxu0
  %360 = vmatprep.mubr.bf16.mxu0 0
  %361 = vmatmul.mubr.bf16.gmra.mxu0 %v217
  %v362 = vpop.f32.mrf.mxu0
  %v363 = vadd.f32 0.0, %v362
  %v364 = vpop.f32.mrf.mxu0
  %v365 = vpop.f32.mrf.mxu0
  %v366 = vadd.f32 0.0, %v365
  %v367 = vpop.f32.mrf.mxu0
  %368 = vmatprep.mubr.bf16.mxu0 0
  %369 = vmatmul.mubr.bf16.gmra.mxu0 %v220
  %v370 = vpop.f32.mrf.mxu0
  %v371 = vadd.f32 0.0, %v370
  %v372 = vpop.f32.mrf.mxu0
  %v373 = vpop.f32.mrf.mxu0
  %v374 = vadd.f32 0.0, %v373
  %v375 = vpop.f32.mrf.mxu0
  %376 = vmatprep.mubr.bf16.mxu0 0
  %377 = vmatmul.mubr.bf16.gmra.mxu0 %v223
  %v378 = vpop.f32.mrf.mxu0
  %v379 = vadd.f32 0.0, %v378
  %v380 = vpop.f32.mrf.mxu0
  %v381 = vpop.f32.mrf.mxu0
  %v382 = vadd.f32 0.0, %v381
  %v383 = vpop.f32.mrf.mxu0
  %384 = vmatprep.mubr.bf16.mxu0 0
  %385 = vmatmul.mubr.bf16.gmra.mxu0 %v226
  %v386 = vpop.f32.mrf.mxu0
  %v387 = vadd.f32 0.0, %v386
  %v388 = vpop.f32.mrf.mxu0
  %v389 = vpop.f32.mrf.mxu0
  %v390 = vadd.f32 0.0, %v389
  %v391 = vpop.f32.mrf.mxu0
  %392 = vmatprep.mubr.bf16.mxu0 0
  %393 = vmatmul.mubr.bf16.gmra.mxu0 %v229
  %v394 = vpop.f32.mrf.mxu0
  %v395 = vadd.f32 0.0, %v394
  %v396 = vpop.f32.mrf.mxu0
  %v397 = vpop.f32.mrf.mxu0
  %v398 = vadd.f32 0.0, %v397
  %v399 = vpop.f32.mrf.mxu0
  %400 = vmatprep.mubr.bf16.mxu0 0
  %401 = vmatmul.mubr.bf16.gmra.mxu0 %v232
  %v402 = vpop.f32.mrf.mxu0
  %v403 = vadd.f32 0.0, %v402
  %v404 = vpop.f32.mrf.mxu0
  %v405 = vpop.f32.mrf.mxu0
  %v406 = vadd.f32 0.0, %v405
  %v407 = vpop.f32.mrf.mxu0
  %408 = vmatprep.mubr.bf16.mxu0 0
  %409 = vmatmul.mubr.bf16.gmra.mxu0 %v235
  %v410 = vpop.f32.mrf.mxu0
  %v411 = vadd.f32 0.0, %v410
  %v412 = vpop.f32.mrf.mxu0
  %v413 = vpop.f32.mrf.mxu0
  %v414 = vadd.f32 0.0, %v413
  %v415 = vpop.f32.mrf.mxu0
  %416 = vmatprep.mubr.bf16.mxu0 0
  %417 = vmatmul.mubr.bf16.gmra.mxu0 %v238
  %v418 = vpop.f32.mrf.mxu0
  %v419 = vadd.f32 0.0, %v418
  %v420 = vpop.f32.mrf.mxu0
  %v421 = vpop.f32.mrf.mxu0
  %v422 = vadd.f32 0.0, %v421
  %v423 = vpop.f32.mrf.mxu0
  %424 = vmatprep.mubr.bf16.mxu0 0
  %425 = vmatmul.mubr.bf16.gmra.mxu0 %v241
  %v426 = vpop.f32.mrf.mxu0
  %v427 = vadd.f32 0.0, %v426
  %v428 = vpop.f32.mrf.mxu0
  %v429 = vpop.f32.mrf.mxu0
  %v430 = vadd.f32 0.0, %v429
  %v431 = vpop.f32.mrf.mxu0
  %432 = vmatprep.mubr.bf16.mxu0 0
  %433 = vmatmul.mubr.bf16.gmra.mxu0 %v244
  %v434 = vpop.f32.mrf.mxu0
  %v435 = vadd.f32 0.0, %v434
  %v436 = vpop.f32.mrf.mxu0
  %v437 = vpop.f32.mrf.mxu0
  %v438 = vadd.f32 0.0, %v437
  %v439 = vpop.f32.mrf.mxu0
  %440 = vmatprep.mubr.bf16.mxu0 0
  %441 = vmatmul.mubr.bf16.gmra.mxu0 %v247
  %v442 = vpop.f32.mrf.mxu0
  %v443 = vadd.f32 0.0, %v442
  %v444 = vpop.f32.mrf.mxu0
  %v445 = vpop.f32.mrf.mxu0
  %v446 = vadd.f32 0.0, %v445
  %v447 = vpop.f32.mrf.mxu0
  %448 = vmatprep.mubr.bf16.mxu0 0
  %449 = vmatmul.mubr.bf16.gmra.mxu0 %v250
  %v450 = vpop.f32.mrf.mxu0
  %v451 = vadd.f32 0.0, %v450
  %v452 = vpop.f32.mrf.mxu0
  %v453 = vpop.f32.mrf.mxu0
  %v454 = vadd.f32 0.0, %v453
  %v455 = vpop.f32.mrf.mxu0
  %456 = vmatprep.mubr.bf16.mxu0 0
  %457 = vmatmul.mubr.bf16.gmra.mxu0 %v253
  %v458 = vpop.f32.mrf.mxu0
  %v459 = vadd.f32 0.0, %v458
  %v460 = vpop.f32.mrf.mxu0
  %v461 = vpop.f32.mrf.mxu0
  %v462 = vadd.f32 0.0, %v461
  %v463 = vpop.f32.mrf.mxu0
  %464 = vmatprep.mubr.bf16.mxu0 0
  %465 = vmatmul.mubr.bf16.gmra.mxu0 %v256
  %v466 = vpop.f32.mrf.mxu0
  %v467 = vadd.f32 0.0, %v466
  %v468 = vpop.f32.mrf.mxu0
  %v469 = vpop.f32.mrf.mxu0
  %v470 = vadd.f32 0.0, %v469
  %v471 = vpop.f32.mrf.mxu0
  %472 = vmatprep.mubr.bf16.mxu0 0
  %473 = vmatmul.mubr.bf16.gmra.mxu0 %v259
  %v474 = vpop.f32.mrf.mxu0
  %v475 = vadd.f32 0.0, %v474
  %v476 = vpop.f32.mrf.mxu0
  %v477 = vpop.f32.mrf.mxu0
  %v478 = vadd.f32 0.0, %v477
  %v479 = vpop.f32.mrf.mxu0
  %480 = vmatprep.mubr.bf16.mxu0 0
  %481 = vmatmul.mubr.bf16.gmra.mxu0 %v262
  %v482 = vpop.f32.mrf.mxu0
  %v483 = vadd.f32 0.0, %v482
  %v484 = vpop.f32.mrf.mxu0
  %v485 = vpop.f32.mrf.mxu0
  %v486 = vadd.f32 0.0, %v485
  %v487 = vpop.f32.mrf.mxu0
  %488 = vmatprep.mubr.bf16.mxu0 0
  %489 = vmatmul.mubr.bf16.gmra.mxu0 %v265
  %v490 = vpop.f32.mrf.mxu0
  %v491 = vadd.f32 0.0, %v490
  %v492 = vpop.f32.mrf.mxu0
  %v493 = vpop.f32.mrf.mxu0
  %v494 = vadd.f32 0.0, %v493
  %v495 = vpop.f32.mrf.mxu0
  %496 = vmatprep.mubr.bf16.mxu0 0
  %497 = vmatmul.mubr.bf16.gmra.mxu0 %v268
  %v498 = vpop.f32.mrf.mxu0
  %v499 = vadd.f32 0.0, %v498
  %v500 = vpop.f32.mrf.mxu0
  %v501 = vpop.f32.mrf.mxu0
  %v502 = vadd.f32 0.0, %v501
  %v503 = vpop.f32.mrf.mxu0
  %504 = vmatprep.mubr.bf16.mxu0 0
  %505 = vmatmul.mubr.bf16.gmra.mxu0 %v271
  %v506 = vpop.f32.mrf.mxu0
  %v507 = vadd.f32 0.0, %v506
  %v508 = vpop.f32.mrf.mxu0
  %v509 = vpop.f32.mrf.mxu0
  %v510 = vpop.f32.mrf.mxu0
  %511 = vdwg.mxu0
  %s512 = scalar_lea.vmem %s0, 196
  %v513 = vld [vmem:[%s512] sm:$0xf]
  %v514 = vld [vmem:[%s512 + $0x4] sm:$0xf]
  %v515 = vld [vmem:[%s512 + $0x8] sm:$0xf]
  %v516 = vld [vmem:[%s512 + $0xc] sm:$0xf]
  %v517 = vld [vmem:[%s512 + $0x10] sm:$0xf]
  %v518 = vld [vmem:[%s512 + $0x14] sm:$0xf]
  %v519 = vld [vmem:[%s512 + $0x18] sm:$0xf]
  %v520 = vld [vmem:[%s512 + $0x1c] sm:$0xf]
  %v521 = vld [vmem:[%s512 + $0x20] sm:$0xf]
  %v522 = vld [vmem:[%s512 + $0x24] sm:$0xf]
  %v523 = vld [vmem:[%s512 + $0x28] sm:$0xf]
  %v524 = vld [vmem:[%s512 + $0x2c] sm:$0xf]
  %v525 = vld [vmem:[%s512 + $0x30] sm:$0xf]
  %v526 = vld [vmem:[%s512 + $0x34] sm:$0xf]
  %v527 = vld [vmem:[%s512 + $0x38] sm:$0xf]
  %v528 = vld [vmem:[%s512 + $0x3c] sm:$0xf]
  %v529 = vld [vmem:[%s512 + $0x40] sm:$0xf]
  %v530 = vld [vmem:[%s512 + $0x44] sm:$0xf]
  %v531 = vld [vmem:[%s512 + $0x48] sm:$0xf]
  %v532 = vld [vmem:[%s512 + $0x4c] sm:$0xf]
  %v533 = vld [vmem:[%s512 + $0x50] sm:$0xf]
  %v534 = vld [vmem:[%s512 + $0x54] sm:$0xf]
  %v535 = vld [vmem:[%s512 + $0x58] sm:$0xf]
  %v536 = vld [vmem:[%s512 + $0x5c] sm:$0xf]
  %v537 = vld [vmem:[%s512 + $0x60] sm:$0xf]
  %v538 = vld [vmem:[%s512 + $0x64] sm:$0xf]
  %v539 = vld [vmem:[%s512 + $0x68] sm:$0xf]
  %v540 = vld [vmem:[%s512 + $0x6c] sm:$0xf]
  %v541 = vld [vmem:[%s512 + $0x70] sm:$0xf]
  %v542 = vld [vmem:[%s512 + $0x74] sm:$0xf]
  %v543 = vld [vmem:[%s512 + $0x78] sm:$0xf]
  %v544 = vld [vmem:[%s512 + $0x7c] sm:$0xf]
  %v545 = vld [vmem:[%s512 + $0x80] sm:$0xf]
  %v546 = vld [vmem:[%s512 + $0x84] sm:$0xf]
  %v547 = vld [vmem:[%s512 + $0x88] sm:$0xf]
  %v548 = vld [vmem:[%s512 + $0x8c] sm:$0xf]
  %v549 = vld [vmem:[%s512 + $0x90] sm:$0xf]
  %v550 = vld [vmem:[%s512 + $0x94] sm:$0xf]
  %v551 = vld [vmem:[%s512 + $0x98] sm:$0xf]
  %v552 = vld [vmem:[%s512 + $0x9c] sm:$0xf]
  %v553 = vld [vmem:[%s512 + $0xa0] sm:$0xf]
  %v554 = vld [vmem:[%s512 + $0xa4] sm:$0xf]
  %v555 = vld [vmem:[%s512 + $0xa8] sm:$0xf]
  %v556 = vld [vmem:[%s512 + $0xac] sm:$0xf]
  %v557 = vld [vmem:[%s512 + $0xb0] sm:$0xf]
  %v558 = vld [vmem:[%s512 + $0xb4] sm:$0xf]
  %v559 = vld [vmem:[%s512 + $0xb8] sm:$0xf]
  %v560 = vld [vmem:[%s512 + $0xbc] sm:$0xf]
  %v561 = vld [vmem:[%s512 + $0xc0] sm:$0xf]
  %v611 = vunpack.c.l.b16 %v513
  %v612 = vunpack.c.l.b16 %v514
  %v613 = vunpack.c.l.b16 %v515
  %v614 = vunpack.c.l.b16 %v516
  %v615 = vunpack.c.l.b16 %v517
  %v616 = vunpack.c.l.b16 %v518
  %v617 = vunpack.c.l.b16 %v519
  %v618 = vunpack.c.l.b16 %v520
  %v619 = vunpack.c.l.b16 %v521
  %v620 = vunpack.c.l.b16 %v522
  %v621 = vunpack.c.l.b16 %v523
  %v622 = vunpack.c.l.b16 %v524
  %v623 = vunpack.c.l.b16 %v525
  %v624 = vunpack.c.l.b16 %v526
  %v625 = vunpack.c.l.b16 %v527
  %v626 = vunpack.c.l.b16 %v528
  %v627 = vunpack.c.l.b16 %v529
  %v628 = vunpack.c.l.b16 %v530
  %v629 = vunpack.c.l.b16 %v531
  %v630 = vunpack.c.l.b16 %v532
  %v631 = vunpack.c.l.b16 %v533
  %v632 = vunpack.c.l.b16 %v534
  %v633 = vunpack.c.l.b16 %v535
  %v634 = vunpack.c.l.b16 %v536
  %v635 = vunpack.c.l.b16 %v537
  %v636 = vunpack.c.l.b16 %v538
  %v637 = vunpack.c.l.b16 %v539
  %v638 = vunpack.c.l.b16 %v540
  %v639 = vunpack.c.l.b16 %v541
  %v640 = vunpack.c.l.b16 %v542
  %v641 = vunpack.c.l.b16 %v543
  %v642 = vunpack.c.l.b16 %v544
  %v643 = vunpack.c.l.b16 %v545
  %v644 = vunpack.c.l.b16 %v546
  %v645 = vunpack.c.l.b16 %v547
  %v646 = vunpack.c.l.b16 %v548
  %v647 = vunpack.c.l.b16 %v549
  %v648 = vunpack.c.l.b16 %v550
  %v649 = vunpack.c.l.b16 %v551
  %v650 = vunpack.c.l.b16 %v552
  %v651 = vunpack.c.l.b16 %v553
  %v652 = vunpack.c.l.b16 %v554
  %v653 = vunpack.c.l.b16 %v555
  %v654 = vunpack.c.l.b16 %v556
  %v655 = vunpack.c.l.b16 %v557
  %v656 = vunpack.c.l.b16 %v558
  %v657 = vunpack.c.l.b16 %v559
  %v658 = vunpack.c.l.b16 %v560
  %v659 = vunpack.c.l.b16 %v561
  %v660 = vpack.c.b16 %v612, %v611
  %v661 = vpack.c.b16 %v614, %v613
  %v662 = vpack.c.b16 %v616, %v615
  %v663 = vpack.c.b16 %v618, %v617
  %v664 = vpack.c.b16 %v620, %v619
  %v665 = vpack.c.b16 %v622, %v621
  %v666 = vpack.c.b16 %v624, %v623
  %v667 = vpack.c.b16 %v626, %v625
  %v668 = vpack.c.b16 %v628, %v627
  %v669 = vpack.c.b16 %v630, %v629
  %v670 = vpack.c.b16 %v632, %v631
  %v671 = vpack.c.b16 %v634, %v633
  %v672 = vpack.c.b16 %v636, %v635
  %v673 = vpack.c.b16 %v638, %v637
  %v674 = vpack.c.b16 %v640, %v639
  %v675 = vpack.c.b16 %v642, %v641
  %v676 = vpack.c.b16 %v644, %v643
  %v677 = vpack.c.b16 %v646, %v645
  %v678 = vpack.c.b16 %v648, %v647
  %v679 = vpack.c.b16 %v650, %v649
  %v680 = vpack.c.b16 %v652, %v651
  %v681 = vpack.c.b16 %v654, %v653
  %v682 = vpack.c.b16 %v656, %v655
  %v683 = vpack.c.b16 %v658, %v657
  %v684 = vpack.c.b16 %v659, %v659
  %v686 = vsel %vm197, %v660, 0
  %v689 = vsel %vm197, %v661, 0
  %v692 = vsel %vm197, %v662, 0
  %v695 = vsel %vm197, %v663, 0
  %v698 = vsel %vm197, %v664, 0
  %v701 = vsel %vm197, %v665, 0
  %v704 = vsel %vm197, %v666, 0
  %v707 = vsel %vm197, %v667, 0
  %v710 = vsel %vm197, %v668, 0
  %v713 = vsel %vm197, %v669, 0
  %v716 = vsel %vm197, %v670, 0
  %v719 = vsel %vm197, %v671, 0
  %v722 = vsel %vm197, %v672, 0
  %v725 = vsel %vm197, %v673, 0
  %v728 = vsel %vm197, %v674, 0
  %v731 = vsel %vm197, %v675, 0
  %v734 = vsel %vm197, %v676, 0
  %v737 = vsel %vm197, %v677, 0
  %v740 = vsel %vm197, %v678, 0
  %v743 = vsel %vm197, %v679, 0
  %v746 = vsel %vm197, %v680, 0
  %v749 = vsel %vm197, %v681, 0
  %v752 = vsel %vm197, %v682, 0
  %v755 = vsel %vm197, %v683, 0
  %v758 = vsel %vm197, %v684, 0
  %760 = vmatprep.subr.bf16.mxu0 0
  %761 = vmatpush1.bf16.msra.mxu0 0
  %762 = vmatprep.subr.bf16.mxu0 0
  %763 = vmatpush1.bf16.msra.mxu0 0
  %764 = vmatprep.subr.bf16.mxu0 0
  %765 = vmatpush1.bf16.msra.mxu0 0
  %766 = vmatprep.subr.bf16.mxu0 0
  %767 = vmatpush1.bf16.msra.mxu0 0
  %768 = vmatprep.subr.bf16.mxu0 0
  %769 = vmatpush1.bf16.msra.mxu0 0
  %770 = vmatprep.subr.bf16.mxu0 0
  %771 = vmatpush1.bf16.msra.mxu0 0
  %772 = vmatprep.subr.bf16.mxu0 0
  %773 = vmatpush1.bf16.msra.mxu0 0
  %774 = vmatprep.subr.bf16.mxu0 0
  %775 = vmatpush1.bf16.msra.mxu0 %v278
  %776 = vmatprep.subr.bf16.mxu0 0
  %777 = vmatpush2.bf16.msra.mxu0 0
  %778 = vmatprep.subr.bf16.mxu0 0
  %779 = vmatpush2.bf16.msra.mxu0 0
  %780 = vmatprep.subr.bf16.mxu0 0
  %781 = vmatpush2.bf16.msra.mxu0 0
  %782 = vmatprep.subr.bf16.mxu0 0
  %783 = vmatpush2.bf16.msra.mxu0 0
  %784 = vmatprep.subr.bf16.mxu0 0
  %785 = vmatpush2.bf16.msra.mxu0 0
  %786 = vmatprep.subr.bf16.mxu0 0
  %787 = vmatpush2.bf16.msra.mxu0 0
  %788 = vmatprep.subr.bf16.mxu0 0
  %789 = vmatpush2.bf16.msra.mxu0 0
  %790 = vmatprep.subr.bf16.mxu0 0
  %791 = vmatpush2.bf16.msra.mxu0 0
  %792 = vmatprep.mubr.bf16.mxu0 0
  %793 = vmatmul.mubr.bf16.gmra.mxu0 %v686
  %v794 = vpop.f32.mrf.mxu0
  %v795 = vadd.f32 0.0, %v794
  %v796 = vpop.f32.mrf.mxu0
  %v797 = vpop.f32.mrf.mxu0
  %v798 = vadd.f32 0.0, %v797
  %v799 = vpop.f32.mrf.mxu0
  %800 = vmatprep.mubr.bf16.mxu0 0
  %801 = vmatmul.mubr.bf16.gmra.mxu0 %v689
  %v802 = vpop.f32.mrf.mxu0
  %v803 = vadd.f32 0.0, %v802
  %v804 = vpop.f32.mrf.mxu0
  %v805 = vpop.f32.mrf.mxu0
  %v806 = vadd.f32 0.0, %v805
  %v807 = vpop.f32.mrf.mxu0
  %808 = vmatprep.mubr.bf16.mxu0 0
  %809 = vmatmul.mubr.bf16.gmra.mxu0 %v692
  %v810 = vpop.f32.mrf.mxu0
  %v811 = vadd.f32 0.0, %v810
  %v812 = vpop.f32.mrf.mxu0
  %v813 = vpop.f32.mrf.mxu0
  %v814 = vadd.f32 0.0, %v813
  %v815 = vpop.f32.mrf.mxu0
  %816 = vmatprep.mubr.bf16.mxu0 0
  %817 = vmatmul.mubr.bf16.gmra.mxu0 %v695
  %v818 = vpop.f32.mrf.mxu0
  %v819 = vadd.f32 0.0, %v818
  %v820 = vpop.f32.mrf.mxu0
  %v821 = vpop.f32.mrf.mxu0
  %v822 = vadd.f32 0.0, %v821
  %v823 = vpop.f32.mrf.mxu0
  %824 = vmatprep.mubr.bf16.mxu0 0
  %825 = vmatmul.mubr.bf16.gmra.mxu0 %v698
  %v826 = vpop.f32.mrf.mxu0
  %v827 = vadd.f32 0.0, %v826
  %v828 = vpop.f32.mrf.mxu0
  %v829 = vpop.f32.mrf.mxu0
  %v830 = vadd.f32 0.0, %v829
  %v831 = vpop.f32.mrf.mxu0
  %832 = vmatprep.mubr.bf16.mxu0 0
  %833 = vmatmul.mubr.bf16.gmra.mxu0 %v701
  %v834 = vpop.f32.mrf.mxu0
  %v835 = vadd.f32 0.0, %v834
  %v836 = vpop.f32.mrf.mxu0
  %v837 = vpop.f32.mrf.mxu0
  %v838 = vadd.f32 0.0, %v837
  %v839 = vpop.f32.mrf.mxu0
  %840 = vmatprep.mubr.bf16.mxu0 0
  %841 = vmatmul.mubr.bf16.gmra.mxu0 %v704
  %v842 = vpop.f32.mrf.mxu0
  %v843 = vadd.f32 0.0, %v842
  %v844 = vpop.f32.mrf.mxu0
  %v845 = vpop.f32.mrf.mxu0
  %v846 = vadd.f32 0.0, %v845
  %v847 = vpop.f32.mrf.mxu0
  %848 = vmatprep.mubr.bf16.mxu0 0
  %849 = vmatmul.mubr.bf16.gmra.mxu0 %v707
  %v850 = vpop.f32.mrf.mxu0
  %v851 = vadd.f32 0.0, %v850
  %v852 = vpop.f32.mrf.mxu0
  %v853 = vpop.f32.mrf.mxu0
  %v854 = vadd.f32 0.0, %v853
  %v855 = vpop.f32.mrf.mxu0
  %856 = vmatprep.mubr.bf16.mxu0 0
  %857 = vmatmul.mubr.bf16.gmra.mxu0 %v710
  %v858 = vpop.f32.mrf.mxu0
  %v859 = vadd.f32 0.0, %v858
  %v860 = vpop.f32.mrf.mxu0
  %v861 = vpop.f32.mrf.mxu0
  %v862 = vadd.f32 0.0, %v861
  %v863 = vpop.f32.mrf.mxu0
  %864 = vmatprep.mubr.bf16.mxu0 0
  %865 = vmatmul.mubr.bf16.gmra.mxu0 %v713
  %v866 = vpop.f32.mrf.mxu0
  %v867 = vadd.f32 0.0, %v866
  %v868 = vpop.f32.mrf.mxu0
  %v869 = vpop.f32.mrf.mxu0
  %v870 = vadd.f32 0.0, %v869
  %v871 = vpop.f32.mrf.mxu0
  %872 = vmatprep.mubr.bf16.mxu0 0
  %873 = vmatmul.mubr.bf16.gmra.mxu0 %v716
  %v874 = vpop.f32.mrf.mxu0
  %v875 = vadd.f32 0.0, %v874
  %v876 = vpop.f32.mrf.mxu0
  %v877 = vpop.f32.mrf.mxu0
  %v878 = vadd.f32 0.0, %v877
  %v879 = vpop.f32.mrf.mxu0
  %880 = vmatprep.mubr.bf16.mxu0 0
  %881 = vmatmul.mubr.bf16.gmra.mxu0 %v719
  %v882 = vpop.f32.mrf.mxu0
  %v883 = vadd.f32 0.0, %v882
  %v884 = vpop.f32.mrf.mxu0
  %v885 = vpop.f32.mrf.mxu0
  %v886 = vadd.f32 0.0, %v885
  %v887 = vpop.f32.mrf.mxu0
  %888 = vmatprep.mubr.bf16.mxu0 0
  %889 = vmatmul.mubr.bf16.gmra.mxu0 %v722
  %v890 = vpop.f32.mrf.mxu0
  %v891 = vadd.f32 0.0, %v890
  %v892 = vpop.f32.mrf.mxu0
  %v893 = vpop.f32.mrf.mxu0
  %v894 = vadd.f32 0.0, %v893
  %v895 = vpop.f32.mrf.mxu0
  %896 = vmatprep.mubr.bf16.mxu0 0
  %897 = vmatmul.mubr.bf16.gmra.mxu0 %v725
  %v898 = vpop.f32.mrf.mxu0
  %v899 = vadd.f32 0.0, %v898
  %v900 = vpop.f32.mrf.mxu0
  %v901 = vpop.f32.mrf.mxu0
  %v902 = vadd.f32 0.0, %v901
  %v903 = vpop.f32.mrf.mxu0
  %904 = vmatprep.mubr.bf16.mxu0 0
  %905 = vmatmul.mubr.bf16.gmra.mxu0 %v728
  %v906 = vpop.f32.mrf.mxu0
  %v907 = vadd.f32 0.0, %v906
  %v908 = vpop.f32.mrf.mxu0
  %v909 = vpop.f32.mrf.mxu0
  %v910 = vadd.f32 0.0, %v909
  %v911 = vpop.f32.mrf.mxu0
  %912 = vmatprep.mubr.bf16.mxu0 0
  %913 = vmatmul.mubr.bf16.gmra.mxu0 %v731
  %v914 = vpop.f32.mrf.mxu0
  %v915 = vadd.f32 0.0, %v914
  %v916 = vpop.f32.mrf.mxu0
  %v917 = vpop.f32.mrf.mxu0
  %v918 = vadd.f32 0.0, %v917
  %v919 = vpop.f32.mrf.mxu0
  %920 = vmatprep.mubr.bf16.mxu0 0
  %921 = vmatmul.mubr.bf16.gmra.mxu0 %v734
  %v922 = vpop.f32.mrf.mxu0
  %v923 = vadd.f32 0.0, %v922
  %v924 = vpop.f32.mrf.mxu0
  %v925 = vpop.f32.mrf.mxu0
  %v926 = vadd.f32 0.0, %v925
  %v927 = vpop.f32.mrf.mxu0
  %928 = vmatprep.mubr.bf16.mxu0 0
  %929 = vmatmul.mubr.bf16.gmra.mxu0 %v737
  %v930 = vpop.f32.mrf.mxu0
  %v931 = vadd.f32 0.0, %v930
  %v932 = vpop.f32.mrf.mxu0
  %v933 = vpop.f32.mrf.mxu0
  %v934 = vadd.f32 0.0, %v933
  %v935 = vpop.f32.mrf.mxu0
  %936 = vmatprep.mubr.bf16.mxu0 0
  %937 = vmatmul.mubr.bf16.gmra.mxu0 %v740
  %v938 = vpop.f32.mrf.mxu0
  %v939 = vadd.f32 0.0, %v938
  %v940 = vpop.f32.mrf.mxu0
  %v941 = vpop.f32.mrf.mxu0
  %v942 = vadd.f32 0.0, %v941
  %v943 = vpop.f32.mrf.mxu0
  %944 = vmatprep.mubr.bf16.mxu0 0
  %945 = vmatmul.mubr.bf16.gmra.mxu0 %v743
  %v946 = vpop.f32.mrf.mxu0
  %v947 = vadd.f32 0.0, %v946
  %v948 = vpop.f32.mrf.mxu0
  %v949 = vpop.f32.mrf.mxu0
  %v950 = vadd.f32 0.0, %v949
  %v951 = vpop.f32.mrf.mxu0
  %952 = vmatprep.mubr.bf16.mxu0 0
  %953 = vmatmul.mubr.bf16.gmra.mxu0 %v746
  %v954 = vpop.f32.mrf.mxu0
  %v955 = vadd.f32 0.0, %v954
  %v956 = vpop.f32.mrf.mxu0
  %v957 = vpop.f32.mrf.mxu0
  %v958 = vadd.f32 0.0, %v957
  %v959 = vpop.f32.mrf.mxu0
  %960 = vmatprep.mubr.bf16.mxu0 0
  %961 = vmatmul.mubr.bf16.gmra.mxu0 %v749
  %v962 = vpop.f32.mrf.mxu0
  %v963 = vadd.f32 0.0, %v962
  %v964 = vpop.f32.mrf.mxu0
  %v965 = vpop.f32.mrf.mxu0
  %v966 = vadd.f32 0.0, %v965
  %v967 = vpop.f32.mrf.mxu0
  %968 = vmatprep.mubr.bf16.mxu0 0
  %969 = vmatmul.mubr.bf16.gmra.mxu0 %v752
  %v970 = vpop.f32.mrf.mxu0
  %v971 = vadd.f32 0.0, %v970
  %v972 = vpop.f32.mrf.mxu0
  %v973 = vpop.f32.mrf.mxu0
  %v974 = vadd.f32 0.0, %v973
  %v975 = vpop.f32.mrf.mxu0
  %976 = vmatprep.mubr.bf16.mxu0 0
  %977 = vmatmul.mubr.bf16.gmra.mxu0 %v755
  %v978 = vpop.f32.mrf.mxu0
  %v979 = vadd.f32 0.0, %v978
  %v980 = vpop.f32.mrf.mxu0
  %v981 = vpop.f32.mrf.mxu0
  %v982 = vadd.f32 0.0, %v981
  %v983 = vpop.f32.mrf.mxu0
  %984 = vmatprep.mubr.bf16.mxu0 0
  %985 = vmatmul.mubr.bf16.gmra.mxu0 %v758
  %v986 = vpop.f32.mrf.mxu0
  %v987 = vadd.f32 0.0, %v986
  %v988 = vpop.f32.mrf.mxu0
  %v989 = vpop.f32.mrf.mxu0
  %v990 = vpop.f32.mrf.mxu0
  %991 = vdwg.mxu0
  %s992 = scalar_lea.vmem %s0, 392
  %v993 = vld [vmem:[%s992] sm:$0xf]
  %v994 = vld [vmem:[%s992 + $0x4] sm:$0xf]
  %v995 = vld [vmem:[%s992 + $0x8] sm:$0xf]
  %v996 = vld [vmem:[%s992 + $0xc] sm:$0xf]
  %v997 = vld [vmem:[%s992 + $0x10] sm:$0xf]
  %v998 = vld [vmem:[%s992 + $0x14] sm:$0xf]
  %v999 = vld [vmem:[%s992 + $0x18] sm:$0xf]
  %v1000 = vld [vmem:[%s992 + $0x1c] sm:$0xf]
  %v1001 = vld [vmem:[%s992 + $0x20] sm:$0xf]
  %v1002 = vld [vmem:[%s992 + $0x24] sm:$0xf]
  %v1003 = vld [vmem:[%s992 + $0x28] sm:$0xf]
  %v1004 = vld [vmem:[%s992 + $0x2c] sm:$0xf]
  %v1005 = vld [vmem:[%s992 + $0x30] sm:$0xf]
  %v1006 = vld [vmem:[%s992 + $0x34] sm:$0xf]
  %v1007 = vld [vmem:[%s992 + $0x38] sm:$0xf]
  %v1008 = vld [vmem:[%s992 + $0x3c] sm:$0xf]
  %v1009 = vld [vmem:[%s992 + $0x40] sm:$0xf]
  %v1010 = vld [vmem:[%s992 + $0x44] sm:$0xf]
  %v1011 = vld [vmem:[%s992 + $0x48] sm:$0xf]
  %v1012 = vld [vmem:[%s992 + $0x4c] sm:$0xf]
  %v1013 = vld [vmem:[%s992 + $0x50] sm:$0xf]
  %v1014 = vld [vmem:[%s992 + $0x54] sm:$0xf]
  %v1015 = vld [vmem:[%s992 + $0x58] sm:$0xf]
  %v1016 = vld [vmem:[%s992 + $0x5c] sm:$0xf]
  %v1017 = vld [vmem:[%s992 + $0x60] sm:$0xf]
  %v1018 = vld [vmem:[%s992 + $0x64] sm:$0xf]
  %v1019 = vld [vmem:[%s992 + $0x68] sm:$0xf]
  %v1020 = vld [vmem:[%s992 + $0x6c] sm:$0xf]
  %v1021 = vld [vmem:[%s992 + $0x70] sm:$0xf]
  %v1022 = vld [vmem:[%s992 + $0x74] sm:$0xf]
  %v1023 = vld [vmem:[%s992 + $0x78] sm:$0xf]
  %v1024 = vld [vmem:[%s992 + $0x7c] sm:$0xf]
  %v1025 = vld [vmem:[%s992 + $0x80] sm:$0xf]
  %v1026 = vld [vmem:[%s992 + $0x84] sm:$0xf]
  %v1027 = vld [vmem:[%s992 + $0x88] sm:$0xf]
  %v1028 = vld [vmem:[%s992 + $0x8c] sm:$0xf]
  %v1029 = vld [vmem:[%s992 + $0x90] sm:$0xf]
  %v1030 = vld [vmem:[%s992 + $0x94] sm:$0xf]
  %v1031 = vld [vmem:[%s992 + $0x98] sm:$0xf]
  %v1032 = vld [vmem:[%s992 + $0x9c] sm:$0xf]
  %v1033 = vld [vmem:[%s992 + $0xa0] sm:$0xf]
  %v1034 = vld [vmem:[%s992 + $0xa4] sm:$0xf]
  %v1035 = vld [vmem:[%s992 + $0xa8] sm:$0xf]
  %v1036 = vld [vmem:[%s992 + $0xac] sm:$0xf]
  %v1037 = vld [vmem:[%s992 + $0xb0] sm:$0xf]
  %v1038 = vld [vmem:[%s992 + $0xb4] sm:$0xf]
  %v1039 = vld [vmem:[%s992 + $0xb8] sm:$0xf]
  %v1040 = vld [vmem:[%s992 + $0xbc] sm:$0xf]
  %v1041 = vld [vmem:[%s992 + $0xc0] sm:$0xf]
  %v1091 = vunpack.c.l.b16 %v993
  %v1092 = vunpack.c.l.b16 %v994
  %v1093 = vunpack.c.l.b16 %v995
  %v1094 = vunpack.c.l.b16 %v996
  %v1095 = vunpack.c.l.b16 %v997
  %v1096 = vunpack.c.l.b16 %v998
  %v1097 = vunpack.c.l.b16 %v999
  %v1098 = vunpack.c.l.b16 %v1000
  %v1099 = vunpack.c.l.b16 %v1001
  %v1100 = vunpack.c.l.b16 %v1002
  %v1101 = vunpack.c.l.b16 %v1003
  %v1102 = vunpack.c.l.b16 %v1004
  %v1103 = vunpack.c.l.b16 %v1005
  %v1104 = vunpack.c.l.b16 %v1006
  %v1105 = vunpack.c.l.b16 %v1007
  %v1106 = vunpack.c.l.b16 %v1008
  %v1107 = vunpack.c.l.b16 %v1009
  %v1108 = vunpack.c.l.b16 %v1010
  %v1109 = vunpack.c.l.b16 %v1011
  %v1110 = vunpack.c.l.b16 %v1012
  %v1111 = vunpack.c.l.b16 %v1013
  %v1112 = vunpack.c.l.b16 %v1014
  %v1113 = vunpack.c.l.b16 %v1015
  %v1114 = vunpack.c.l.b16 %v1016
  %v1115 = vunpack.c.l.b16 %v1017
  %v1116 = vunpack.c.l.b16 %v1018
  %v1117 = vunpack.c.l.b16 %v1019
  %v1118 = vunpack.c.l.b16 %v1020
  %v1119 = vunpack.c.l.b16 %v1021
  %v1120 = vunpack.c.l.b16 %v1022
  %v1121 = vunpack.c.l.b16 %v1023
  %v1122 = vunpack.c.l.b16 %v1024
  %v1123 = vunpack.c.l.b16 %v1025
  %v1124 = vunpack.c.l.b16 %v1026
  %v1125 = vunpack.c.l.b16 %v1027
  %v1126 = vunpack.c.l.b16 %v1028
  %v1127 = vunpack.c.l.b16 %v1029
  %v1128 = vunpack.c.l.b16 %v1030
  %v1129 = vunpack.c.l.b16 %v1031
  %v1130 = vunpack.c.l.b16 %v1032
  %v1131 = vunpack.c.l.b16 %v1033
  %v1132 = vunpack.c.l.b16 %v1034
  %v1133 = vunpack.c.l.b16 %v1035
  %v1134 = vunpack.c.l.b16 %v1036
  %v1135 = vunpack.c.l.b16 %v1037
  %v1136 = vunpack.c.l.b16 %v1038
  %v1137 = vunpack.c.l.b16 %v1039
  %v1138 = vunpack.c.l.b16 %v1040
  %v1139 = vunpack.c.l.b16 %v1041
  %v1140 = vpack.c.b16 %v1092, %v1091
  %v1141 = vpack.c.b16 %v1094, %v1093
  %v1142 = vpack.c.b16 %v1096, %v1095
  %v1143 = vpack.c.b16 %v1098, %v1097
  %v1144 = vpack.c.b16 %v1100, %v1099
  %v1145 = vpack.c.b16 %v1102, %v1101
  %v1146 = vpack.c.b16 %v1104, %v1103
  %v1147 = vpack.c.b16 %v1106, %v1105
  %v1148 = vpack.c.b16 %v1108, %v1107
  %v1149 = vpack.c.b16 %v1110, %v1109
  %v1150 = vpack.c.b16 %v1112, %v1111
  %v1151 = vpack.c.b16 %v1114, %v1113
  %v1152 = vpack.c.b16 %v1116, %v1115
  %v1153 = vpack.c.b16 %v1118, %v1117
  %v1154 = vpack.c.b16 %v1120, %v1119
  %v1155 = vpack.c.b16 %v1122, %v1121
  %v1156 = vpack.c.b16 %v1124, %v1123
  %v1157 = vpack.c.b16 %v1126, %v1125
  %v1158 = vpack.c.b16 %v1128, %v1127
  %v1159 = vpack.c.b16 %v1130, %v1129
  %v1160 = vpack.c.b16 %v1132, %v1131
  %v1161 = vpack.c.b16 %v1134, %v1133
  %v1162 = vpack.c.b16 %v1136, %v1135
  %v1163 = vpack.c.b16 %v1138, %v1137
  %v1164 = vpack.c.b16 %v1139, %v1139
  %v1166 = vsel %vm197, %v1140, 0
  %v1169 = vsel %vm197, %v1141, 0
  %v1172 = vsel %vm197, %v1142, 0
  %v1175 = vsel %vm197, %v1143, 0
  %v1178 = vsel %vm197, %v1144, 0
  %v1181 = vsel %vm197, %v1145, 0
  %v1184 = vsel %vm197, %v1146, 0
  %v1187 = vsel %vm197, %v1147, 0
  %v1190 = vsel %vm197, %v1148, 0
  %v1193 = vsel %vm197, %v1149, 0
  %v1196 = vsel %vm197, %v1150, 0
  %v1199 = vsel %vm197, %v1151, 0
  %v1202 = vsel %vm197, %v1152, 0
  %v1205 = vsel %vm197, %v1153, 0
  %v1208 = vsel %vm197, %v1154, 0
  %v1211 = vsel %vm197, %v1155, 0
  %v1214 = vsel %vm197, %v1156, 0
  %v1217 = vsel %vm197, %v1157, 0
  %v1220 = vsel %vm197, %v1158, 0
  %v1223 = vsel %vm197, %v1159, 0
  %v1226 = vsel %vm197, %v1160, 0
  %v1229 = vsel %vm197, %v1161, 0
  %v1232 = vsel %vm197, %v1162, 0
  %v1235 = vsel %vm197, %v1163, 0
  %v1238 = vsel %vm197, %v1164, 0
  %1240 = vmatprep.subr.bf16.mxu0 0
  %1241 = vmatpush1.bf16.msra.mxu0 0
  %1242 = vmatprep.subr.bf16.mxu0 0
  %1243 = vmatpush1.bf16.msra.mxu0 0
  %1244 = vmatprep.subr.bf16.mxu0 0
  %1245 = vmatpush1.bf16.msra.mxu0 0
  %1246 = vmatprep.subr.bf16.mxu0 0
  %1247 = vmatpush1.bf16.msra.mxu0 0
  %1248 = vmatprep.subr.bf16.mxu0 0
  %1249 = vmatpush1.bf16.msra.mxu0 0
  %1250 = vmatprep.subr.bf16.mxu0 0
  %1251 = vmatpush1.bf16.msra.mxu0 0
  %1252 = vmatprep.subr.bf16.mxu0 0
  %1253 = vmatpush1.bf16.msra.mxu0 0
  %1254 = vmatprep.subr.bf16.mxu0 0
  %1255 = vmatpush1.bf16.msra.mxu0 %v278
  %1256 = vmatprep.subr.bf16.mxu0 0
  %1257 = vmatpush2.bf16.msra.mxu0 0
  %1258 = vmatprep.subr.bf16.mxu0 0
  %1259 = vmatpush2.bf16.msra.mxu0 0
  %1260 = vmatprep.subr.bf16.mxu0 0
  %1261 = vmatpush2.bf16.msra.mxu0 0
  %1262 = vmatprep.subr.bf16.mxu0 0
  %1263 = vmatpush2.bf16.msra.mxu0 0
  %1264 = vmatprep.subr.bf16.mxu0 0
  %1265 = vmatpush2.bf16.msra.mxu0 0
  %1266 = vmatprep.subr.bf16.mxu0 0
  %1267 = vmatpush2.bf16.msra.mxu0 0
  %1268 = vmatprep.subr.bf16.mxu0 0
  %1269 = vmatpush2.bf16.msra.mxu0 0
  %1270 = vmatprep.subr.bf16.mxu0 0
  %1271 = vmatpush2.bf16.msra.mxu0 0
  %1272 = vmatprep.mubr.bf16.mxu0 0
  %1273 = vmatmul.mubr.bf16.gmra.mxu0 %v1166
  %v1274 = vpop.f32.mrf.mxu0
  %v1275 = vadd.f32 0.0, %v1274
  %v1276 = vpop.f32.mrf.mxu0
  %v1277 = vpop.f32.mrf.mxu0
  %v1278 = vadd.f32 0.0, %v1277
  %v1279 = vpop.f32.mrf.mxu0
  %1280 = vmatprep.mubr.bf16.mxu0 0
  %1281 = vmatmul.mubr.bf16.gmra.mxu0 %v1169
  %v1282 = vpop.f32.mrf.mxu0
  %v1283 = vadd.f32 0.0, %v1282
  %v1284 = vpop.f32.mrf.mxu0
  %v1285 = vpop.f32.mrf.mxu0
  %v1286 = vadd.f32 0.0, %v1285
  %v1287 = vpop.f32.mrf.mxu0
  %1288 = vmatprep.mubr.bf16.mxu0 0
  %1289 = vmatmul.mubr.bf16.gmra.mxu0 %v1172
  %v1290 = vpop.f32.mrf.mxu0
  %v1291 = vadd.f32 0.0, %v1290
  %v1292 = vpop.f32.mrf.mxu0
  %v1293 = vpop.f32.mrf.mxu0
  %v1294 = vadd.f32 0.0, %v1293
  %v1295 = vpop.f32.mrf.mxu0
  %1296 = vmatprep.mubr.bf16.mxu0 0
  %1297 = vmatmul.mubr.bf16.gmra.mxu0 %v1175
  %v1298 = vpop.f32.mrf.mxu0
  %v1299 = vadd.f32 0.0, %v1298
  %v1300 = vpop.f32.mrf.mxu0
  %v1301 = vpop.f32.mrf.mxu0
  %v1302 = vadd.f32 0.0, %v1301
  %v1303 = vpop.f32.mrf.mxu0
  %1304 = vmatprep.mubr.bf16.mxu0 0
  %1305 = vmatmul.mubr.bf16.gmra.mxu0 %v1178
  %v1306 = vpop.f32.mrf.mxu0
  %v1307 = vadd.f32 0.0, %v1306
  %v1308 = vpop.f32.mrf.mxu0
  %v1309 = vpop.f32.mrf.mxu0
  %v1310 = vadd.f32 0.0, %v1309
  %v1311 = vpop.f32.mrf.mxu0
  %1312 = vmatprep.mubr.bf16.mxu0 0
  %1313 = vmatmul.mubr.bf16.gmra.mxu0 %v1181
  %v1314 = vpop.f32.mrf.mxu0
  %v1315 = vadd.f32 0.0, %v1314
  %v1316 = vpop.f32.mrf.mxu0
  %v1317 = vpop.f32.mrf.mxu0
  %v1318 = vadd.f32 0.0, %v1317
  %v1319 = vpop.f32.mrf.mxu0
  %1320 = vmatprep.mubr.bf16.mxu0 0
  %1321 = vmatmul.mubr.bf16.gmra.mxu0 %v1184
  %v1322 = vpop.f32.mrf.mxu0
  %v1323 = vadd.f32 0.0, %v1322
  %v1324 = vpop.f32.mrf.mxu0
  %v1325 = vpop.f32.mrf.mxu0
  %v1326 = vadd.f32 0.0, %v1325
  %v1327 = vpop.f32.mrf.mxu0
  %1328 = vmatprep.mubr.bf16.mxu0 0
  %1329 = vmatmul.mubr.bf16.gmra.mxu0 %v1187
  %v1330 = vpop.f32.mrf.mxu0
  %v1331 = vadd.f32 0.0, %v1330
  %v1332 = vpop.f32.mrf.mxu0
  %v1333 = vpop.f32.mrf.mxu0
  %v1334 = vadd.f32 0.0, %v1333
  %v1335 = vpop.f32.mrf.mxu0
  %1336 = vmatprep.mubr.bf16.mxu0 0
  %1337 = vmatmul.mubr.bf16.gmra.mxu0 %v1190
  %v1338 = vpop.f32.mrf.mxu0
  %v1339 = vadd.f32 0.0, %v1338
  %v1340 = vpop.f32.mrf.mxu0
  %v1341 = vpop.f32.mrf.mxu0
  %v1342 = vadd.f32 0.0, %v1341
  %v1343 = vpop.f32.mrf.mxu0
  %1344 = vmatprep.mubr.bf16.mxu0 0
  %1345 = vmatmul.mubr.bf16.gmra.mxu0 %v1193
  %v1346 = vpop.f32.mrf.mxu0
  %v1347 = vadd.f32 0.0, %v1346
  %v1348 = vpop.f32.mrf.mxu0
  %v1349 = vpop.f32.mrf.mxu0
  %v1350 = vadd.f32 0.0, %v1349
  %v1351 = vpop.f32.mrf.mxu0
  %1352 = vmatprep.mubr.bf16.mxu0 0
  %1353 = vmatmul.mubr.bf16.gmra.mxu0 %v1196
  %v1354 = vpop.f32.mrf.mxu0
  %v1355 = vadd.f32 0.0, %v1354
  %v1356 = vpop.f32.mrf.mxu0
  %v1357 = vpop.f32.mrf.mxu0
  %v1358 = vadd.f32 0.0, %v1357
  %v1359 = vpop.f32.mrf.mxu0
  %1360 = vmatprep.mubr.bf16.mxu0 0
  %1361 = vmatmul.mubr.bf16.gmra.mxu0 %v1199
  %v1362 = vpop.f32.mrf.mxu0
  %v1363 = vadd.f32 0.0, %v1362
  %v1364 = vpop.f32.mrf.mxu0
  %v1365 = vpop.f32.mrf.mxu0
  %v1366 = vadd.f32 0.0, %v1365
  %v1367 = vpop.f32.mrf.mxu0
  %1368 = vmatprep.mubr.bf16.mxu0 0
  %1369 = vmatmul.mubr.bf16.gmra.mxu0 %v1202
  %v1370 = vpop.f32.mrf.mxu0
  %v1371 = vadd.f32 0.0, %v1370
  %v1372 = vpop.f32.mrf.mxu0
  %v1373 = vpop.f32.mrf.mxu0
  %v1374 = vadd.f32 0.0, %v1373
  %v1375 = vpop.f32.mrf.mxu0
  %1376 = vmatprep.mubr.bf16.mxu0 0
  %1377 = vmatmul.mubr.bf16.gmra.mxu0 %v1205
  %v1378 = vpop.f32.mrf.mxu0
  %v1379 = vadd.f32 0.0, %v1378
  %v1380 = vpop.f32.mrf.mxu0
  %v1381 = vpop.f32.mrf.mxu0
  %v1382 = vadd.f32 0.0, %v1381
  %v1383 = vpop.f32.mrf.mxu0
  %1384 = vmatprep.mubr.bf16.mxu0 0
  %1385 = vmatmul.mubr.bf16.gmra.mxu0 %v1208
  %v1386 = vpop.f32.mrf.mxu0
  %v1387 = vadd.f32 0.0, %v1386
  %v1388 = vpop.f32.mrf.mxu0
  %v1389 = vpop.f32.mrf.mxu0
  %v1390 = vadd.f32 0.0, %v1389
  %v1391 = vpop.f32.mrf.mxu0
  %1392 = vmatprep.mubr.bf16.mxu0 0
  %1393 = vmatmul.mubr.bf16.gmra.mxu0 %v1211
  %v1394 = vpop.f32.mrf.mxu0
  %v1395 = vadd.f32 0.0, %v1394
  %v1396 = vpop.f32.mrf.mxu0
  %v1397 = vpop.f32.mrf.mxu0
  %v1398 = vadd.f32 0.0, %v1397
  %v1399 = vpop.f32.mrf.mxu0
  %1400 = vmatprep.mubr.bf16.mxu0 0
  %1401 = vmatmul.mubr.bf16.gmra.mxu0 %v1214
  %v1402 = vpop.f32.mrf.mxu0
  %v1403 = vadd.f32 0.0, %v1402
  %v1404 = vpop.f32.mrf.mxu0
  %v1405 = vpop.f32.mrf.mxu0
  %v1406 = vadd.f32 0.0, %v1405
  %v1407 = vpop.f32.mrf.mxu0
  %1408 = vmatprep.mubr.bf16.mxu0 0
  %1409 = vmatmul.mubr.bf16.gmra.mxu0 %v1217
  %v1410 = vpop.f32.mrf.mxu0
  %v1411 = vadd.f32 0.0, %v1410
  %v1412 = vpop.f32.mrf.mxu0
  %v1413 = vpop.f32.mrf.mxu0
  %v1414 = vadd.f32 0.0, %v1413
  %v1415 = vpop.f32.mrf.mxu0
  %1416 = vmatprep.mubr.bf16.mxu0 0
  %1417 = vmatmul.mubr.bf16.gmra.mxu0 %v1220
  %v1418 = vpop.f32.mrf.mxu0
  %v1419 = vadd.f32 0.0, %v1418
  %v1420 = vpop.f32.mrf.mxu0
  %v1421 = vpop.f32.mrf.mxu0
  %v1422 = vadd.f32 0.0, %v1421
  %v1423 = vpop.f32.mrf.mxu0
  %1424 = vmatprep.mubr.bf16.mxu0 0
  %1425 = vmatmul.mubr.bf16.gmra.mxu0 %v1223
  %v1426 = vpop.f32.mrf.mxu0
  %v1427 = vadd.f32 0.0, %v1426
  %v1428 = vpop.f32.mrf.mxu0
  %v1429 = vpop.f32.mrf.mxu0
  %v1430 = vadd.f32 0.0, %v1429
  %v1431 = vpop.f32.mrf.mxu0
  %1432 = vmatprep.mubr.bf16.mxu0 0
  %1433 = vmatmul.mubr.bf16.gmra.mxu0 %v1226
  %v1434 = vpop.f32.mrf.mxu0
  %v1435 = vadd.f32 0.0, %v1434
  %v1436 = vpop.f32.mrf.mxu0
  %v1437 = vpop.f32.mrf.mxu0
  %v1438 = vadd.f32 0.0, %v1437
  %v1439 = vpop.f32.mrf.mxu0
  %1440 = vmatprep.mubr.bf16.mxu0 0
  %1441 = vmatmul.mubr.bf16.gmra.mxu0 %v1229
  %v1442 = vpop.f32.mrf.mxu0
  %v1443 = vadd.f32 0.0, %v1442
  %v1444 = vpop.f32.mrf.mxu0
  %v1445 = vpop.f32.mrf.mxu0
  %v1446 = vadd.f32 0.0, %v1445
  %v1447 = vpop.f32.mrf.mxu0
  %1448 = vmatprep.mubr.bf16.mxu0 0
  %1449 = vmatmul.mubr.bf16.gmra.mxu0 %v1232
  %v1450 = vpop.f32.mrf.mxu0
  %v1451 = vadd.f32 0.0, %v1450
  %v1452 = vpop.f32.mrf.mxu0
  %v1453 = vpop.f32.mrf.mxu0
  %v1454 = vadd.f32 0.0, %v1453
  %v1455 = vpop.f32.mrf.mxu0
  %1456 = vmatprep.mubr.bf16.mxu0 0
  %1457 = vmatmul.mubr.bf16.gmra.mxu0 %v1235
  %v1458 = vpop.f32.mrf.mxu0
  %v1459 = vadd.f32 0.0, %v1458
  %v1460 = vpop.f32.mrf.mxu0
  %v1461 = vpop.f32.mrf.mxu0
  %v1462 = vadd.f32 0.0, %v1461
  %v1463 = vpop.f32.mrf.mxu0
  %1464 = vmatprep.mubr.bf16.mxu0 0
  %1465 = vmatmul.mubr.bf16.gmra.mxu0 %v1238
  %v1466 = vpop.f32.mrf.mxu0
  %v1467 = vadd.f32 0.0, %v1466
  %v1468 = vpop.f32.mrf.mxu0
  %v1469 = vpop.f32.mrf.mxu0
  %v1470 = vpop.f32.mrf.mxu0
  %1471 = vdwg.mxu0
  %s1472 = scalar_lea.vmem %s0, 588
  %v1473 = vld [vmem:[%s1472] sm:$0xf]
  %v1474 = vld [vmem:[%s1472 + $0x4] sm:$0xf]
  %v1475 = vld [vmem:[%s1472 + $0x8] sm:$0xf]
  %v1476 = vld [vmem:[%s1472 + $0xc] sm:$0xf]
  %v1477 = vld [vmem:[%s1472 + $0x10] sm:$0xf]
  %v1478 = vld [vmem:[%s1472 + $0x14] sm:$0xf]
  %v1479 = vld [vmem:[%s1472 + $0x18] sm:$0xf]
  %v1480 = vld [vmem:[%s1472 + $0x1c] sm:$0xf]
  %v1481 = vld [vmem:[%s1472 + $0x20] sm:$0xf]
  %v1482 = vld [vmem:[%s1472 + $0x24] sm:$0xf]
  %v1483 = vld [vmem:[%s1472 + $0x28] sm:$0xf]
  %v1484 = vld [vmem:[%s1472 + $0x2c] sm:$0xf]
  %v1485 = vld [vmem:[%s1472 + $0x30] sm:$0xf]
  %v1486 = vld [vmem:[%s1472 + $0x34] sm:$0xf]
  %v1487 = vld [vmem:[%s1472 + $0x38] sm:$0xf]
  %v1488 = vld [vmem:[%s1472 + $0x3c] sm:$0xf]
  %v1489 = vld [vmem:[%s1472 + $0x40] sm:$0xf]
  %v1490 = vld [vmem:[%s1472 + $0x44] sm:$0xf]
  %v1491 = vld [vmem:[%s1472 + $0x48] sm:$0xf]
  %v1492 = vld [vmem:[%s1472 + $0x4c] sm:$0xf]
  %v1493 = vld [vmem:[%s1472 + $0x50] sm:$0xf]
  %v1494 = vld [vmem:[%s1472 + $0x54] sm:$0xf]
  %v1495 = vld [vmem:[%s1472 + $0x58] sm:$0xf]
  %v1496 = vld [vmem:[%s1472 + $0x5c] sm:$0xf]
  %v1497 = vld [vmem:[%s1472 + $0x60] sm:$0xf]
  %v1498 = vld [vmem:[%s1472 + $0x64] sm:$0xf]
  %v1499 = vld [vmem:[%s1472 + $0x68] sm:$0xf]
  %v1500 = vld [vmem:[%s1472 + $0x6c] sm:$0xf]
  %v1501 = vld [vmem:[%s1472 + $0x70] sm:$0xf]
  %v1502 = vld [vmem:[%s1472 + $0x74] sm:$0xf]
  %v1503 = vld [vmem:[%s1472 + $0x78] sm:$0xf]
  %v1504 = vld [vmem:[%s1472 + $0x7c] sm:$0xf]
  %v1505 = vld [vmem:[%s1472 + $0x80] sm:$0xf]
  %v1506 = vld [vmem:[%s1472 + $0x84] sm:$0xf]
  %v1507 = vld [vmem:[%s1472 + $0x88] sm:$0xf]
  %v1508 = vld [vmem:[%s1472 + $0x8c] sm:$0xf]
  %v1509 = vld [vmem:[%s1472 + $0x90] sm:$0xf]
  %v1510 = vld [vmem:[%s1472 + $0x94] sm:$0xf]
  %v1511 = vld [vmem:[%s1472 + $0x98] sm:$0xf]
  %v1512 = vld [vmem:[%s1472 + $0x9c] sm:$0xf]
  %v1513 = vld [vmem:[%s1472 + $0xa0] sm:$0xf]
  %v1514 = vld [vmem:[%s1472 + $0xa4] sm:$0xf]
  %v1515 = vld [vmem:[%s1472 + $0xa8] sm:$0xf]
  %v1516 = vld [vmem:[%s1472 + $0xac] sm:$0xf]
  %v1517 = vld [vmem:[%s1472 + $0xb0] sm:$0xf]
  %v1518 = vld [vmem:[%s1472 + $0xb4] sm:$0xf]
  %v1519 = vld [vmem:[%s1472 + $0xb8] sm:$0xf]
  %v1520 = vld [vmem:[%s1472 + $0xbc] sm:$0xf]
  %v1521 = vld [vmem:[%s1472 + $0xc0] sm:$0xf]
  %v1571 = vunpack.c.l.b16 %v1473
  %v1572 = vunpack.c.l.b16 %v1474
  %v1573 = vunpack.c.l.b16 %v1475
  %v1574 = vunpack.c.l.b16 %v1476
  %v1575 = vunpack.c.l.b16 %v1477
  %v1576 = vunpack.c.l.b16 %v1478
  %v1577 = vunpack.c.l.b16 %v1479
  %v1578 = vunpack.c.l.b16 %v1480
  %v1579 = vunpack.c.l.b16 %v1481
  %v1580 = vunpack.c.l.b16 %v1482
  %v1581 = vunpack.c.l.b16 %v1483
  %v1582 = vunpack.c.l.b16 %v1484
  %v1583 = vunpack.c.l.b16 %v1485
  %v1584 = vunpack.c.l.b16 %v1486
  %v1585 = vunpack.c.l.b16 %v1487
  %v1586 = vunpack.c.l.b16 %v1488
  %v1587 = vunpack.c.l.b16 %v1489
  %v1588 = vunpack.c.l.b16 %v1490
  %v1589 = vunpack.c.l.b16 %v1491
  %v1590 = vunpack.c.l.b16 %v1492
  %v1591 = vunpack.c.l.b16 %v1493
  %v1592 = vunpack.c.l.b16 %v1494
  %v1593 = vunpack.c.l.b16 %v1495
  %v1594 = vunpack.c.l.b16 %v1496
  %v1595 = vunpack.c.l.b16 %v1497
  %v1596 = vunpack.c.l.b16 %v1498
  %v1597 = vunpack.c.l.b16 %v1499
  %v1598 = vunpack.c.l.b16 %v1500
  %v1599 = vunpack.c.l.b16 %v1501
  %v1600 = vunpack.c.l.b16 %v1502
  %v1601 = vunpack.c.l.b16 %v1503
  %v1602 = vunpack.c.l.b16 %v1504
  %v1603 = vunpack.c.l.b16 %v1505
  %v1604 = vunpack.c.l.b16 %v1506
  %v1605 = vunpack.c.l.b16 %v1507
  %v1606 = vunpack.c.l.b16 %v1508
  %v1607 = vunpack.c.l.b16 %v1509
  %v1608 = vunpack.c.l.b16 %v1510
  %v1609 = vunpack.c.l.b16 %v1511
  %v1610 = vunpack.c.l.b16 %v1512
  %v1611 = vunpack.c.l.b16 %v1513
  %v1612 = vunpack.c.l.b16 %v1514
  %v1613 = vunpack.c.l.b16 %v1515
  %v1614 = vunpack.c.l.b16 %v1516
  %v1615 = vunpack.c.l.b16 %v1517
  %v1616 = vunpack.c.l.b16 %v1518
  %v1617 = vunpack.c.l.b16 %v1519
  %v1618 = vunpack.c.l.b16 %v1520
  %v1619 = vunpack.c.l.b16 %v1521
  %v1620 = vpack.c.b16 %v1572, %v1571
  %v1621 = vpack.c.b16 %v1574, %v1573
  %v1622 = vpack.c.b16 %v1576, %v1575
  %v1623 = vpack.c.b16 %v1578, %v1577
  %v1624 = vpack.c.b16 %v1580, %v1579
  %v1625 = vpack.c.b16 %v1582, %v1581
  %v1626 = vpack.c.b16 %v1584, %v1583
  %v1627 = vpack.c.b16 %v1586, %v1585
  %v1628 = vpack.c.b16 %v1588, %v1587
  %v1629 = vpack.c.b16 %v1590, %v1589
  %v1630 = vpack.c.b16 %v1592, %v1591
  %v1631 = vpack.c.b16 %v1594, %v1593
  %v1632 = vpack.c.b16 %v1596, %v1595
  %v1633 = vpack.c.b16 %v1598, %v1597
  %v1634 = vpack.c.b16 %v1600, %v1599
  %v1635 = vpack.c.b16 %v1602, %v1601
  %v1636 = vpack.c.b16 %v1604, %v1603
  %v1637 = vpack.c.b16 %v1606, %v1605
  %v1638 = vpack.c.b16 %v1608, %v1607
  %v1639 = vpack.c.b16 %v1610, %v1609
  %v1640 = vpack.c.b16 %v1612, %v1611
  %v1641 = vpack.c.b16 %v1614, %v1613
  %v1642 = vpack.c.b16 %v1616, %v1615
  %v1643 = vpack.c.b16 %v1618, %v1617
  %v1644 = vpack.c.b16 %v1619, %v1619
  %v1646 = vsel %vm197, %v1620, 0
  %v1649 = vsel %vm197, %v1621, 0
  %v1652 = vsel %vm197, %v1622, 0
  %v1655 = vsel %vm197, %v1623, 0
  %v1658 = vsel %vm197, %v1624, 0
  %v1661 = vsel %vm197, %v1625, 0
  %v1664 = vsel %vm197, %v1626, 0
  %v1667 = vsel %vm197, %v1627, 0
  %v1670 = vsel %vm197, %v1628, 0
  %v1673 = vsel %vm197, %v1629, 0
  %v1676 = vsel %vm197, %v1630, 0
  %v1679 = vsel %vm197, %v1631, 0
  %v1682 = vsel %vm197, %v1632, 0
  %v1685 = vsel %vm197, %v1633, 0
  %v1688 = vsel %vm197, %v1634, 0
  %v1691 = vsel %vm197, %v1635, 0
  %v1694 = vsel %vm197, %v1636, 0
  %v1697 = vsel %vm197, %v1637, 0
  %v1700 = vsel %vm197, %v1638, 0
  %v1703 = vsel %vm197, %v1639, 0
  %v1706 = vsel %vm197, %v1640, 0
  %v1709 = vsel %vm197, %v1641, 0
  %v1712 = vsel %vm197, %v1642, 0
  %v1715 = vsel %vm197, %v1643, 0
  %v1718 = vsel %vm197, %v1644, 0
  %1720 = vmatprep.subr.bf16.mxu0 0
  %1721 = vmatpush1.bf16.msra.mxu0 0
  %1722 = vmatprep.subr.bf16.mxu0 0
  %1723 = vmatpush1.bf16.msra.mxu0 0
  %1724 = vmatprep.subr.bf16.mxu0 0
  %1725 = vmatpush1.bf16.msra.mxu0 0
  %1726 = vmatprep.subr.bf16.mxu0 0
  %1727 = vmatpush1.bf16.msra.mxu0 0
  %1728 = vmatprep.subr.bf16.mxu0 0
  %1729 = vmatpush1.bf16.msra.mxu0 0
  %1730 = vmatprep.subr.bf16.mxu0 0
  %1731 = vmatpush1.bf16.msra.mxu0 0
  %1732 = vmatprep.subr.bf16.mxu0 0
  %1733 = vmatpush1.bf16.msra.mxu0 0
  %1734 = vmatprep.subr.bf16.mxu0 0
  %1735 = vmatpush1.bf16.msra.mxu0 %v278
  %1736 = vmatprep.subr.bf16.mxu0 0
  %1737 = vmatpush2.bf16.msra.mxu0 0
  %1738 = vmatprep.subr.bf16.mxu0 0
  %1739 = vmatpush2.bf16.msra.mxu0 0
  %1740 = vmatprep.subr.bf16.mxu0 0
  %1741 = vmatpush2.bf16.msra.mxu0 0
  %1742 = vmatprep.subr.bf16.mxu0 0
  %1743 = vmatpush2.bf16.msra.mxu0 0
  %1744 = vmatprep.subr.bf16.mxu0 0
  %1745 = vmatpush2.bf16.msra.mxu0 0
  %1746 = vmatprep.subr.bf16.mxu0 0
  %1747 = vmatpush2.bf16.msra.mxu0 0
  %1748 = vmatprep.subr.bf16.mxu0 0
  %1749 = vmatpush2.bf16.msra.mxu0 0
  %1750 = vmatprep.subr.bf16.mxu0 0
  %1751 = vmatpush2.bf16.msra.mxu0 0
  %1752 = vmatprep.mubr.bf16.mxu0 0
  %1753 = vmatmul.mubr.bf16.gmra.mxu0 %v1646
  %v1754 = vpop.f32.mrf.mxu0
  %v1755 = vadd.f32 0.0, %v1754
  %v1756 = vpop.f32.mrf.mxu0
  %v1757 = vpop.f32.mrf.mxu0
  %v1758 = vadd.f32 0.0, %v1757
  %v1759 = vpop.f32.mrf.mxu0
  %1760 = vmatprep.mubr.bf16.mxu0 0
  %1761 = vmatmul.mubr.bf16.gmra.mxu0 %v1649
  %v1762 = vpop.f32.mrf.mxu0
  %v1763 = vadd.f32 0.0, %v1762
  %v1764 = vpop.f32.mrf.mxu0
  %v1765 = vpop.f32.mrf.mxu0
  %v1766 = vadd.f32 0.0, %v1765
  %v1767 = vpop.f32.mrf.mxu0
  %1768 = vmatprep.mubr.bf16.mxu0 0
  %1769 = vmatmul.mubr.bf16.gmra.mxu0 %v1652
  %v1770 = vpop.f32.mrf.mxu0
  %v1771 = vadd.f32 0.0, %v1770
  %v1772 = vpop.f32.mrf.mxu0
  %v1773 = vpop.f32.mrf.mxu0
  %v1774 = vadd.f32 0.0, %v1773
  %v1775 = vpop.f32.mrf.mxu0
  %1776 = vmatprep.mubr.bf16.mxu0 0
  %1777 = vmatmul.mubr.bf16.gmra.mxu0 %v1655
  %v1778 = vpop.f32.mrf.mxu0
  %v1779 = vadd.f32 0.0, %v1778
  %v1780 = vpop.f32.mrf.mxu0
  %v1781 = vpop.f32.mrf.mxu0
  %v1782 = vadd.f32 0.0, %v1781
  %v1783 = vpop.f32.mrf.mxu0
  %1784 = vmatprep.mubr.bf16.mxu0 0
  %1785 = vmatmul.mubr.bf16.gmra.mxu0 %v1658
  %v1786 = vpop.f32.mrf.mxu0
  %v1787 = vadd.f32 0.0, %v1786
  %v1788 = vpop.f32.mrf.mxu0
  %v1789 = vpop.f32.mrf.mxu0
  %v1790 = vadd.f32 0.0, %v1789
  %v1791 = vpop.f32.mrf.mxu0
  %1792 = vmatprep.mubr.bf16.mxu0 0
  %1793 = vmatmul.mubr.bf16.gmra.mxu0 %v1661
  %v1794 = vpop.f32.mrf.mxu0
  %v1795 = vadd.f32 0.0, %v1794
  %v1796 = vpop.f32.mrf.mxu0
  %v1797 = vpop.f32.mrf.mxu0
  %v1798 = vadd.f32 0.0, %v1797
  %v1799 = vpop.f32.mrf.mxu0
  %1800 = vmatprep.mubr.bf16.mxu0 0
  %1801 = vmatmul.mubr.bf16.gmra.mxu0 %v1664
  %v1802 = vpop.f32.mrf.mxu0
  %v1803 = vadd.f32 0.0, %v1802
  %v1804 = vpop.f32.mrf.mxu0
  %v1805 = vpop.f32.mrf.mxu0
  %v1806 = vadd.f32 0.0, %v1805
  %v1807 = vpop.f32.mrf.mxu0
  %1808 = vmatprep.mubr.bf16.mxu0 0
  %1809 = vmatmul.mubr.bf16.gmra.mxu0 %v1667
  %v1810 = vpop.f32.mrf.mxu0
  %v1811 = vadd.f32 0.0, %v1810
  %v1812 = vpop.f32.mrf.mxu0
  %v1813 = vpop.f32.mrf.mxu0
  %v1814 = vadd.f32 0.0, %v1813
  %v1815 = vpop.f32.mrf.mxu0
  %1816 = vmatprep.mubr.bf16.mxu0 0
  %1817 = vmatmul.mubr.bf16.gmra.mxu0 %v1670
  %v1818 = vpop.f32.mrf.mxu0
  %v1819 = vadd.f32 0.0, %v1818
  %v1820 = vpop.f32.mrf.mxu0
  %v1821 = vpop.f32.mrf.mxu0
  %v1822 = vadd.f32 0.0, %v1821
  %v1823 = vpop.f32.mrf.mxu0
  %1824 = vmatprep.mubr.bf16.mxu0 0
  %1825 = vmatmul.mubr.bf16.gmra.mxu0 %v1673
  %v1826 = vpop.f32.mrf.mxu0
  %v1827 = vadd.f32 0.0, %v1826
  %v1828 = vpop.f32.mrf.mxu0
  %v1829 = vpop.f32.mrf.mxu0
  %v1830 = vadd.f32 0.0, %v1829
  %v1831 = vpop.f32.mrf.mxu0
  %1832 = vmatprep.mubr.bf16.mxu0 0
  %1833 = vmatmul.mubr.bf16.gmra.mxu0 %v1676
  %v1834 = vpop.f32.mrf.mxu0
  %v1835 = vadd.f32 0.0, %v1834
  %v1836 = vpop.f32.mrf.mxu0
  %v1837 = vpop.f32.mrf.mxu0
  %v1838 = vadd.f32 0.0, %v1837
  %v1839 = vpop.f32.mrf.mxu0
  %1840 = vmatprep.mubr.bf16.mxu0 0
  %1841 = vmatmul.mubr.bf16.gmra.mxu0 %v1679
  %v1842 = vpop.f32.mrf.mxu0
  %v1843 = vadd.f32 0.0, %v1842
  %v1844 = vpop.f32.mrf.mxu0
  %v1845 = vpop.f32.mrf.mxu0
  %v1846 = vadd.f32 0.0, %v1845
  %v1847 = vpop.f32.mrf.mxu0
  %1848 = vmatprep.mubr.bf16.mxu0 0
  %1849 = vmatmul.mubr.bf16.gmra.mxu0 %v1682
  %v1850 = vpop.f32.mrf.mxu0
  %v1851 = vadd.f32 0.0, %v1850
  %v1852 = vpop.f32.mrf.mxu0
  %v1853 = vpop.f32.mrf.mxu0
  %v1854 = vadd.f32 0.0, %v1853
  %v1855 = vpop.f32.mrf.mxu0
  %1856 = vmatprep.mubr.bf16.mxu0 0
  %1857 = vmatmul.mubr.bf16.gmra.mxu0 %v1685
  %v1858 = vpop.f32.mrf.mxu0
  %v1859 = vadd.f32 0.0, %v1858
  %v1860 = vpop.f32.mrf.mxu0
  %v1861 = vpop.f32.mrf.mxu0
  %v1862 = vadd.f32 0.0, %v1861
  %v1863 = vpop.f32.mrf.mxu0
  %1864 = vmatprep.mubr.bf16.mxu0 0
  %1865 = vmatmul.mubr.bf16.gmra.mxu0 %v1688
  %v1866 = vpop.f32.mrf.mxu0
  %v1867 = vadd.f32 0.0, %v1866
  %v1868 = vpop.f32.mrf.mxu0
  %v1869 = vpop.f32.mrf.mxu0
  %v1870 = vadd.f32 0.0, %v1869
  %v1871 = vpop.f32.mrf.mxu0
  %1872 = vmatprep.mubr.bf16.mxu0 0
  %1873 = vmatmul.mubr.bf16.gmra.mxu0 %v1691
  %v1874 = vpop.f32.mrf.mxu0
  %v1875 = vadd.f32 0.0, %v1874
  %v1876 = vpop.f32.mrf.mxu0
  %v1877 = vpop.f32.mrf.mxu0
  %v1878 = vadd.f32 0.0, %v1877
  %v1879 = vpop.f32.mrf.mxu0
  %1880 = vmatprep.mubr.bf16.mxu0 0
  %1881 = vmatmul.mubr.bf16.gmra.mxu0 %v1694
  %v1882 = vpop.f32.mrf.mxu0
  %v1883 = vadd.f32 0.0, %v1882
  %v1884 = vpop.f32.mrf.mxu0
  %v1885 = vpop.f32.mrf.mxu0
  %v1886 = vadd.f32 0.0, %v1885
  %v1887 = vpop.f32.mrf.mxu0
  %1888 = vmatprep.mubr.bf16.mxu0 0
  %1889 = vmatmul.mubr.bf16.gmra.mxu0 %v1697
  %v1890 = vpop.f32.mrf.mxu0
  %v1891 = vadd.f32 0.0, %v1890
  %v1892 = vpop.f32.mrf.mxu0
  %v1893 = vpop.f32.mrf.mxu0
  %v1894 = vadd.f32 0.0, %v1893
  %v1895 = vpop.f32.mrf.mxu0
  %1896 = vmatprep.mubr.bf16.mxu0 0
  %1897 = vmatmul.mubr.bf16.gmra.mxu0 %v1700
  %v1898 = vpop.f32.mrf.mxu0
  %v1899 = vadd.f32 0.0, %v1898
  %v1900 = vpop.f32.mrf.mxu0
  %v1901 = vpop.f32.mrf.mxu0
  %v1902 = vadd.f32 0.0, %v1901
  %v1903 = vpop.f32.mrf.mxu0
  %1904 = vmatprep.mubr.bf16.mxu0 0
  %1905 = vmatmul.mubr.bf16.gmra.mxu0 %v1703
  %v1906 = vpop.f32.mrf.mxu0
  %v1907 = vadd.f32 0.0, %v1906
  %v1908 = vpop.f32.mrf.mxu0
  %v1909 = vpop.f32.mrf.mxu0
  %v1910 = vadd.f32 0.0, %v1909
  %v1911 = vpop.f32.mrf.mxu0
  %1912 = vmatprep.mubr.bf16.mxu0 0
  %1913 = vmatmul.mubr.bf16.gmra.mxu0 %v1706
  %v1914 = vpop.f32.mrf.mxu0
  %v1915 = vadd.f32 0.0, %v1914
  %v1916 = vpop.f32.mrf.mxu0
  %v1917 = vpop.f32.mrf.mxu0
  %v1918 = vadd.f32 0.0, %v1917
  %v1919 = vpop.f32.mrf.mxu0
  %1920 = vmatprep.mubr.bf16.mxu0 0
  %1921 = vmatmul.mubr.bf16.gmra.mxu0 %v1709
  %v1922 = vpop.f32.mrf.mxu0
  %v1923 = vadd.f32 0.0, %v1922
  %v1924 = vpop.f32.mrf.mxu0
  %v1925 = vpop.f32.mrf.mxu0
  %v1926 = vadd.f32 0.0, %v1925
  %v1927 = vpop.f32.mrf.mxu0
  %1928 = vmatprep.mubr.bf16.mxu0 0
  %1929 = vmatmul.mubr.bf16.gmra.mxu0 %v1712
  %v1930 = vpop.f32.mrf.mxu0
  %v1931 = vadd.f32 0.0, %v1930
  %v1932 = vpop.f32.mrf.mxu0
  %v1933 = vpop.f32.mrf.mxu0
  %v1934 = vadd.f32 0.0, %v1933
  %v1935 = vpop.f32.mrf.mxu0
  %1936 = vmatprep.mubr.bf16.mxu0 0
  %1937 = vmatmul.mubr.bf16.gmra.mxu0 %v1715
  %v1938 = vpop.f32.mrf.mxu0
  %v1939 = vadd.f32 0.0, %v1938
  %v1940 = vpop.f32.mrf.mxu0
  %v1941 = vpop.f32.mrf.mxu0
  %v1942 = vadd.f32 0.0, %v1941
  %v1943 = vpop.f32.mrf.mxu0
  %1944 = vmatprep.mubr.bf16.mxu0 0
  %1945 = vmatmul.mubr.bf16.gmra.mxu0 %v1718
  %v1946 = vpop.f32.mrf.mxu0
  %v1947 = vadd.f32 0.0, %v1946
  %v1948 = vpop.f32.mrf.mxu0
  %v1949 = vpop.f32.mrf.mxu0
  %v1950 = vpop.f32.mrf.mxu0
  %1951 = vdwg.mxu0
  %vm1952 = vcmask 261120
  %v1953 = vsel %vm1952, %v315, 0.0
  %v1954 = vsel %vm1952, %v318, 0.0
  %v1955 = vadd.f32 %v1953, %v1954
  %v1956 = vsel %vm1952, %v323, 0.0
  %v1957 = vadd.f32 %v1955, %v1956
  %v1958 = vsel %vm1952, %v326, 0.0
  %v1959 = vadd.f32 %v1957, %v1958
  %v1960 = vsel %vm1952, %v331, 0.0
  %v1961 = vadd.f32 %v1959, %v1960
  %v1962 = vsel %vm1952, %v334, 0.0
  %v1963 = vadd.f32 %v1961, %v1962
  %v1964 = vsel %vm1952, %v339, 0.0
  %v1965 = vadd.f32 %v1963, %v1964
  %v1966 = vsel %vm1952, %v342, 0.0
  %v1967 = vadd.f32 %v1965, %v1966
  %v1968 = vsel %vm1952, %v347, 0.0
  %v1969 = vadd.f32 %v1967, %v1968
  %v1970 = vsel %vm1952, %v350, 0.0
  %v1971 = vadd.f32 %v1969, %v1970
  %v1972 = vsel %vm1952, %v355, 0.0
  %v1973 = vadd.f32 %v1971, %v1972
  %v1974 = vsel %vm1952, %v358, 0.0
  %v1975 = vadd.f32 %v1973, %v1974
  %v1976 = vsel %vm1952, %v363, 0.0
  %v1977 = vadd.f32 %v1975, %v1976
  %v1978 = vsel %vm1952, %v366, 0.0
  %v1979 = vadd.f32 %v1977, %v1978
  %v1980 = vsel %vm1952, %v371, 0.0
  %v1981 = vadd.f32 %v1979, %v1980
  %v1982 = vsel %vm1952, %v374, 0.0
  %v1983 = vadd.f32 %v1981, %v1982
  %v1984 = vsel %vm1952, %v379, 0.0
  %v1985 = vadd.f32 %v1983, %v1984
  %v1986 = vsel %vm1952, %v382, 0.0
  %v1987 = vadd.f32 %v1985, %v1986
  %v1988 = vsel %vm1952, %v387, 0.0
  %v1989 = vadd.f32 %v1987, %v1988
  %v1990 = vsel %vm1952, %v390, 0.0
  %v1991 = vadd.f32 %v1989, %v1990
  %v1992 = vsel %vm1952, %v395, 0.0
  %v1993 = vadd.f32 %v1991, %v1992
  %v1994 = vsel %vm1952, %v398, 0.0
  %v1995 = vadd.f32 %v1993, %v1994
  %v1996 = vsel %vm1952, %v403, 0.0
  %v1997 = vadd.f32 %v1995, %v1996
  %v1998 = vsel %vm1952, %v406, 0.0
  %v1999 = vadd.f32 %v1997, %v1998
  %v2000 = vsel %vm1952, %v411, 0.0
  %v2001 = vadd.f32 %v1999, %v2000
  %v2002 = vsel %vm1952, %v414, 0.0
  %v2003 = vadd.f32 %v2001, %v2002
  %v2004 = vsel %vm1952, %v419, 0.0
  %v2005 = vadd.f32 %v2003, %v2004
  %v2006 = vsel %vm1952, %v422, 0.0
  %v2007 = vadd.f32 %v2005, %v2006
  %v2008 = vsel %vm1952, %v427, 0.0
  %v2009 = vadd.f32 %v2007, %v2008
  %v2010 = vsel %vm1952, %v430, 0.0
  %v2011 = vadd.f32 %v2009, %v2010
  %v2012 = vsel %vm1952, %v435, 0.0
  %v2013 = vadd.f32 %v2011, %v2012
  %v2014 = vsel %vm1952, %v438, 0.0
  %v2015 = vadd.f32 %v2013, %v2014
  %v2016 = vsel %vm1952, %v443, 0.0
  %v2017 = vadd.f32 %v2015, %v2016
  %v2018 = vsel %vm1952, %v446, 0.0
  %v2019 = vadd.f32 %v2017, %v2018
  %v2020 = vsel %vm1952, %v451, 0.0
  %v2021 = vadd.f32 %v2019, %v2020
  %v2022 = vsel %vm1952, %v454, 0.0
  %v2023 = vadd.f32 %v2021, %v2022
  %v2024 = vsel %vm1952, %v459, 0.0
  %v2025 = vadd.f32 %v2023, %v2024
  %v2026 = vsel %vm1952, %v462, 0.0
  %v2027 = vadd.f32 %v2025, %v2026
  %v2028 = vsel %vm1952, %v467, 0.0
  %v2029 = vadd.f32 %v2027, %v2028
  %v2030 = vsel %vm1952, %v470, 0.0
  %v2031 = vadd.f32 %v2029, %v2030
  %v2032 = vsel %vm1952, %v475, 0.0
  %v2033 = vadd.f32 %v2031, %v2032
  %v2034 = vsel %vm1952, %v478, 0.0
  %v2035 = vadd.f32 %v2033, %v2034
  %v2036 = vsel %vm1952, %v483, 0.0
  %v2037 = vadd.f32 %v2035, %v2036
  %v2038 = vsel %vm1952, %v486, 0.0
  %v2039 = vadd.f32 %v2037, %v2038
  %v2040 = vsel %vm1952, %v491, 0.0
  %v2041 = vadd.f32 %v2039, %v2040
  %v2042 = vsel %vm1952, %v494, 0.0
  %v2043 = vadd.f32 %v2041, %v2042
  %v2044 = vsel %vm1952, %v499, 0.0
  %v2045 = vadd.f32 %v2043, %v2044
  %v2046 = vsel %vm1952, %v502, 0.0
  %v2047 = vadd.f32 %v2045, %v2046
  %v2048 = vsel %vm1952, %v507, 0.0
  %v2049 = vadd.f32 %v2047, %v2048
  %v2050 = vrot.slane %v2049, 4
  %v2051 = vadd.f32 %v2049, %v2050
  %v2052 = vrot.slane %v2051, 2
  %v2053 = vadd.f32 %v2051, %v2052
  %v2054 = vrot.slane %v2053, 1
  %v2055 = vadd.f32 %v2053, %v2054
  %v2056 = vsel %vm1952, %v795, 0.0
  %v2057 = vsel %vm1952, %v798, 0.0
  %v2058 = vadd.f32 %v2056, %v2057
  %v2059 = vsel %vm1952, %v803, 0.0
  %v2060 = vadd.f32 %v2058, %v2059
  %v2061 = vsel %vm1952, %v806, 0.0
  %v2062 = vadd.f32 %v2060, %v2061
  %v2063 = vsel %vm1952, %v811, 0.0
  %v2064 = vadd.f32 %v2062, %v2063
  %v2065 = vsel %vm1952, %v814, 0.0
  %v2066 = vadd.f32 %v2064, %v2065
  %v2067 = vsel %vm1952, %v819, 0.0
  %v2068 = vadd.f32 %v2066, %v2067
  %v2069 = vsel %vm1952, %v822, 0.0
  %v2070 = vadd.f32 %v2068, %v2069
  %v2071 = vsel %vm1952, %v827, 0.0
  %v2072 = vadd.f32 %v2070, %v2071
  %v2073 = vsel %vm1952, %v830, 0.0
  %v2074 = vadd.f32 %v2072, %v2073
  %v2075 = vsel %vm1952, %v835, 0.0
  %v2076 = vadd.f32 %v2074, %v2075
  %v2077 = vsel %vm1952, %v838, 0.0
  %v2078 = vadd.f32 %v2076, %v2077
  %v2079 = vsel %vm1952, %v843, 0.0
  %v2080 = vadd.f32 %v2078, %v2079
  %v2081 = vsel %vm1952, %v846, 0.0
  %v2082 = vadd.f32 %v2080, %v2081
  %v2083 = vsel %vm1952, %v851, 0.0
  %v2084 = vadd.f32 %v2082, %v2083
  %v2085 = vsel %vm1952, %v854, 0.0
  %v2086 = vadd.f32 %v2084, %v2085
  %v2087 = vsel %vm1952, %v859, 0.0
  %v2088 = vadd.f32 %v2086, %v2087
  %v2089 = vsel %vm1952, %v862, 0.0
  %v2090 = vadd.f32 %v2088, %v2089
  %v2091 = vsel %vm1952, %v867, 0.0
  %v2092 = vadd.f32 %v2090, %v2091
  %v2093 = vsel %vm1952, %v870, 0.0
  %v2094 = vadd.f32 %v2092, %v2093
  %v2095 = vsel %vm1952, %v875, 0.0
  %v2096 = vadd.f32 %v2094, %v2095
  %v2097 = vsel %vm1952, %v878, 0.0
  %v2098 = vadd.f32 %v2096, %v2097
  %v2099 = vsel %vm1952, %v883, 0.0
  %v2100 = vadd.f32 %v2098, %v2099
  %v2101 = vsel %vm1952, %v886, 0.0
  %v2102 = vadd.f32 %v2100, %v2101
  %v2103 = vsel %vm1952, %v891, 0.0
  %v2104 = vadd.f32 %v2102, %v2103
  %v2105 = vsel %vm1952, %v894, 0.0
  %v2106 = vadd.f32 %v2104, %v2105
  %v2107 = vsel %vm1952, %v899, 0.0
  %v2108 = vadd.f32 %v2106, %v2107
  %v2109 = vsel %vm1952, %v902, 0.0
  %v2110 = vadd.f32 %v2108, %v2109
  %v2111 = vsel %vm1952, %v907, 0.0
  %v2112 = vadd.f32 %v2110, %v2111
  %v2113 = vsel %vm1952, %v910, 0.0
  %v2114 = vadd.f32 %v2112, %v2113
  %v2115 = vsel %vm1952, %v915, 0.0
  %v2116 = vadd.f32 %v2114, %v2115
  %v2117 = vsel %vm1952, %v918, 0.0
  %v2118 = vadd.f32 %v2116, %v2117
  %v2119 = vsel %vm1952, %v923, 0.0
  %v2120 = vadd.f32 %v2118, %v2119
  %v2121 = vsel %vm1952, %v926, 0.0
  %v2122 = vadd.f32 %v2120, %v2121
  %v2123 = vsel %vm1952, %v931, 0.0
  %v2124 = vadd.f32 %v2122, %v2123
  %v2125 = vsel %vm1952, %v934, 0.0
  %v2126 = vadd.f32 %v2124, %v2125
  %v2127 = vsel %vm1952, %v939, 0.0
  %v2128 = vadd.f32 %v2126, %v2127
  %v2129 = vsel %vm1952, %v942, 0.0
  %v2130 = vadd.f32 %v2128, %v2129
  %v2131 = vsel %vm1952, %v947, 0.0
  %v2132 = vadd.f32 %v2130, %v2131
  %v2133 = vsel %vm1952, %v950, 0.0
  %v2134 = vadd.f32 %v2132, %v2133
  %v2135 = vsel %vm1952, %v955, 0.0
  %v2136 = vadd.f32 %v2134, %v2135
  %v2137 = vsel %vm1952, %v958, 0.0
  %v2138 = vadd.f32 %v2136, %v2137
  %v2139 = vsel %vm1952, %v963, 0.0
  %v2140 = vadd.f32 %v2138, %v2139
  %v2141 = vsel %vm1952, %v966, 0.0
  %v2142 = vadd.f32 %v2140, %v2141
  %v2143 = vsel %vm1952, %v971, 0.0
  %v2144 = vadd.f32 %v2142, %v2143
  %v2145 = vsel %vm1952, %v974, 0.0
  %v2146 = vadd.f32 %v2144, %v2145
  %v2147 = vsel %vm1952, %v979, 0.0
  %v2148 = vadd.f32 %v2146, %v2147
  %v2149 = vsel %vm1952, %v982, 0.0
  %v2150 = vadd.f32 %v2148, %v2149
  %v2151 = vsel %vm1952, %v987, 0.0
  %v2152 = vadd.f32 %v2150, %v2151
  %v2153 = vrot.slane %v2152, 4
  %v2154 = vadd.f32 %v2152, %v2153
  %v2155 = vrot.slane %v2154, 2
  %v2156 = vadd.f32 %v2154, %v2155
  %v2157 = vrot.slane %v2156, 1
  %v2158 = vadd.f32 %v2156, %v2157
  %v2159 = vadd.f32 %v2055, %v2158
  %v2160 = vsel %vm1952, %v1275, 0.0
  %v2161 = vsel %vm1952, %v1278, 0.0
  %v2162 = vadd.f32 %v2160, %v2161
  %v2163 = vsel %vm1952, %v1283, 0.0
  %v2164 = vadd.f32 %v2162, %v2163
  %v2165 = vsel %vm1952, %v1286, 0.0
  %v2166 = vadd.f32 %v2164, %v2165
  %v2167 = vsel %vm1952, %v1291, 0.0
  %v2168 = vadd.f32 %v2166, %v2167
  %v2169 = vsel %vm1952, %v1294, 0.0
  %v2170 = vadd.f32 %v2168, %v2169
  %v2171 = vsel %vm1952, %v1299, 0.0
  %v2172 = vadd.f32 %v2170, %v2171
  %v2173 = vsel %vm1952, %v1302, 0.0
  %v2174 = vadd.f32 %v2172, %v2173
  %v2175 = vsel %vm1952, %v1307, 0.0
  %v2176 = vadd.f32 %v2174, %v2175
  %v2177 = vsel %vm1952, %v1310, 0.0
  %v2178 = vadd.f32 %v2176, %v2177
  %v2179 = vsel %vm1952, %v1315, 0.0
  %v2180 = vadd.f32 %v2178, %v2179
  %v2181 = vsel %vm1952, %v1318, 0.0
  %v2182 = vadd.f32 %v2180, %v2181
  %v2183 = vsel %vm1952, %v1323, 0.0
  %v2184 = vadd.f32 %v2182, %v2183
  %v2185 = vsel %vm1952, %v1326, 0.0
  %v2186 = vadd.f32 %v2184, %v2185
  %v2187 = vsel %vm1952, %v1331, 0.0
  %v2188 = vadd.f32 %v2186, %v2187
  %v2189 = vsel %vm1952, %v1334, 0.0
  %v2190 = vadd.f32 %v2188, %v2189
  %v2191 = vsel %vm1952, %v1339, 0.0
  %v2192 = vadd.f32 %v2190, %v2191
  %v2193 = vsel %vm1952, %v1342, 0.0
  %v2194 = vadd.f32 %v2192, %v2193
  %v2195 = vsel %vm1952, %v1347, 0.0
  %v2196 = vadd.f32 %v2194, %v2195
  %v2197 = vsel %vm1952, %v1350, 0.0
  %v2198 = vadd.f32 %v2196, %v2197
  %v2199 = vsel %vm1952, %v1355, 0.0
  %v2200 = vadd.f32 %v2198, %v2199
  %v2201 = vsel %vm1952, %v1358, 0.0
  %v2202 = vadd.f32 %v2200, %v2201
  %v2203 = vsel %vm1952, %v1363, 0.0
  %v2204 = vadd.f32 %v2202, %v2203
  %v2205 = vsel %vm1952, %v1366, 0.0
  %v2206 = vadd.f32 %v2204, %v2205
  %v2207 = vsel %vm1952, %v1371, 0.0
  %v2208 = vadd.f32 %v2206, %v2207
  %v2209 = vsel %vm1952, %v1374, 0.0
  %v2210 = vadd.f32 %v2208, %v2209
  %v2211 = vsel %vm1952, %v1379, 0.0
  %v2212 = vadd.f32 %v2210, %v2211
  %v2213 = vsel %vm1952, %v1382, 0.0
  %v2214 = vadd.f32 %v2212, %v2213
  %v2215 = vsel %vm1952, %v1387, 0.0
  %v2216 = vadd.f32 %v2214, %v2215
  %v2217 = vsel %vm1952, %v1390, 0.0
  %v2218 = vadd.f32 %v2216, %v2217
  %v2219 = vsel %vm1952, %v1395, 0.0
  %v2220 = vadd.f32 %v2218, %v2219
  %v2221 = vsel %vm1952, %v1398, 0.0
  %v2222 = vadd.f32 %v2220, %v2221
  %v2223 = vsel %vm1952, %v1403, 0.0
  %v2224 = vadd.f32 %v2222, %v2223
  %v2225 = vsel %vm1952, %v1406, 0.0
  %v2226 = vadd.f32 %v2224, %v2225
  %v2227 = vsel %vm1952, %v1411, 0.0
  %v2228 = vadd.f32 %v2226, %v2227
  %v2229 = vsel %vm1952, %v1414, 0.0
  %v2230 = vadd.f32 %v2228, %v2229
  %v2231 = vsel %vm1952, %v1419, 0.0
  %v2232 = vadd.f32 %v2230, %v2231
  %v2233 = vsel %vm1952, %v1422, 0.0
  %v2234 = vadd.f32 %v2232, %v2233
  %v2235 = vsel %vm1952, %v1427, 0.0
  %v2236 = vadd.f32 %v2234, %v2235
  %v2237 = vsel %vm1952, %v1430, 0.0
  %v2238 = vadd.f32 %v2236, %v2237
  %v2239 = vsel %vm1952, %v1435, 0.0
  %v2240 = vadd.f32 %v2238, %v2239
  %v2241 = vsel %vm1952, %v1438, 0.0
  %v2242 = vadd.f32 %v2240, %v2241
  %v2243 = vsel %vm1952, %v1443, 0.0
  %v2244 = vadd.f32 %v2242, %v2243
  %v2245 = vsel %vm1952, %v1446, 0.0
  %v2246 = vadd.f32 %v2244, %v2245
  %v2247 = vsel %vm1952, %v1451, 0.0
  %v2248 = vadd.f32 %v2246, %v2247
  %v2249 = vsel %vm1952, %v1454, 0.0
  %v2250 = vadd.f32 %v2248, %v2249
  %v2251 = vsel %vm1952, %v1459, 0.0
  %v2252 = vadd.f32 %v2250, %v2251
  %v2253 = vsel %vm1952, %v1462, 0.0
  %v2254 = vadd.f32 %v2252, %v2253
  %v2255 = vsel %vm1952, %v1467, 0.0
  %v2256 = vadd.f32 %v2254, %v2255
  %v2257 = vrot.slane %v2256, 4
  %v2258 = vadd.f32 %v2256, %v2257
  %v2259 = vrot.slane %v2258, 2
  %v2260 = vadd.f32 %v2258, %v2259
  %v2261 = vrot.slane %v2260, 1
  %v2262 = vadd.f32 %v2260, %v2261
  %v2263 = vadd.f32 %v2159, %v2262
  %v2264 = vsel %vm1952, %v1755, 0.0
  %v2265 = vsel %vm1952, %v1758, 0.0
  %v2266 = vadd.f32 %v2264, %v2265
  %v2267 = vsel %vm1952, %v1763, 0.0
  %v2268 = vadd.f32 %v2266, %v2267
  %v2269 = vsel %vm1952, %v1766, 0.0
  %v2270 = vadd.f32 %v2268, %v2269
  %v2271 = vsel %vm1952, %v1771, 0.0
  %v2272 = vadd.f32 %v2270, %v2271
  %v2273 = vsel %vm1952, %v1774, 0.0
  %v2274 = vadd.f32 %v2272, %v2273
  %v2275 = vsel %vm1952, %v1779, 0.0
  %v2276 = vadd.f32 %v2274, %v2275
  %v2277 = vsel %vm1952, %v1782, 0.0
  %v2278 = vadd.f32 %v2276, %v2277
  %v2279 = vsel %vm1952, %v1787, 0.0
  %v2280 = vadd.f32 %v2278, %v2279
  %v2281 = vsel %vm1952, %v1790, 0.0
  %v2282 = vadd.f32 %v2280, %v2281
  %v2283 = vsel %vm1952, %v1795, 0.0
  %v2284 = vadd.f32 %v2282, %v2283
  %v2285 = vsel %vm1952, %v1798, 0.0
  %v2286 = vadd.f32 %v2284, %v2285
  %v2287 = vsel %vm1952, %v1803, 0.0
  %v2288 = vadd.f32 %v2286, %v2287
  %v2289 = vsel %vm1952, %v1806, 0.0
  %v2290 = vadd.f32 %v2288, %v2289
  %v2291 = vsel %vm1952, %v1811, 0.0
  %v2292 = vadd.f32 %v2290, %v2291
  %v2293 = vsel %vm1952, %v1814, 0.0
  %v2294 = vadd.f32 %v2292, %v2293
  %v2295 = vsel %vm1952, %v1819, 0.0
  %v2296 = vadd.f32 %v2294, %v2295
  %v2297 = vsel %vm1952, %v1822, 0.0
  %v2298 = vadd.f32 %v2296, %v2297
  %v2299 = vsel %vm1952, %v1827, 0.0
  %v2300 = vadd.f32 %v2298, %v2299
  %v2301 = vsel %vm1952, %v1830, 0.0
  %v2302 = vadd.f32 %v2300, %v2301
  %v2303 = vsel %vm1952, %v1835, 0.0
  %v2304 = vadd.f32 %v2302, %v2303
  %v2305 = vsel %vm1952, %v1838, 0.0
  %v2306 = vadd.f32 %v2304, %v2305
  %v2307 = vsel %vm1952, %v1843, 0.0
  %v2308 = vadd.f32 %v2306, %v2307
  %v2309 = vsel %vm1952, %v1846, 0.0
  %v2310 = vadd.f32 %v2308, %v2309
  %v2311 = vsel %vm1952, %v1851, 0.0
  %v2312 = vadd.f32 %v2310, %v2311
  %v2313 = vsel %vm1952, %v1854, 0.0
  %v2314 = vadd.f32 %v2312, %v2313
  %v2315 = vsel %vm1952, %v1859, 0.0
  %v2316 = vadd.f32 %v2314, %v2315
  %v2317 = vsel %vm1952, %v1862, 0.0
  %v2318 = vadd.f32 %v2316, %v2317
  %v2319 = vsel %vm1952, %v1867, 0.0
  %v2320 = vadd.f32 %v2318, %v2319
  %v2321 = vsel %vm1952, %v1870, 0.0
  %v2322 = vadd.f32 %v2320, %v2321
  %v2323 = vsel %vm1952, %v1875, 0.0
  %v2324 = vadd.f32 %v2322, %v2323
  %v2325 = vsel %vm1952, %v1878, 0.0
  %v2326 = vadd.f32 %v2324, %v2325
  %v2327 = vsel %vm1952, %v1883, 0.0
  %v2328 = vadd.f32 %v2326, %v2327
  %v2329 = vsel %vm1952, %v1886, 0.0
  %v2330 = vadd.f32 %v2328, %v2329
  %v2331 = vsel %vm1952, %v1891, 0.0
  %v2332 = vadd.f32 %v2330, %v2331
  %v2333 = vsel %vm1952, %v1894, 0.0
  %v2334 = vadd.f32 %v2332, %v2333
  %v2335 = vsel %vm1952, %v1899, 0.0
  %v2336 = vadd.f32 %v2334, %v2335
  %v2337 = vsel %vm1952, %v1902, 0.0
  %v2338 = vadd.f32 %v2336, %v2337
  %v2339 = vsel %vm1952, %v1907, 0.0
  %v2340 = vadd.f32 %v2338, %v2339
  %v2341 = vsel %vm1952, %v1910, 0.0
  %v2342 = vadd.f32 %v2340, %v2341
  %v2343 = vsel %vm1952, %v1915, 0.0
  %v2344 = vadd.f32 %v2342, %v2343
  %v2345 = vsel %vm1952, %v1918, 0.0
  %v2346 = vadd.f32 %v2344, %v2345
  %v2347 = vsel %vm1952, %v1923, 0.0
  %v2348 = vadd.f32 %v2346, %v2347
  %v2349 = vsel %vm1952, %v1926, 0.0
  %v2350 = vadd.f32 %v2348, %v2349
  %v2351 = vsel %vm1952, %v1931, 0.0
  %v2352 = vadd.f32 %v2350, %v2351
  %v2353 = vsel %vm1952, %v1934, 0.0
  %v2354 = vadd.f32 %v2352, %v2353
  %v2355 = vsel %vm1952, %v1939, 0.0
  %v2356 = vadd.f32 %v2354, %v2355
  %v2357 = vsel %vm1952, %v1942, 0.0
  %v2358 = vadd.f32 %v2356, %v2357
  %v2359 = vsel %vm1952, %v1947, 0.0
  %v2360 = vadd.f32 %v2358, %v2359
  %v2361 = vrot.slane %v2360, 4
  %v2362 = vadd.f32 %v2360, %v2361
  %v2363 = vrot.slane %v2362, 2
  %v2364 = vadd.f32 %v2362, %v2363
  %v2365 = vrot.slane %v2364, 1
  %v2366 = vadd.f32 %v2364, %v2365
  %v2367 = vadd.f32 %v2263, %v2366
  %v2368 = vmul.f32 %v315, %v315
  %v2369 = vmul.f32 %v318, %v318
  %v2370 = vmul.f32 %v323, %v323
  %v2371 = vmul.f32 %v326, %v326
  %v2372 = vmul.f32 %v331, %v331
  %v2373 = vmul.f32 %v334, %v334
  %v2374 = vmul.f32 %v339, %v339
  %v2375 = vmul.f32 %v342, %v342
  %v2376 = vmul.f32 %v347, %v347
  %v2377 = vmul.f32 %v350, %v350
  %v2378 = vmul.f32 %v355, %v355
  %v2379 = vmul.f32 %v358, %v358
  %v2380 = vmul.f32 %v363, %v363
  %v2381 = vmul.f32 %v366, %v366
  %v2382 = vmul.f32 %v371, %v371
  %v2383 = vmul.f32 %v374, %v374
  %v2384 = vmul.f32 %v379, %v379
  %v2385 = vmul.f32 %v382, %v382
  %v2386 = vmul.f32 %v387, %v387
  %v2387 = vmul.f32 %v390, %v390
  %v2388 = vmul.f32 %v395, %v395
  %v2389 = vmul.f32 %v398, %v398
  %v2390 = vmul.f32 %v403, %v403
  %v2391 = vmul.f32 %v406, %v406
  %v2392 = vmul.f32 %v411, %v411
  %v2393 = vmul.f32 %v414, %v414
  %v2394 = vmul.f32 %v419, %v419
  %v2395 = vmul.f32 %v422, %v422
  %v2396 = vmul.f32 %v427, %v427
  %v2397 = vmul.f32 %v430, %v430
  %v2398 = vmul.f32 %v435, %v435
  %v2399 = vmul.f32 %v438, %v438
  %v2400 = vmul.f32 %v443, %v443
  %v2401 = vmul.f32 %v446, %v446
  %v2402 = vmul.f32 %v451, %v451
  %v2403 = vmul.f32 %v454, %v454
  %v2404 = vmul.f32 %v459, %v459
  %v2405 = vmul.f32 %v462, %v462
  %v2406 = vmul.f32 %v467, %v467
  %v2407 = vmul.f32 %v470, %v470
  %v2408 = vmul.f32 %v475, %v475
  %v2409 = vmul.f32 %v478, %v478
  %v2410 = vmul.f32 %v483, %v483
  %v2411 = vmul.f32 %v486, %v486
  %v2412 = vmul.f32 %v491, %v491
  %v2413 = vmul.f32 %v494, %v494
  %v2414 = vmul.f32 %v499, %v499
  %v2415 = vmul.f32 %v502, %v502
  %v2416 = vmul.f32 %v507, %v507
  %v2417 = vsel %vm1952, %v2368, 0.0
  %v2418 = vsel %vm1952, %v2369, 0.0
  %v2419 = vadd.f32 %v2417, %v2418
  %v2420 = vsel %vm1952, %v2370, 0.0
  %v2421 = vadd.f32 %v2419, %v2420
  %v2422 = vsel %vm1952, %v2371, 0.0
  %v2423 = vadd.f32 %v2421, %v2422
  %v2424 = vsel %vm1952, %v2372, 0.0
  %v2425 = vadd.f32 %v2423, %v2424
  %v2426 = vsel %vm1952, %v2373, 0.0
  %v2427 = vadd.f32 %v2425, %v2426
  %v2428 = vsel %vm1952, %v2374, 0.0
  %v2429 = vadd.f32 %v2427, %v2428
  %v2430 = vsel %vm1952, %v2375, 0.0
  %v2431 = vadd.f32 %v2429, %v2430
  %v2432 = vsel %vm1952, %v2376, 0.0
  %v2433 = vadd.f32 %v2431, %v2432
  %v2434 = vsel %vm1952, %v2377, 0.0
  %v2435 = vadd.f32 %v2433, %v2434
  %v2436 = vsel %vm1952, %v2378, 0.0
  %v2437 = vadd.f32 %v2435, %v2436
  %v2438 = vsel %vm1952, %v2379, 0.0
  %v2439 = vadd.f32 %v2437, %v2438
  %v2440 = vsel %vm1952, %v2380, 0.0
  %v2441 = vadd.f32 %v2439, %v2440
  %v2442 = vsel %vm1952, %v2381, 0.0
  %v2443 = vadd.f32 %v2441, %v2442
  %v2444 = vsel %vm1952, %v2382, 0.0
  %v2445 = vadd.f32 %v2443, %v2444
  %v2446 = vsel %vm1952, %v2383, 0.0
  %v2447 = vadd.f32 %v2445, %v2446
  %v2448 = vsel %vm1952, %v2384, 0.0
  %v2449 = vadd.f32 %v2447, %v2448
  %v2450 = vsel %vm1952, %v2385, 0.0
  %v2451 = vadd.f32 %v2449, %v2450
  %v2452 = vsel %vm1952, %v2386, 0.0
  %v2453 = vadd.f32 %v2451, %v2452
  %v2454 = vsel %vm1952, %v2387, 0.0
  %v2455 = vadd.f32 %v2453, %v2454
  %v2456 = vsel %vm1952, %v2388, 0.0
  %v2457 = vadd.f32 %v2455, %v2456
  %v2458 = vsel %vm1952, %v2389, 0.0
  %v2459 = vadd.f32 %v2457, %v2458
  %v2460 = vsel %vm1952, %v2390, 0.0
  %v2461 = vadd.f32 %v2459, %v2460
  %v2462 = vsel %vm1952, %v2391, 0.0
  %v2463 = vadd.f32 %v2461, %v2462
  %v2464 = vsel %vm1952, %v2392, 0.0
  %v2465 = vadd.f32 %v2463, %v2464
  %v2466 = vsel %vm1952, %v2393, 0.0
  %v2467 = vadd.f32 %v2465, %v2466
  %v2468 = vsel %vm1952, %v2394, 0.0
  %v2469 = vadd.f32 %v2467, %v2468
  %v2470 = vsel %vm1952, %v2395, 0.0
  %v2471 = vadd.f32 %v2469, %v2470
  %v2472 = vsel %vm1952, %v2396, 0.0
  %v2473 = vadd.f32 %v2471, %v2472
  %v2474 = vsel %vm1952, %v2397, 0.0
  %v2475 = vadd.f32 %v2473, %v2474
  %v2476 = vsel %vm1952, %v2398, 0.0
  %v2477 = vadd.f32 %v2475, %v2476
  %v2478 = vsel %vm1952, %v2399, 0.0
  %v2479 = vadd.f32 %v2477, %v2478
  %v2480 = vsel %vm1952, %v2400, 0.0
  %v2481 = vadd.f32 %v2479, %v2480
  %v2482 = vsel %vm1952, %v2401, 0.0
  %v2483 = vadd.f32 %v2481, %v2482
  %v2484 = vsel %vm1952, %v2402, 0.0
  %v2485 = vadd.f32 %v2483, %v2484
  %v2486 = vsel %vm1952, %v2403, 0.0
  %v2487 = vadd.f32 %v2485, %v2486
  %v2488 = vsel %vm1952, %v2404, 0.0
  %v2489 = vadd.f32 %v2487, %v2488
  %v2490 = vsel %vm1952, %v2405, 0.0
  %v2491 = vadd.f32 %v2489, %v2490
  %v2492 = vsel %vm1952, %v2406, 0.0
  %v2493 = vadd.f32 %v2491, %v2492
  %v2494 = vsel %vm1952, %v2407, 0.0
  %v2495 = vadd.f32 %v2493, %v2494
  %v2496 = vsel %vm1952, %v2408, 0.0
  %v2497 = vadd.f32 %v2495, %v2496
  %v2498 = vsel %vm1952, %v2409, 0.0
  %v2499 = vadd.f32 %v2497, %v2498
  %v2500 = vsel %vm1952, %v2410, 0.0
  %v2501 = vadd.f32 %v2499, %v2500
  %v2502 = vsel %vm1952, %v2411, 0.0
  %v2503 = vadd.f32 %v2501, %v2502
  %v2504 = vsel %vm1952, %v2412, 0.0
  %v2505 = vadd.f32 %v2503, %v2504
  %v2506 = vsel %vm1952, %v2413, 0.0
  %v2507 = vadd.f32 %v2505, %v2506
  %v2508 = vsel %vm1952, %v2414, 0.0
  %v2509 = vadd.f32 %v2507, %v2508
  %v2510 = vsel %vm1952, %v2415, 0.0
  %v2511 = vadd.f32 %v2509, %v2510
  %v2512 = vsel %vm1952, %v2416, 0.0
  %v2513 = vadd.f32 %v2511, %v2512
  %v2514 = vrot.slane %v2513, 4
  %v2515 = vadd.f32 %v2513, %v2514
  %v2516 = vrot.slane %v2515, 2
  %v2517 = vadd.f32 %v2515, %v2516
  %v2518 = vrot.slane %v2517, 1
  %v2519 = vadd.f32 %v2517, %v2518
  %v2520 = vmul.f32 %v795, %v795
  %v2521 = vmul.f32 %v798, %v798
  %v2522 = vmul.f32 %v803, %v803
  %v2523 = vmul.f32 %v806, %v806
  %v2524 = vmul.f32 %v811, %v811
  %v2525 = vmul.f32 %v814, %v814
  %v2526 = vmul.f32 %v819, %v819
  %v2527 = vmul.f32 %v822, %v822
  %v2528 = vmul.f32 %v827, %v827
  %v2529 = vmul.f32 %v830, %v830
  %v2530 = vmul.f32 %v835, %v835
  %v2531 = vmul.f32 %v838, %v838
  %v2532 = vmul.f32 %v843, %v843
  %v2533 = vmul.f32 %v846, %v846
  %v2534 = vmul.f32 %v851, %v851
  %v2535 = vmul.f32 %v854, %v854
  %v2536 = vmul.f32 %v859, %v859
  %v2537 = vmul.f32 %v862, %v862
  %v2538 = vmul.f32 %v867, %v867
  %v2539 = vmul.f32 %v870, %v870
  %v2540 = vmul.f32 %v875, %v875
  %v2541 = vmul.f32 %v878, %v878
  %v2542 = vmul.f32 %v883, %v883
  %v2543 = vmul.f32 %v886, %v886
  %v2544 = vmul.f32 %v891, %v891
  %v2545 = vmul.f32 %v894, %v894
  %v2546 = vmul.f32 %v899, %v899
  %v2547 = vmul.f32 %v902, %v902
  %v2548 = vmul.f32 %v907, %v907
  %v2549 = vmul.f32 %v910, %v910
  %v2550 = vmul.f32 %v915, %v915
  %v2551 = vmul.f32 %v918, %v918
  %v2552 = vmul.f32 %v923, %v923
  %v2553 = vmul.f32 %v926, %v926
  %v2554 = vmul.f32 %v931, %v931
  %v2555 = vmul.f32 %v934, %v934
  %v2556 = vmul.f32 %v939, %v939
  %v2557 = vmul.f32 %v942, %v942
  %v2558 = vmul.f32 %v947, %v947
  %v2559 = vmul.f32 %v950, %v950
  %v2560 = vmul.f32 %v955, %v955
  %v2561 = vmul.f32 %v958, %v958
  %v2562 = vmul.f32 %v963, %v963
  %v2563 = vmul.f32 %v966, %v966
  %v2564 = vmul.f32 %v971, %v971
  %v2565 = vmul.f32 %v974, %v974
  %v2566 = vmul.f32 %v979, %v979
  %v2567 = vmul.f32 %v982, %v982
  %v2568 = vmul.f32 %v987, %v987
  %v2569 = vsel %vm1952, %v2520, 0.0
  %v2570 = vsel %vm1952, %v2521, 0.0
  %v2571 = vadd.f32 %v2569, %v2570
  %v2572 = vsel %vm1952, %v2522, 0.0
  %v2573 = vadd.f32 %v2571, %v2572
  %v2574 = vsel %vm1952, %v2523, 0.0
  %v2575 = vadd.f32 %v2573, %v2574
  %v2576 = vsel %vm1952, %v2524, 0.0
  %v2577 = vadd.f32 %v2575, %v2576
  %v2578 = vsel %vm1952, %v2525, 0.0
  %v2579 = vadd.f32 %v2577, %v2578
  %v2580 = vsel %vm1952, %v2526, 0.0
  %v2581 = vadd.f32 %v2579, %v2580
  %v2582 = vsel %vm1952, %v2527, 0.0
  %v2583 = vadd.f32 %v2581, %v2582
  %v2584 = vsel %vm1952, %v2528, 0.0
  %v2585 = vadd.f32 %v2583, %v2584
  %v2586 = vsel %vm1952, %v2529, 0.0
  %v2587 = vadd.f32 %v2585, %v2586
  %v2588 = vsel %vm1952, %v2530, 0.0
  %v2589 = vadd.f32 %v2587, %v2588
  %v2590 = vsel %vm1952, %v2531, 0.0
  %v2591 = vadd.f32 %v2589, %v2590
  %v2592 = vsel %vm1952, %v2532, 0.0
  %v2593 = vadd.f32 %v2591, %v2592
  %v2594 = vsel %vm1952, %v2533, 0.0
  %v2595 = vadd.f32 %v2593, %v2594
  %v2596 = vsel %vm1952, %v2534, 0.0
  %v2597 = vadd.f32 %v2595, %v2596
  %v2598 = vsel %vm1952, %v2535, 0.0
  %v2599 = vadd.f32 %v2597, %v2598
  %v2600 = vsel %vm1952, %v2536, 0.0
  %v2601 = vadd.f32 %v2599, %v2600
  %v2602 = vsel %vm1952, %v2537, 0.0
  %v2603 = vadd.f32 %v2601, %v2602
  %v2604 = vsel %vm1952, %v2538, 0.0
  %v2605 = vadd.f32 %v2603, %v2604
  %v2606 = vsel %vm1952, %v2539, 0.0
  %v2607 = vadd.f32 %v2605, %v2606
  %v2608 = vsel %vm1952, %v2540, 0.0
  %v2609 = vadd.f32 %v2607, %v2608
  %v2610 = vsel %vm1952, %v2541, 0.0
  %v2611 = vadd.f32 %v2609, %v2610
  %v2612 = vsel %vm1952, %v2542, 0.0
  %v2613 = vadd.f32 %v2611, %v2612
  %v2614 = vsel %vm1952, %v2543, 0.0
  %v2615 = vadd.f32 %v2613, %v2614
  %v2616 = vsel %vm1952, %v2544, 0.0
  %v2617 = vadd.f32 %v2615, %v2616
  %v2618 = vsel %vm1952, %v2545, 0.0
  %v2619 = vadd.f32 %v2617, %v2618
  %v2620 = vsel %vm1952, %v2546, 0.0
  %v2621 = vadd.f32 %v2619, %v2620
  %v2622 = vsel %vm1952, %v2547, 0.0
  %v2623 = vadd.f32 %v2621, %v2622
  %v2624 = vsel %vm1952, %v2548, 0.0
  %v2625 = vadd.f32 %v2623, %v2624
  %v2626 = vsel %vm1952, %v2549, 0.0
  %v2627 = vadd.f32 %v2625, %v2626
  %v2628 = vsel %vm1952, %v2550, 0.0
  %v2629 = vadd.f32 %v2627, %v2628
  %v2630 = vsel %vm1952, %v2551, 0.0
  %v2631 = vadd.f32 %v2629, %v2630
  %v2632 = vsel %vm1952, %v2552, 0.0
  %v2633 = vadd.f32 %v2631, %v2632
  %v2634 = vsel %vm1952, %v2553, 0.0
  %v2635 = vadd.f32 %v2633, %v2634
  %v2636 = vsel %vm1952, %v2554, 0.0
  %v2637 = vadd.f32 %v2635, %v2636
  %v2638 = vsel %vm1952, %v2555, 0.0
  %v2639 = vadd.f32 %v2637, %v2638
  %v2640 = vsel %vm1952, %v2556, 0.0
  %v2641 = vadd.f32 %v2639, %v2640
  %v2642 = vsel %vm1952, %v2557, 0.0
  %v2643 = vadd.f32 %v2641, %v2642
  %v2644 = vsel %vm1952, %v2558, 0.0
  %v2645 = vadd.f32 %v2643, %v2644
  %v2646 = vsel %vm1952, %v2559, 0.0
  %v2647 = vadd.f32 %v2645, %v2646
  %v2648 = vsel %vm1952, %v2560, 0.0
  %v2649 = vadd.f32 %v2647, %v2648
  %v2650 = vsel %vm1952, %v2561, 0.0
  %v2651 = vadd.f32 %v2649, %v2650
  %v2652 = vsel %vm1952, %v2562, 0.0
  %v2653 = vadd.f32 %v2651, %v2652
  %v2654 = vsel %vm1952, %v2563, 0.0
  %v2655 = vadd.f32 %v2653, %v2654
  %v2656 = vsel %vm1952, %v2564, 0.0
  %v2657 = vadd.f32 %v2655, %v2656
  %v2658 = vsel %vm1952, %v2565, 0.0
  %v2659 = vadd.f32 %v2657, %v2658
  %v2660 = vsel %vm1952, %v2566, 0.0
  %v2661 = vadd.f32 %v2659, %v2660
  %v2662 = vsel %vm1952, %v2567, 0.0
  %v2663 = vadd.f32 %v2661, %v2662
  %v2664 = vsel %vm1952, %v2568, 0.0
  %v2665 = vadd.f32 %v2663, %v2664
  %v2666 = vrot.slane %v2665, 4
  %v2667 = vadd.f32 %v2665, %v2666
  %v2668 = vrot.slane %v2667, 2
  %v2669 = vadd.f32 %v2667, %v2668
  %v2670 = vrot.slane %v2669, 1
  %v2671 = vadd.f32 %v2669, %v2670
  %v2672 = vadd.f32 %v2519, %v2671
  %v2673 = vmul.f32 %v1275, %v1275
  %v2674 = vmul.f32 %v1278, %v1278
  %v2675 = vmul.f32 %v1283, %v1283
  %v2676 = vmul.f32 %v1286, %v1286
  %v2677 = vmul.f32 %v1291, %v1291
  %v2678 = vmul.f32 %v1294, %v1294
  %v2679 = vmul.f32 %v1299, %v1299
  %v2680 = vmul.f32 %v1302, %v1302
  %v2681 = vmul.f32 %v1307, %v1307
  %v2682 = vmul.f32 %v1310, %v1310
  %v2683 = vmul.f32 %v1315, %v1315
  %v2684 = vmul.f32 %v1318, %v1318
  %v2685 = vmul.f32 %v1323, %v1323
  %v2686 = vmul.f32 %v1326, %v1326
  %v2687 = vmul.f32 %v1331, %v1331
  %v2688 = vmul.f32 %v1334, %v1334
  %v2689 = vmul.f32 %v1339, %v1339
  %v2690 = vmul.f32 %v1342, %v1342
  %v2691 = vmul.f32 %v1347, %v1347
  %v2692 = vmul.f32 %v1350, %v1350
  %v2693 = vmul.f32 %v1355, %v1355
  %v2694 = vmul.f32 %v1358, %v1358
  %v2695 = vmul.f32 %v1363, %v1363
  %v2696 = vmul.f32 %v1366, %v1366
  %v2697 = vmul.f32 %v1371, %v1371
  %v2698 = vmul.f32 %v1374, %v1374
  %v2699 = vmul.f32 %v1379, %v1379
  %v2700 = vmul.f32 %v1382, %v1382
  %v2701 = vmul.f32 %v1387, %v1387
  %v2702 = vmul.f32 %v1390, %v1390
  %v2703 = vmul.f32 %v1395, %v1395
  %v2704 = vmul.f32 %v1398, %v1398
  %v2705 = vmul.f32 %v1403, %v1403
  %v2706 = vmul.f32 %v1406, %v1406
  %v2707 = vmul.f32 %v1411, %v1411
  %v2708 = vmul.f32 %v1414, %v1414
  %v2709 = vmul.f32 %v1419, %v1419
  %v2710 = vmul.f32 %v1422, %v1422
  %v2711 = vmul.f32 %v1427, %v1427
  %v2712 = vmul.f32 %v1430, %v1430
  %v2713 = vmul.f32 %v1435, %v1435
  %v2714 = vmul.f32 %v1438, %v1438
  %v2715 = vmul.f32 %v1443, %v1443
  %v2716 = vmul.f32 %v1446, %v1446
  %v2717 = vmul.f32 %v1451, %v1451
  %v2718 = vmul.f32 %v1454, %v1454
  %v2719 = vmul.f32 %v1459, %v1459
  %v2720 = vmul.f32 %v1462, %v1462
  %v2721 = vmul.f32 %v1467, %v1467
  %v2722 = vsel %vm1952, %v2673, 0.0
  %v2723 = vsel %vm1952, %v2674, 0.0
  %v2724 = vadd.f32 %v2722, %v2723
  %v2725 = vsel %vm1952, %v2675, 0.0
  %v2726 = vadd.f32 %v2724, %v2725
  %v2727 = vsel %vm1952, %v2676, 0.0
  %v2728 = vadd.f32 %v2726, %v2727
  %v2729 = vsel %vm1952, %v2677, 0.0
  %v2730 = vadd.f32 %v2728, %v2729
  %v2731 = vsel %vm1952, %v2678, 0.0
  %v2732 = vadd.f32 %v2730, %v2731
  %v2733 = vsel %vm1952, %v2679, 0.0
  %v2734 = vadd.f32 %v2732, %v2733
  %v2735 = vsel %vm1952, %v2680, 0.0
  %v2736 = vadd.f32 %v2734, %v2735
  %v2737 = vsel %vm1952, %v2681, 0.0
  %v2738 = vadd.f32 %v2736, %v2737
  %v2739 = vsel %vm1952, %v2682, 0.0
  %v2740 = vadd.f32 %v2738, %v2739
  %v2741 = vsel %vm1952, %v2683, 0.0
  %v2742 = vadd.f32 %v2740, %v2741
  %v2743 = vsel %vm1952, %v2684, 0.0
  %v2744 = vadd.f32 %v2742, %v2743
  %v2745 = vsel %vm1952, %v2685, 0.0
  %v2746 = vadd.f32 %v2744, %v2745
  %v2747 = vsel %vm1952, %v2686, 0.0
  %v2748 = vadd.f32 %v2746, %v2747
  %v2749 = vsel %vm1952, %v2687, 0.0
  %v2750 = vadd.f32 %v2748, %v2749
  %v2751 = vsel %vm1952, %v2688, 0.0
  %v2752 = vadd.f32 %v2750, %v2751
  %v2753 = vsel %vm1952, %v2689, 0.0
  %v2754 = vadd.f32 %v2752, %v2753
  %v2755 = vsel %vm1952, %v2690, 0.0
  %v2756 = vadd.f32 %v2754, %v2755
  %v2757 = vsel %vm1952, %v2691, 0.0
  %v2758 = vadd.f32 %v2756, %v2757
  %v2759 = vsel %vm1952, %v2692, 0.0
  %v2760 = vadd.f32 %v2758, %v2759
  %v2761 = vsel %vm1952, %v2693, 0.0
  %v2762 = vadd.f32 %v2760, %v2761
  %v2763 = vsel %vm1952, %v2694, 0.0
  %v2764 = vadd.f32 %v2762, %v2763
  %v2765 = vsel %vm1952, %v2695, 0.0
  %v2766 = vadd.f32 %v2764, %v2765
  %v2767 = vsel %vm1952, %v2696, 0.0
  %v2768 = vadd.f32 %v2766, %v2767
  %v2769 = vsel %vm1952, %v2697, 0.0
  %v2770 = vadd.f32 %v2768, %v2769
  %v2771 = vsel %vm1952, %v2698, 0.0
  %v2772 = vadd.f32 %v2770, %v2771
  %v2773 = vsel %vm1952, %v2699, 0.0
  %v2774 = vadd.f32 %v2772, %v2773
  %v2775 = vsel %vm1952, %v2700, 0.0
  %v2776 = vadd.f32 %v2774, %v2775
  %v2777 = vsel %vm1952, %v2701, 0.0
  %v2778 = vadd.f32 %v2776, %v2777
  %v2779 = vsel %vm1952, %v2702, 0.0
  %v2780 = vadd.f32 %v2778, %v2779
  %v2781 = vsel %vm1952, %v2703, 0.0
  %v2782 = vadd.f32 %v2780, %v2781
  %v2783 = vsel %vm1952, %v2704, 0.0
  %v2784 = vadd.f32 %v2782, %v2783
  %v2785 = vsel %vm1952, %v2705, 0.0
  %v2786 = vadd.f32 %v2784, %v2785
  %v2787 = vsel %vm1952, %v2706, 0.0
  %v2788 = vadd.f32 %v2786, %v2787
  %v2789 = vsel %vm1952, %v2707, 0.0
  %v2790 = vadd.f32 %v2788, %v2789
  %v2791 = vsel %vm1952, %v2708, 0.0
  %v2792 = vadd.f32 %v2790, %v2791
  %v2793 = vsel %vm1952, %v2709, 0.0
  %v2794 = vadd.f32 %v2792, %v2793
  %v2795 = vsel %vm1952, %v2710, 0.0
  %v2796 = vadd.f32 %v2794, %v2795
  %v2797 = vsel %vm1952, %v2711, 0.0
  %v2798 = vadd.f32 %v2796, %v2797
  %v2799 = vsel %vm1952, %v2712, 0.0
  %v2800 = vadd.f32 %v2798, %v2799
  %v2801 = vsel %vm1952, %v2713, 0.0
  %v2802 = vadd.f32 %v2800, %v2801
  %v2803 = vsel %vm1952, %v2714, 0.0
  %v2804 = vadd.f32 %v2802, %v2803
  %v2805 = vsel %vm1952, %v2715, 0.0
  %v2806 = vadd.f32 %v2804, %v2805
  %v2807 = vsel %vm1952, %v2716, 0.0
  %v2808 = vadd.f32 %v2806, %v2807
  %v2809 = vsel %vm1952, %v2717, 0.0
  %v2810 = vadd.f32 %v2808, %v2809
  %v2811 = vsel %vm1952, %v2718, 0.0
  %v2812 = vadd.f32 %v2810, %v2811
  %v2813 = vsel %vm1952, %v2719, 0.0
  %v2814 = vadd.f32 %v2812, %v2813
  %v2815 = vsel %vm1952, %v2720, 0.0
  %v2816 = vadd.f32 %v2814, %v2815
  %v2817 = vsel %vm1952, %v2721, 0.0
  %v2818 = vadd.f32 %v2816, %v2817
  %v2819 = vrot.slane %v2818, 4
  %v2820 = vadd.f32 %v2818, %v2819
  %v2821 = vrot.slane %v2820, 2
  %v2822 = vadd.f32 %v2820, %v2821
  %v2823 = vrot.slane %v2822, 1
  %v2824 = vadd.f32 %v2822, %v2823
  %v2825 = vadd.f32 %v2672, %v2824
  %v2826 = vmul.f32 %v1755, %v1755
  %v2827 = vmul.f32 %v1758, %v1758
  %v2828 = vmul.f32 %v1763, %v1763
  %v2829 = vmul.f32 %v1766, %v1766
  %v2830 = vmul.f32 %v1771, %v1771
  %v2831 = vmul.f32 %v1774, %v1774
  %v2832 = vmul.f32 %v1779, %v1779
  %v2833 = vmul.f32 %v1782, %v1782
  %v2834 = vmul.f32 %v1787, %v1787
  %v2835 = vmul.f32 %v1790, %v1790
  %v2836 = vmul.f32 %v1795, %v1795
  %v2837 = vmul.f32 %v1798, %v1798
  %v2838 = vmul.f32 %v1803, %v1803
  %v2839 = vmul.f32 %v1806, %v1806
  %v2840 = vmul.f32 %v1811, %v1811
  %v2841 = vmul.f32 %v1814, %v1814
  %v2842 = vmul.f32 %v1819, %v1819
  %v2843 = vmul.f32 %v1822, %v1822
  %v2844 = vmul.f32 %v1827, %v1827
  %v2845 = vmul.f32 %v1830, %v1830
  %v2846 = vmul.f32 %v1835, %v1835
  %v2847 = vmul.f32 %v1838, %v1838
  %v2848 = vmul.f32 %v1843, %v1843
  %v2849 = vmul.f32 %v1846, %v1846
  %v2850 = vmul.f32 %v1851, %v1851
  %v2851 = vmul.f32 %v1854, %v1854
  %v2852 = vmul.f32 %v1859, %v1859
  %v2853 = vmul.f32 %v1862, %v1862
  %v2854 = vmul.f32 %v1867, %v1867
  %v2855 = vmul.f32 %v1870, %v1870
  %v2856 = vmul.f32 %v1875, %v1875
  %v2857 = vmul.f32 %v1878, %v1878
  %v2858 = vmul.f32 %v1883, %v1883
  %v2859 = vmul.f32 %v1886, %v1886
  %v2860 = vmul.f32 %v1891, %v1891
  %v2861 = vmul.f32 %v1894, %v1894
  %v2862 = vmul.f32 %v1899, %v1899
  %v2863 = vmul.f32 %v1902, %v1902
  %v2864 = vmul.f32 %v1907, %v1907
  %v2865 = vmul.f32 %v1910, %v1910
  %v2866 = vmul.f32 %v1915, %v1915
  %v2867 = vmul.f32 %v1918, %v1918
  %v2868 = vmul.f32 %v1923, %v1923
  %v2869 = vmul.f32 %v1926, %v1926
  %v2870 = vmul.f32 %v1931, %v1931
  %v2871 = vmul.f32 %v1934, %v1934
  %v2872 = vmul.f32 %v1939, %v1939
  %v2873 = vmul.f32 %v1942, %v1942
  %v2874 = vmul.f32 %v1947, %v1947
  %v2875 = vsel %vm1952, %v2826, 0.0
  %v2876 = vsel %vm1952, %v2827, 0.0
  %v2877 = vadd.f32 %v2875, %v2876
  %v2878 = vsel %vm1952, %v2828, 0.0
  %v2879 = vadd.f32 %v2877, %v2878
  %v2880 = vsel %vm1952, %v2829, 0.0
  %v2881 = vadd.f32 %v2879, %v2880
  %v2882 = vsel %vm1952, %v2830, 0.0
  %v2883 = vadd.f32 %v2881, %v2882
  %v2884 = vsel %vm1952, %v2831, 0.0
  %v2885 = vadd.f32 %v2883, %v2884
  %v2886 = vsel %vm1952, %v2832, 0.0
  %v2887 = vadd.f32 %v2885, %v2886
  %v2888 = vsel %vm1952, %v2833, 0.0
  %v2889 = vadd.f32 %v2887, %v2888
  %v2890 = vsel %vm1952, %v2834, 0.0
  %v2891 = vadd.f32 %v2889, %v2890
  %v2892 = vsel %vm1952, %v2835, 0.0
  %v2893 = vadd.f32 %v2891, %v2892
  %v2894 = vsel %vm1952, %v2836, 0.0
  %v2895 = vadd.f32 %v2893, %v2894
  %v2896 = vsel %vm1952, %v2837, 0.0
  %v2897 = vadd.f32 %v2895, %v2896
  %v2898 = vsel %vm1952, %v2838, 0.0
  %v2899 = vadd.f32 %v2897, %v2898
  %v2900 = vsel %vm1952, %v2839, 0.0
  %v2901 = vadd.f32 %v2899, %v2900
  %v2902 = vsel %vm1952, %v2840, 0.0
  %v2903 = vadd.f32 %v2901, %v2902
  %v2904 = vsel %vm1952, %v2841, 0.0
  %v2905 = vadd.f32 %v2903, %v2904
  %v2906 = vsel %vm1952, %v2842, 0.0
  %v2907 = vadd.f32 %v2905, %v2906
  %v2908 = vsel %vm1952, %v2843, 0.0
  %v2909 = vadd.f32 %v2907, %v2908
  %v2910 = vsel %vm1952, %v2844, 0.0
  %v2911 = vadd.f32 %v2909, %v2910
  %v2912 = vsel %vm1952, %v2845, 0.0
  %v2913 = vadd.f32 %v2911, %v2912
  %v2914 = vsel %vm1952, %v2846, 0.0
  %v2915 = vadd.f32 %v2913, %v2914
  %v2916 = vsel %vm1952, %v2847, 0.0
  %v2917 = vadd.f32 %v2915, %v2916
  %v2918 = vsel %vm1952, %v2848, 0.0
  %v2919 = vadd.f32 %v2917, %v2918
  %v2920 = vsel %vm1952, %v2849, 0.0
  %v2921 = vadd.f32 %v2919, %v2920
  %v2922 = vsel %vm1952, %v2850, 0.0
  %v2923 = vadd.f32 %v2921, %v2922
  %v2924 = vsel %vm1952, %v2851, 0.0
  %v2925 = vadd.f32 %v2923, %v2924
  %v2926 = vsel %vm1952, %v2852, 0.0
  %v2927 = vadd.f32 %v2925, %v2926
  %v2928 = vsel %vm1952, %v2853, 0.0
  %v2929 = vadd.f32 %v2927, %v2928
  %v2930 = vsel %vm1952, %v2854, 0.0
  %v2931 = vadd.f32 %v2929, %v2930
  %v2932 = vsel %vm1952, %v2855, 0.0
  %v2933 = vadd.f32 %v2931, %v2932
  %v2934 = vsel %vm1952, %v2856, 0.0
  %v2935 = vadd.f32 %v2933, %v2934
  %v2936 = vsel %vm1952, %v2857, 0.0
  %v2937 = vadd.f32 %v2935, %v2936
  %v2938 = vsel %vm1952, %v2858, 0.0
  %v2939 = vadd.f32 %v2937, %v2938
  %v2940 = vsel %vm1952, %v2859, 0.0
  %v2941 = vadd.f32 %v2939, %v2940
  %v2942 = vsel %vm1952, %v2860, 0.0
  %v2943 = vadd.f32 %v2941, %v2942
  %v2944 = vsel %vm1952, %v2861, 0.0
  %v2945 = vadd.f32 %v2943, %v2944
  %v2946 = vsel %vm1952, %v2862, 0.0
  %v2947 = vadd.f32 %v2945, %v2946
  %v2948 = vsel %vm1952, %v2863, 0.0
  %v2949 = vadd.f32 %v2947, %v2948
  %v2950 = vsel %vm1952, %v2864, 0.0
  %v2951 = vadd.f32 %v2949, %v2950
  %v2952 = vsel %vm1952, %v2865, 0.0
  %v2953 = vadd.f32 %v2951, %v2952
  %v2954 = vsel %vm1952, %v2866, 0.0
  %v2955 = vadd.f32 %v2953, %v2954
  %v2956 = vsel %vm1952, %v2867, 0.0
  %v2957 = vadd.f32 %v2955, %v2956
  %v2958 = vsel %vm1952, %v2868, 0.0
  %v2959 = vadd.f32 %v2957, %v2958
  %v2960 = vsel %vm1952, %v2869, 0.0
  %v2961 = vadd.f32 %v2959, %v2960
  %v2962 = vsel %vm1952, %v2870, 0.0
  %v2963 = vadd.f32 %v2961, %v2962
  %v2964 = vsel %vm1952, %v2871, 0.0
  %v2965 = vadd.f32 %v2963, %v2964
  %v2966 = vsel %vm1952, %v2872, 0.0
  %v2967 = vadd.f32 %v2965, %v2966
  %v2968 = vsel %vm1952, %v2873, 0.0
  %v2969 = vadd.f32 %v2967, %v2968
  %v2970 = vsel %vm1952, %v2874, 0.0
  %v2971 = vadd.f32 %v2969, %v2970
  %v2972 = vrot.slane %v2971, 4
  %v2973 = vadd.f32 %v2971, %v2972
  %v2974 = vrot.slane %v2973, 2
  %v2975 = vadd.f32 %v2973, %v2974
  %v2976 = vrot.slane %v2975, 1
  %v2977 = vadd.f32 %v2975, %v2976
  %v2978 = vadd.f32 %v2825, %v2977
  %v2979 = vmul.f32 %v2367, 0.0006377551
  %v2980 = vmul.f32 %v2978, 0.0006377551
  %v2981 = vmul.f32 %v2979, %v2979
  %v2982 = vsub.f32 %v2980, %v2981
  %v2983 = vmax.f32 %v2982, 0.0
  %v2984 = vld [vmem:[%s2] sm:$0x1]
  %v2985 = vadd.f32 %v2983, 1e-05
  %v2986 = vrsqrt.pop %v2985
  %v2987 = vmul.f32 %v2984, %v2986
  %v2988 = vld [vmem:[%s3] sm:$0x1]
  %v2989 = vmul.f32 %v2979, %v2987
  %v2990 = vsub.f32 %v2988, %v2989
  %v2992 = vlaneseq
  %v2993 = vshrl.u32 %v2992, 7
  %v2994 = vsub.s32 0, %v2993
  %v2995 = vrot.slane %v2987, %v2994
  %v2997 = vmul.f32 %v315, %v2995
  %v2998 = vmul.f32 %v318, %v2995
  %v2999 = vmul.f32 %v323, %v2995
  %v3000 = vmul.f32 %v326, %v2995
  %v3001 = vmul.f32 %v331, %v2995
  %v3002 = vmul.f32 %v334, %v2995
  %v3003 = vmul.f32 %v339, %v2995
  %v3004 = vmul.f32 %v342, %v2995
  %v3005 = vmul.f32 %v347, %v2995
  %v3006 = vmul.f32 %v350, %v2995
  %v3007 = vmul.f32 %v355, %v2995
  %v3008 = vmul.f32 %v358, %v2995
  %v3009 = vmul.f32 %v363, %v2995
  %v3010 = vmul.f32 %v366, %v2995
  %v3011 = vmul.f32 %v371, %v2995
  %v3012 = vmul.f32 %v374, %v2995
  %v3013 = vmul.f32 %v379, %v2995
  %v3014 = vmul.f32 %v382, %v2995
  %v3015 = vmul.f32 %v387, %v2995
  %v3016 = vmul.f32 %v390, %v2995
  %v3017 = vmul.f32 %v395, %v2995
  %v3018 = vmul.f32 %v398, %v2995
  %v3019 = vmul.f32 %v403, %v2995
  %v3020 = vmul.f32 %v406, %v2995
  %v3021 = vmul.f32 %v411, %v2995
  %v3022 = vmul.f32 %v414, %v2995
  %v3023 = vmul.f32 %v419, %v2995
  %v3024 = vmul.f32 %v422, %v2995
  %v3025 = vmul.f32 %v427, %v2995
  %v3026 = vmul.f32 %v430, %v2995
  %v3027 = vmul.f32 %v435, %v2995
  %v3028 = vmul.f32 %v438, %v2995
  %v3029 = vmul.f32 %v443, %v2995
  %v3030 = vmul.f32 %v446, %v2995
  %v3031 = vmul.f32 %v451, %v2995
  %v3032 = vmul.f32 %v454, %v2995
  %v3033 = vmul.f32 %v459, %v2995
  %v3034 = vmul.f32 %v462, %v2995
  %v3035 = vmul.f32 %v467, %v2995
  %v3036 = vmul.f32 %v470, %v2995
  %v3037 = vmul.f32 %v475, %v2995
  %v3038 = vmul.f32 %v478, %v2995
  %v3039 = vmul.f32 %v483, %v2995
  %v3040 = vmul.f32 %v486, %v2995
  %v3041 = vmul.f32 %v491, %v2995
  %v3042 = vmul.f32 %v494, %v2995
  %v3043 = vmul.f32 %v499, %v2995
  %v3044 = vmul.f32 %v502, %v2995
  %v3045 = vmul.f32 %v507, %v2995
  %v3047 = vlaneseq
  %v3048 = vshrl.u32 %v3047, 7
  %v3049 = vsub.s32 0, %v3048
  %v3050 = vrot.slane %v2990, %v3049
  %v3052 = vadd.f32 %v2997, %v3050
  %v3053 = vadd.f32 %v2998, %v3050
  %v3054 = vadd.f32 %v2999, %v3050
  %v3055 = vadd.f32 %v3000, %v3050
  %v3056 = vadd.f32 %v3001, %v3050
  %v3057 = vadd.f32 %v3002, %v3050
  %v3058 = vadd.f32 %v3003, %v3050
  %v3059 = vadd.f32 %v3004, %v3050
  %v3060 = vadd.f32 %v3005, %v3050
  %v3061 = vadd.f32 %v3006, %v3050
  %v3062 = vadd.f32 %v3007, %v3050
  %v3063 = vadd.f32 %v3008, %v3050
  %v3064 = vadd.f32 %v3009, %v3050
  %v3065 = vadd.f32 %v3010, %v3050
  %v3066 = vadd.f32 %v3011, %v3050
  %v3067 = vadd.f32 %v3012, %v3050
  %v3068 = vadd.f32 %v3013, %v3050
  %v3069 = vadd.f32 %v3014, %v3050
  %v3070 = vadd.f32 %v3015, %v3050
  %v3071 = vadd.f32 %v3016, %v3050
  %v3072 = vadd.f32 %v3017, %v3050
  %v3073 = vadd.f32 %v3018, %v3050
  %v3074 = vadd.f32 %v3019, %v3050
  %v3075 = vadd.f32 %v3020, %v3050
  %v3076 = vadd.f32 %v3021, %v3050
  %v3077 = vadd.f32 %v3022, %v3050
  %v3078 = vadd.f32 %v3023, %v3050
  %v3079 = vadd.f32 %v3024, %v3050
  %v3080 = vadd.f32 %v3025, %v3050
  %v3081 = vadd.f32 %v3026, %v3050
  %v3082 = vadd.f32 %v3027, %v3050
  %v3083 = vadd.f32 %v3028, %v3050
  %v3084 = vadd.f32 %v3029, %v3050
  %v3085 = vadd.f32 %v3030, %v3050
  %v3086 = vadd.f32 %v3031, %v3050
  %v3087 = vadd.f32 %v3032, %v3050
  %v3088 = vadd.f32 %v3033, %v3050
  %v3089 = vadd.f32 %v3034, %v3050
  %v3090 = vadd.f32 %v3035, %v3050
  %v3091 = vadd.f32 %v3036, %v3050
  %v3092 = vadd.f32 %v3037, %v3050
  %v3093 = vadd.f32 %v3038, %v3050
  %v3094 = vadd.f32 %v3039, %v3050
  %v3095 = vadd.f32 %v3040, %v3050
  %v3096 = vadd.f32 %v3041, %v3050
  %v3097 = vadd.f32 %v3042, %v3050
  %v3098 = vadd.f32 %v3043, %v3050
  %v3099 = vadd.f32 %v3044, %v3050
  %v3100 = vadd.f32 %v3045, %v3050
  %v3101 = vmul.f32 %v795, %v2995
  %v3102 = vmul.f32 %v798, %v2995
  %v3103 = vmul.f32 %v803, %v2995
  %v3104 = vmul.f32 %v806, %v2995
  %v3105 = vmul.f32 %v811, %v2995
  %v3106 = vmul.f32 %v814, %v2995
  %v3107 = vmul.f32 %v819, %v2995
  %v3108 = vmul.f32 %v822, %v2995
  %v3109 = vmul.f32 %v827, %v2995
  %v3110 = vmul.f32 %v830, %v2995
  %v3111 = vmul.f32 %v835, %v2995
  %v3112 = vmul.f32 %v838, %v2995
  %v3113 = vmul.f32 %v843, %v2995
  %v3114 = vmul.f32 %v846, %v2995
  %v3115 = vmul.f32 %v851, %v2995
  %v3116 = vmul.f32 %v854, %v2995
  %v3117 = vmul.f32 %v859, %v2995
  %v3118 = vmul.f32 %v862, %v2995
  %v3119 = vmul.f32 %v867, %v2995
  %v3120 = vmul.f32 %v870, %v2995
  %v3121 = vmul.f32 %v875, %v2995
  %v3122 = vmul.f32 %v878, %v2995
  %v3123 = vmul.f32 %v883, %v2995
  %v3124 = vmul.f32 %v886, %v2995
  %v3125 = vmul.f32 %v891, %v2995
  %v3126 = vmul.f32 %v894, %v2995
  %v3127 = vmul.f32 %v899, %v2995
  %v3128 = vmul.f32 %v902, %v2995
  %v3129 = vmul.f32 %v907, %v2995
  %v3130 = vmul.f32 %v910, %v2995
  %v3131 = vmul.f32 %v915, %v2995
  %v3132 = vmul.f32 %v918, %v2995
  %v3133 = vmul.f32 %v923, %v2995
  %v3134 = vmul.f32 %v926, %v2995
  %v3135 = vmul.f32 %v931, %v2995
  %v3136 = vmul.f32 %v934, %v2995
  %v3137 = vmul.f32 %v939, %v2995
  %v3138 = vmul.f32 %v942, %v2995
  %v3139 = vmul.f32 %v947, %v2995
  %v3140 = vmul.f32 %v950, %v2995
  %v3141 = vmul.f32 %v955, %v2995
  %v3142 = vmul.f32 %v958, %v2995
  %v3143 = vmul.f32 %v963, %v2995
  %v3144 = vmul.f32 %v966, %v2995
  %v3145 = vmul.f32 %v971, %v2995
  %v3146 = vmul.f32 %v974, %v2995
  %v3147 = vmul.f32 %v979, %v2995
  %v3148 = vmul.f32 %v982, %v2995
  %v3149 = vmul.f32 %v987, %v2995
  %v3150 = vadd.f32 %v3101, %v3050
  %v3151 = vadd.f32 %v3102, %v3050
  %v3152 = vadd.f32 %v3103, %v3050
  %v3153 = vadd.f32 %v3104, %v3050
  %v3154 = vadd.f32 %v3105, %v3050
  %v3155 = vadd.f32 %v3106, %v3050
  %v3156 = vadd.f32 %v3107, %v3050
  %v3157 = vadd.f32 %v3108, %v3050
  %v3158 = vadd.f32 %v3109, %v3050
  %v3159 = vadd.f32 %v3110, %v3050
  %v3160 = vadd.f32 %v3111, %v3050
  %v3161 = vadd.f32 %v3112, %v3050
  %v3162 = vadd.f32 %v3113, %v3050
  %v3163 = vadd.f32 %v3114, %v3050
  %v3164 = vadd.f32 %v3115, %v3050
  %v3165 = vadd.f32 %v3116, %v3050
  %v3166 = vadd.f32 %v3117, %v3050
  %v3167 = vadd.f32 %v3118, %v3050
  %v3168 = vadd.f32 %v3119, %v3050
  %v3169 = vadd.f32 %v3120, %v3050
  %v3170 = vadd.f32 %v3121, %v3050
  %v3171 = vadd.f32 %v3122, %v3050
  %v3172 = vadd.f32 %v3123, %v3050
  %v3173 = vadd.f32 %v3124, %v3050
  %v3174 = vadd.f32 %v3125, %v3050
  %v3175 = vadd.f32 %v3126, %v3050
  %v3176 = vadd.f32 %v3127, %v3050
  %v3177 = vadd.f32 %v3128, %v3050
  %v3178 = vadd.f32 %v3129, %v3050
  %v3179 = vadd.f32 %v3130, %v3050
  %v3180 = vadd.f32 %v3131, %v3050
  %v3181 = vadd.f32 %v3132, %v3050
  %v3182 = vadd.f32 %v3133, %v3050
  %v3183 = vadd.f32 %v3134, %v3050
  %v3184 = vadd.f32 %v3135, %v3050
  %v3185 = vadd.f32 %v3136, %v3050
  %v3186 = vadd.f32 %v3137, %v3050
  %v3187 = vadd.f32 %v3138, %v3050
  %v3188 = vadd.f32 %v3139, %v3050
  %v3189 = vadd.f32 %v3140, %v3050
  %v3190 = vadd.f32 %v3141, %v3050
  %v3191 = vadd.f32 %v3142, %v3050
  %v3192 = vadd.f32 %v3143, %v3050
  %v3193 = vadd.f32 %v3144, %v3050
  %v3194 = vadd.f32 %v3145, %v3050
  %v3195 = vadd.f32 %v3146, %v3050
  %v3196 = vadd.f32 %v3147, %v3050
  %v3197 = vadd.f32 %v3148, %v3050
  %v3198 = vadd.f32 %v3149, %v3050
  %v3199 = vmax.f32 %v3052, %v3150
  %v3200 = vmax.f32 %v3053, %v3151
  %v3201 = vmax.f32 %v3054, %v3152
  %v3202 = vmax.f32 %v3055, %v3153
  %v3203 = vmax.f32 %v3056, %v3154
  %v3204 = vmax.f32 %v3057, %v3155
  %v3205 = vmax.f32 %v3058, %v3156
  %v3206 = vmax.f32 %v3059, %v3157
  %v3207 = vmax.f32 %v3060, %v3158
  %v3208 = vmax.f32 %v3061, %v3159
  %v3209 = vmax.f32 %v3062, %v3160
  %v3210 = vmax.f32 %v3063, %v3161
  %v3211 = vmax.f32 %v3064, %v3162
  %v3212 = vmax.f32 %v3065, %v3163
  %v3213 = vmax.f32 %v3066, %v3164
  %v3214 = vmax.f32 %v3067, %v3165
  %v3215 = vmax.f32 %v3068, %v3166
  %v3216 = vmax.f32 %v3069, %v3167
  %v3217 = vmax.f32 %v3070, %v3168
  %v3218 = vmax.f32 %v3071, %v3169
  %v3219 = vmax.f32 %v3072, %v3170
  %v3220 = vmax.f32 %v3073, %v3171
  %v3221 = vmax.f32 %v3074, %v3172
  %v3222 = vmax.f32 %v3075, %v3173
  %v3223 = vmax.f32 %v3076, %v3174
  %v3224 = vmax.f32 %v3077, %v3175
  %v3225 = vmax.f32 %v3078, %v3176
  %v3226 = vmax.f32 %v3079, %v3177
  %v3227 = vmax.f32 %v3080, %v3178
  %v3228 = vmax.f32 %v3081, %v3179
  %v3229 = vmax.f32 %v3082, %v3180
  %v3230 = vmax.f32 %v3083, %v3181
  %v3231 = vmax.f32 %v3084, %v3182
  %v3232 = vmax.f32 %v3085, %v3183
  %v3233 = vmax.f32 %v3086, %v3184
  %v3234 = vmax.f32 %v3087, %v3185
  %v3235 = vmax.f32 %v3088, %v3186
  %v3236 = vmax.f32 %v3089, %v3187
  %v3237 = vmax.f32 %v3090, %v3188
  %v3238 = vmax.f32 %v3091, %v3189
  %v3239 = vmax.f32 %v3092, %v3190
  %v3240 = vmax.f32 %v3093, %v3191
  %v3241 = vmax.f32 %v3094, %v3192
  %v3242 = vmax.f32 %v3095, %v3193
  %v3243 = vmax.f32 %v3096, %v3194
  %v3244 = vmax.f32 %v3097, %v3195
  %v3245 = vmax.f32 %v3098, %v3196
  %v3246 = vmax.f32 %v3099, %v3197
  %v3247 = vmax.f32 %v3100, %v3198
  %v3248 = vmul.f32 %v1275, %v2995
  %v3249 = vmul.f32 %v1278, %v2995
  %v3250 = vmul.f32 %v1283, %v2995
  %v3251 = vmul.f32 %v1286, %v2995
  %v3252 = vmul.f32 %v1291, %v2995
  %v3253 = vmul.f32 %v1294, %v2995
  %v3254 = vmul.f32 %v1299, %v2995
  %v3255 = vmul.f32 %v1302, %v2995
  %v3256 = vmul.f32 %v1307, %v2995
  %v3257 = vmul.f32 %v1310, %v2995
  %v3258 = vmul.f32 %v1315, %v2995
  %v3259 = vmul.f32 %v1318, %v2995
  %v3260 = vmul.f32 %v1323, %v2995
  %v3261 = vmul.f32 %v1326, %v2995
  %v3262 = vmul.f32 %v1331, %v2995
  %v3263 = vmul.f32 %v1334, %v2995
  %v3264 = vmul.f32 %v1339, %v2995
  %v3265 = vmul.f32 %v1342, %v2995
  %v3266 = vmul.f32 %v1347, %v2995
  %v3267 = vmul.f32 %v1350, %v2995
  %v3268 = vmul.f32 %v1355, %v2995
  %v3269 = vmul.f32 %v1358, %v2995
  %v3270 = vmul.f32 %v1363, %v2995
  %v3271 = vmul.f32 %v1366, %v2995
  %v3272 = vmul.f32 %v1371, %v2995
  %v3273 = vmul.f32 %v1374, %v2995
  %v3274 = vmul.f32 %v1379, %v2995
  %v3275 = vmul.f32 %v1382, %v2995
  %v3276 = vmul.f32 %v1387, %v2995
  %v3277 = vmul.f32 %v1390, %v2995
  %v3278 = vmul.f32 %v1395, %v2995
  %v3279 = vmul.f32 %v1398, %v2995
  %v3280 = vmul.f32 %v1403, %v2995
  %v3281 = vmul.f32 %v1406, %v2995
  %v3282 = vmul.f32 %v1411, %v2995
  %v3283 = vmul.f32 %v1414, %v2995
  %v3284 = vmul.f32 %v1419, %v2995
  %v3285 = vmul.f32 %v1422, %v2995
  %v3286 = vmul.f32 %v1427, %v2995
  %v3287 = vmul.f32 %v1430, %v2995
  %v3288 = vmul.f32 %v1435, %v2995
  %v3289 = vmul.f32 %v1438, %v2995
  %v3290 = vmul.f32 %v1443, %v2995
  %v3291 = vmul.f32 %v1446, %v2995
  %v3292 = vmul.f32 %v1451, %v2995
  %v3293 = vmul.f32 %v1454, %v2995
  %v3294 = vmul.f32 %v1459, %v2995
  %v3295 = vmul.f32 %v1462, %v2995
  %v3296 = vmul.f32 %v1467, %v2995
  %v3297 = vadd.f32 %v3248, %v3050
  %v3298 = vadd.f32 %v3249, %v3050
  %v3299 = vadd.f32 %v3250, %v3050
  %v3300 = vadd.f32 %v3251, %v3050
  %v3301 = vadd.f32 %v3252, %v3050
  %v3302 = vadd.f32 %v3253, %v3050
  %v3303 = vadd.f32 %v3254, %v3050
  %v3304 = vadd.f32 %v3255, %v3050
  %v3305 = vadd.f32 %v3256, %v3050
  %v3306 = vadd.f32 %v3257, %v3050
  %v3307 = vadd.f32 %v3258, %v3050
  %v3308 = vadd.f32 %v3259, %v3050
  %v3309 = vadd.f32 %v3260, %v3050
  %v3310 = vadd.f32 %v3261, %v3050
  %v3311 = vadd.f32 %v3262, %v3050
  %v3312 = vadd.f32 %v3263, %v3050
  %v3313 = vadd.f32 %v3264, %v3050
  %v3314 = vadd.f32 %v3265, %v3050
  %v3315 = vadd.f32 %v3266, %v3050
  %v3316 = vadd.f32 %v3267, %v3050
  %v3317 = vadd.f32 %v3268, %v3050
  %v3318 = vadd.f32 %v3269, %v3050
  %v3319 = vadd.f32 %v3270, %v3050
  %v3320 = vadd.f32 %v3271, %v3050
  %v3321 = vadd.f32 %v3272, %v3050
  %v3322 = vadd.f32 %v3273, %v3050
  %v3323 = vadd.f32 %v3274, %v3050
  %v3324 = vadd.f32 %v3275, %v3050
  %v3325 = vadd.f32 %v3276, %v3050
  %v3326 = vadd.f32 %v3277, %v3050
  %v3327 = vadd.f32 %v3278, %v3050
  %v3328 = vadd.f32 %v3279, %v3050
  %v3329 = vadd.f32 %v3280, %v3050
  %v3330 = vadd.f32 %v3281, %v3050
  %v3331 = vadd.f32 %v3282, %v3050
  %v3332 = vadd.f32 %v3283, %v3050
  %v3333 = vadd.f32 %v3284, %v3050
  %v3334 = vadd.f32 %v3285, %v3050
  %v3335 = vadd.f32 %v3286, %v3050
  %v3336 = vadd.f32 %v3287, %v3050
  %v3337 = vadd.f32 %v3288, %v3050
  %v3338 = vadd.f32 %v3289, %v3050
  %v3339 = vadd.f32 %v3290, %v3050
  %v3340 = vadd.f32 %v3291, %v3050
  %v3341 = vadd.f32 %v3292, %v3050
  %v3342 = vadd.f32 %v3293, %v3050
  %v3343 = vadd.f32 %v3294, %v3050
  %v3344 = vadd.f32 %v3295, %v3050
  %v3345 = vadd.f32 %v3296, %v3050
  %v3346 = vmul.f32 %v1755, %v2995
  %v3347 = vmul.f32 %v1758, %v2995
  %v3348 = vmul.f32 %v1763, %v2995
  %v3349 = vmul.f32 %v1766, %v2995
  %v3350 = vmul.f32 %v1771, %v2995
  %v3351 = vmul.f32 %v1774, %v2995
  %v3352 = vmul.f32 %v1779, %v2995
  %v3353 = vmul.f32 %v1782, %v2995
  %v3354 = vmul.f32 %v1787, %v2995
  %v3355 = vmul.f32 %v1790, %v2995
  %v3356 = vmul.f32 %v1795, %v2995
  %v3357 = vmul.f32 %v1798, %v2995
  %v3358 = vmul.f32 %v1803, %v2995
  %v3359 = vmul.f32 %v1806, %v2995
  %v3360 = vmul.f32 %v1811, %v2995
  %v3361 = vmul.f32 %v1814, %v2995
  %v3362 = vmul.f32 %v1819, %v2995
  %v3363 = vmul.f32 %v1822, %v2995
  %v3364 = vmul.f32 %v1827, %v2995
  %v3365 = vmul.f32 %v1830, %v2995
  %v3366 = vmul.f32 %v1835, %v2995
  %v3367 = vmul.f32 %v1838, %v2995
  %v3368 = vmul.f32 %v1843, %v2995
  %v3369 = vmul.f32 %v1846, %v2995
  %v3370 = vmul.f32 %v1851, %v2995
  %v3371 = vmul.f32 %v1854, %v2995
  %v3372 = vmul.f32 %v1859, %v2995
  %v3373 = vmul.f32 %v1862, %v2995
  %v3374 = vmul.f32 %v1867, %v2995
  %v3375 = vmul.f32 %v1870, %v2995
  %v3376 = vmul.f32 %v1875, %v2995
  %v3377 = vmul.f32 %v1878, %v2995
  %v3378 = vmul.f32 %v1883, %v2995
  %v3379 = vmul.f32 %v1886, %v2995
  %v3380 = vmul.f32 %v1891, %v2995
  %v3381 = vmul.f32 %v1894, %v2995
  %v3382 = vmul.f32 %v1899, %v2995
  %v3383 = vmul.f32 %v1902, %v2995
  %v3384 = vmul.f32 %v1907, %v2995
  %v3385 = vmul.f32 %v1910, %v2995
  %v3386 = vmul.f32 %v1915, %v2995
  %v3387 = vmul.f32 %v1918, %v2995
  %v3388 = vmul.f32 %v1923, %v2995
  %v3389 = vmul.f32 %v1926, %v2995
  %v3390 = vmul.f32 %v1931, %v2995
  %v3391 = vmul.f32 %v1934, %v2995
  %v3392 = vmul.f32 %v1939, %v2995
  %v3393 = vmul.f32 %v1942, %v2995
  %v3394 = vmul.f32 %v1947, %v2995
  %v3395 = vadd.f32 %v3346, %v3050
  %v3396 = vadd.f32 %v3347, %v3050
  %v3397 = vadd.f32 %v3348, %v3050
  %v3398 = vadd.f32 %v3349, %v3050
  %v3399 = vadd.f32 %v3350, %v3050
  %v3400 = vadd.f32 %v3351, %v3050
  %v3401 = vadd.f32 %v3352, %v3050
  %v3402 = vadd.f32 %v3353, %v3050
  %v3403 = vadd.f32 %v3354, %v3050
  %v3404 = vadd.f32 %v3355, %v3050
  %v3405 = vadd.f32 %v3356, %v3050
  %v3406 = vadd.f32 %v3357, %v3050
  %v3407 = vadd.f32 %v3358, %v3050
  %v3408 = vadd.f32 %v3359, %v3050
  %v3409 = vadd.f32 %v3360, %v3050
  %v3410 = vadd.f32 %v3361, %v3050
  %v3411 = vadd.f32 %v3362, %v3050
  %v3412 = vadd.f32 %v3363, %v3050
  %v3413 = vadd.f32 %v3364, %v3050
  %v3414 = vadd.f32 %v3365, %v3050
  %v3415 = vadd.f32 %v3366, %v3050
  %v3416 = vadd.f32 %v3367, %v3050
  %v3417 = vadd.f32 %v3368, %v3050
  %v3418 = vadd.f32 %v3369, %v3050
  %v3419 = vadd.f32 %v3370, %v3050
  %v3420 = vadd.f32 %v3371, %v3050
  %v3421 = vadd.f32 %v3372, %v3050
  %v3422 = vadd.f32 %v3373, %v3050
  %v3423 = vadd.f32 %v3374, %v3050
  %v3424 = vadd.f32 %v3375, %v3050
  %v3425 = vadd.f32 %v3376, %v3050
  %v3426 = vadd.f32 %v3377, %v3050
  %v3427 = vadd.f32 %v3378, %v3050
  %v3428 = vadd.f32 %v3379, %v3050
  %v3429 = vadd.f32 %v3380, %v3050
  %v3430 = vadd.f32 %v3381, %v3050
  %v3431 = vadd.f32 %v3382, %v3050
  %v3432 = vadd.f32 %v3383, %v3050
  %v3433 = vadd.f32 %v3384, %v3050
  %v3434 = vadd.f32 %v3385, %v3050
  %v3435 = vadd.f32 %v3386, %v3050
  %v3436 = vadd.f32 %v3387, %v3050
  %v3437 = vadd.f32 %v3388, %v3050
  %v3438 = vadd.f32 %v3389, %v3050
  %v3439 = vadd.f32 %v3390, %v3050
  %v3440 = vadd.f32 %v3391, %v3050
  %v3441 = vadd.f32 %v3392, %v3050
  %v3442 = vadd.f32 %v3393, %v3050
  %v3443 = vadd.f32 %v3394, %v3050
  %v3444 = vmax.f32 %v3297, %v3395
  %v3445 = vmax.f32 %v3298, %v3396
  %v3446 = vmax.f32 %v3299, %v3397
  %v3447 = vmax.f32 %v3300, %v3398
  %v3448 = vmax.f32 %v3301, %v3399
  %v3449 = vmax.f32 %v3302, %v3400
  %v3450 = vmax.f32 %v3303, %v3401
  %v3451 = vmax.f32 %v3304, %v3402
  %v3452 = vmax.f32 %v3305, %v3403
  %v3453 = vmax.f32 %v3306, %v3404
  %v3454 = vmax.f32 %v3307, %v3405
  %v3455 = vmax.f32 %v3308, %v3406
  %v3456 = vmax.f32 %v3309, %v3407
  %v3457 = vmax.f32 %v3310, %v3408
  %v3458 = vmax.f32 %v3311, %v3409
  %v3459 = vmax.f32 %v3312, %v3410
  %v3460 = vmax.f32 %v3313, %v3411
  %v3461 = vmax.f32 %v3314, %v3412
  %v3462 = vmax.f32 %v3315, %v3413
  %v3463 = vmax.f32 %v3316, %v3414
  %v3464 = vmax.f32 %v3317, %v3415
  %v3465 = vmax.f32 %v3318, %v3416
  %v3466 = vmax.f32 %v3319, %v3417
  %v3467 = vmax.f32 %v3320, %v3418
  %v3468 = vmax.f32 %v3321, %v3419
  %v3469 = vmax.f32 %v3322, %v3420
  %v3470 = vmax.f32 %v3323, %v3421
  %v3471 = vmax.f32 %v3324, %v3422
  %v3472 = vmax.f32 %v3325, %v3423
  %v3473 = vmax.f32 %v3326, %v3424
  %v3474 = vmax.f32 %v3327, %v3425
  %v3475 = vmax.f32 %v3328, %v3426
  %v3476 = vmax.f32 %v3329, %v3427
  %v3477 = vmax.f32 %v3330, %v3428
  %v3478 = vmax.f32 %v3331, %v3429
  %v3479 = vmax.f32 %v3332, %v3430
  %v3480 = vmax.f32 %v3333, %v3431
  %v3481 = vmax.f32 %v3334, %v3432
  %v3482 = vmax.f32 %v3335, %v3433
  %v3483 = vmax.f32 %v3336, %v3434
  %v3484 = vmax.f32 %v3337, %v3435
  %v3485 = vmax.f32 %v3338, %v3436
  %v3486 = vmax.f32 %v3339, %v3437
  %v3487 = vmax.f32 %v3340, %v3438
  %v3488 = vmax.f32 %v3341, %v3439
  %v3489 = vmax.f32 %v3342, %v3440
  %v3490 = vmax.f32 %v3343, %v3441
  %v3491 = vmax.f32 %v3344, %v3442
  %v3492 = vmax.f32 %v3345, %v3443
  %v3493 = vmax.f32 %v3199, %v3444
  %v3494 = vmax.f32 %v3200, %v3445
  %v3495 = vmax.f32 %v3201, %v3446
  %v3496 = vmax.f32 %v3202, %v3447
  %v3497 = vmax.f32 %v3203, %v3448
  %v3498 = vmax.f32 %v3204, %v3449
  %v3499 = vmax.f32 %v3205, %v3450
  %v3500 = vmax.f32 %v3206, %v3451
  %v3501 = vmax.f32 %v3207, %v3452
  %v3502 = vmax.f32 %v3208, %v3453
  %v3503 = vmax.f32 %v3209, %v3454
  %v3504 = vmax.f32 %v3210, %v3455
  %v3505 = vmax.f32 %v3211, %v3456
  %v3506 = vmax.f32 %v3212, %v3457
  %v3507 = vmax.f32 %v3213, %v3458
  %v3508 = vmax.f32 %v3214, %v3459
  %v3509 = vmax.f32 %v3215, %v3460
  %v3510 = vmax.f32 %v3216, %v3461
  %v3511 = vmax.f32 %v3217, %v3462
  %v3512 = vmax.f32 %v3218, %v3463
  %v3513 = vmax.f32 %v3219, %v3464
  %v3514 = vmax.f32 %v3220, %v3465
  %v3515 = vmax.f32 %v3221, %v3466
  %v3516 = vmax.f32 %v3222, %v3467
  %v3517 = vmax.f32 %v3223, %v3468
  %v3518 = vmax.f32 %v3224, %v3469
  %v3519 = vmax.f32 %v3225, %v3470
  %v3520 = vmax.f32 %v3226, %v3471
  %v3521 = vmax.f32 %v3227, %v3472
  %v3522 = vmax.f32 %v3228, %v3473
  %v3523 = vmax.f32 %v3229, %v3474
  %v3524 = vmax.f32 %v3230, %v3475
  %v3525 = vmax.f32 %v3231, %v3476
  %v3526 = vmax.f32 %v3232, %v3477
  %v3527 = vmax.f32 %v3233, %v3478
  %v3528 = vmax.f32 %v3234, %v3479
  %v3529 = vmax.f32 %v3235, %v3480
  %v3530 = vmax.f32 %v3236, %v3481
  %v3531 = vmax.f32 %v3237, %v3482
  %v3532 = vmax.f32 %v3238, %v3483
  %v3533 = vmax.f32 %v3239, %v3484
  %v3534 = vmax.f32 %v3240, %v3485
  %v3535 = vmax.f32 %v3241, %v3486
  %v3536 = vmax.f32 %v3242, %v3487
  %v3537 = vmax.f32 %v3243, %v3488
  %v3538 = vmax.f32 %v3244, %v3489
  %v3539 = vmax.f32 %v3245, %v3490
  %v3540 = vmax.f32 %v3246, %v3491
  %v3541 = vmax.f32 %v3247, %v3492
  %vm3542 = vcmp.gt.f32.partialorder %v3493, 0.0
  %vm3543 = vcmp.gt.f32.partialorder %v3494, 0.0
  %vm3544 = vcmp.gt.f32.partialorder %v3495, 0.0
  %vm3545 = vcmp.gt.f32.partialorder %v3496, 0.0
  %vm3546 = vcmp.gt.f32.partialorder %v3497, 0.0
  %vm3547 = vcmp.gt.f32.partialorder %v3498, 0.0
  %vm3548 = vcmp.gt.f32.partialorder %v3499, 0.0
  %vm3549 = vcmp.gt.f32.partialorder %v3500, 0.0
  %vm3550 = vcmp.gt.f32.partialorder %v3501, 0.0
  %vm3551 = vcmp.gt.f32.partialorder %v3502, 0.0
  %vm3552 = vcmp.gt.f32.partialorder %v3503, 0.0
  %vm3553 = vcmp.gt.f32.partialorder %v3504, 0.0
  %vm3554 = vcmp.gt.f32.partialorder %v3505, 0.0
  %vm3555 = vcmp.gt.f32.partialorder %v3506, 0.0
  %vm3556 = vcmp.gt.f32.partialorder %v3507, 0.0
  %vm3557 = vcmp.gt.f32.partialorder %v3508, 0.0
  %vm3558 = vcmp.gt.f32.partialorder %v3509, 0.0
  %vm3559 = vcmp.gt.f32.partialorder %v3510, 0.0
  %vm3560 = vcmp.gt.f32.partialorder %v3511, 0.0
  %vm3561 = vcmp.gt.f32.partialorder %v3512, 0.0
  %vm3562 = vcmp.gt.f32.partialorder %v3513, 0.0
  %vm3563 = vcmp.gt.f32.partialorder %v3514, 0.0
  %vm3564 = vcmp.gt.f32.partialorder %v3515, 0.0
  %vm3565 = vcmp.gt.f32.partialorder %v3516, 0.0
  %vm3566 = vcmp.gt.f32.partialorder %v3517, 0.0
  %vm3567 = vcmp.gt.f32.partialorder %v3518, 0.0
  %vm3568 = vcmp.gt.f32.partialorder %v3519, 0.0
  %vm3569 = vcmp.gt.f32.partialorder %v3520, 0.0
  %vm3570 = vcmp.gt.f32.partialorder %v3521, 0.0
  %vm3571 = vcmp.gt.f32.partialorder %v3522, 0.0
  %vm3572 = vcmp.gt.f32.partialorder %v3523, 0.0
  %vm3573 = vcmp.gt.f32.partialorder %v3524, 0.0
  %vm3574 = vcmp.gt.f32.partialorder %v3525, 0.0
  %vm3575 = vcmp.gt.f32.partialorder %v3526, 0.0
  %vm3576 = vcmp.gt.f32.partialorder %v3527, 0.0
  %vm3577 = vcmp.gt.f32.partialorder %v3528, 0.0
  %vm3578 = vcmp.gt.f32.partialorder %v3529, 0.0
  %vm3579 = vcmp.gt.f32.partialorder %v3530, 0.0
  %vm3580 = vcmp.gt.f32.partialorder %v3531, 0.0
  %vm3581 = vcmp.gt.f32.partialorder %v3532, 0.0
  %vm3582 = vcmp.gt.f32.partialorder %v3533, 0.0
  %vm3583 = vcmp.gt.f32.partialorder %v3534, 0.0
  %vm3584 = vcmp.gt.f32.partialorder %v3535, 0.0
  %vm3585 = vcmp.gt.f32.partialorder %v3536, 0.0
  %vm3586 = vcmp.gt.f32.partialorder %v3537, 0.0
  %vm3587 = vcmp.gt.f32.partialorder %v3538, 0.0
  %vm3588 = vcmp.gt.f32.partialorder %v3539, 0.0
  %vm3589 = vcmp.gt.f32.partialorder %v3540, 0.0
  %vm3590 = vcmp.gt.f32.partialorder %v3541, 0.0
  %v3591 = vmul.f32 %v3493, 0.01
  %v3592 = vmul.f32 %v3494, 0.01
  %v3593 = vmul.f32 %v3495, 0.01
  %v3594 = vmul.f32 %v3496, 0.01
  %v3595 = vmul.f32 %v3497, 0.01
  %v3596 = vmul.f32 %v3498, 0.01
  %v3597 = vmul.f32 %v3499, 0.01
  %v3598 = vmul.f32 %v3500, 0.01
  %v3599 = vmul.f32 %v3501, 0.01
  %v3600 = vmul.f32 %v3502, 0.01
  %v3601 = vmul.f32 %v3503, 0.01
  %v3602 = vmul.f32 %v3504, 0.01
  %v3603 = vmul.f32 %v3505, 0.01
  %v3604 = vmul.f32 %v3506, 0.01
  %v3605 = vmul.f32 %v3507, 0.01
  %v3606 = vmul.f32 %v3508, 0.01
  %v3607 = vmul.f32 %v3509, 0.01
  %v3608 = vmul.f32 %v3510, 0.01
  %v3609 = vmul.f32 %v3511, 0.01
  %v3610 = vmul.f32 %v3512, 0.01
  %v3611 = vmul.f32 %v3513, 0.01
  %v3612 = vmul.f32 %v3514, 0.01
  %v3613 = vmul.f32 %v3515, 0.01
  %v3614 = vmul.f32 %v3516, 0.01
  %v3615 = vmul.f32 %v3517, 0.01
  %v3616 = vmul.f32 %v3518, 0.01
  %v3617 = vmul.f32 %v3519, 0.01
  %v3618 = vmul.f32 %v3520, 0.01
  %v3619 = vmul.f32 %v3521, 0.01
  %v3620 = vmul.f32 %v3522, 0.01
  %v3621 = vmul.f32 %v3523, 0.01
  %v3622 = vmul.f32 %v3524, 0.01
  %v3623 = vmul.f32 %v3525, 0.01
  %v3624 = vmul.f32 %v3526, 0.01
  %v3625 = vmul.f32 %v3527, 0.01
  %v3626 = vmul.f32 %v3528, 0.01
  %v3627 = vmul.f32 %v3529, 0.01
  %v3628 = vmul.f32 %v3530, 0.01
  %v3629 = vmul.f32 %v3531, 0.01
  %v3630 = vmul.f32 %v3532, 0.01
  %v3631 = vmul.f32 %v3533, 0.01
  %v3632 = vmul.f32 %v3534, 0.01
  %v3633 = vmul.f32 %v3535, 0.01
  %v3634 = vmul.f32 %v3536, 0.01
  %v3635 = vmul.f32 %v3537, 0.01
  %v3636 = vmul.f32 %v3538, 0.01
  %v3637 = vmul.f32 %v3539, 0.01
  %v3638 = vmul.f32 %v3540, 0.01
  %v3639 = vmul.f32 %v3541, 0.01
  %v3640 = vsel %vm3542, %v3493, %v3591
  %v3641 = vsel %vm3543, %v3494, %v3592
  %v3642 = vsel %vm3544, %v3495, %v3593
  %v3643 = vsel %vm3545, %v3496, %v3594
  %v3644 = vsel %vm3546, %v3497, %v3595
  %v3645 = vsel %vm3547, %v3498, %v3596
  %v3646 = vsel %vm3548, %v3499, %v3597
  %v3647 = vsel %vm3549, %v3500, %v3598
  %v3648 = vsel %vm3550, %v3501, %v3599
  %v3649 = vsel %vm3551, %v3502, %v3600
  %v3650 = vsel %vm3552, %v3503, %v3601
  %v3651 = vsel %vm3553, %v3504, %v3602
  %v3652 = vsel %vm3554, %v3505, %v3603
  %v3653 = vsel %vm3555, %v3506, %v3604
  %v3654 = vsel %vm3556, %v3507, %v3605
  %v3655 = vsel %vm3557, %v3508, %v3606
  %v3656 = vsel %vm3558, %v3509, %v3607
  %v3657 = vsel %vm3559, %v3510, %v3608
  %v3658 = vsel %vm3560, %v3511, %v3609
  %v3659 = vsel %vm3561, %v3512, %v3610
  %v3660 = vsel %vm3562, %v3513, %v3611
  %v3661 = vsel %vm3563, %v3514, %v3612
  %v3662 = vsel %vm3564, %v3515, %v3613
  %v3663 = vsel %vm3565, %v3516, %v3614
  %v3664 = vsel %vm3566, %v3517, %v3615
  %v3665 = vsel %vm3567, %v3518, %v3616
  %v3666 = vsel %vm3568, %v3519, %v3617
  %v3667 = vsel %vm3569, %v3520, %v3618
  %v3668 = vsel %vm3570, %v3521, %v3619
  %v3669 = vsel %vm3571, %v3522, %v3620
  %v3670 = vsel %vm3572, %v3523, %v3621
  %v3671 = vsel %vm3573, %v3524, %v3622
  %v3672 = vsel %vm3574, %v3525, %v3623
  %v3673 = vsel %vm3575, %v3526, %v3624
  %v3674 = vsel %vm3576, %v3527, %v3625
  %v3675 = vsel %vm3577, %v3528, %v3626
  %v3676 = vsel %vm3578, %v3529, %v3627
  %v3677 = vsel %vm3579, %v3530, %v3628
  %v3678 = vsel %vm3580, %v3531, %v3629
  %v3679 = vsel %vm3581, %v3532, %v3630
  %v3680 = vsel %vm3582, %v3533, %v3631
  %v3681 = vsel %vm3583, %v3534, %v3632
  %v3682 = vsel %vm3584, %v3535, %v3633
  %v3683 = vsel %vm3585, %v3536, %v3634
  %v3684 = vsel %vm3586, %v3537, %v3635
  %v3685 = vsel %vm3587, %v3538, %v3636
  %v3686 = vsel %vm3588, %v3539, %v3637
  %v3687 = vsel %vm3589, %v3540, %v3638
  %v3688 = vsel %vm3590, %v3541, %v3639
  %v3689 = vpack.c.bf16 %v3641, %v3640
  %v3690 = vpack.c.bf16 %v3643, %v3642
  %v3691 = vpack.c.bf16 %v3645, %v3644
  %v3692 = vpack.c.bf16 %v3647, %v3646
  %v3693 = vpack.c.bf16 %v3649, %v3648
  %v3694 = vpack.c.bf16 %v3651, %v3650
  %v3695 = vpack.c.bf16 %v3653, %v3652
  %v3696 = vpack.c.bf16 %v3655, %v3654
  %v3697 = vpack.c.bf16 %v3657, %v3656
  %v3698 = vpack.c.bf16 %v3659, %v3658
  %v3699 = vpack.c.bf16 %v3661, %v3660
  %v3700 = vpack.c.bf16 %v3663, %v3662
  %v3701 = vpack.c.bf16 %v3665, %v3664
  %v3702 = vpack.c.bf16 %v3667, %v3666
  %v3703 = vpack.c.bf16 %v3669, %v3668
  %v3704 = vpack.c.bf16 %v3671, %v3670
  %v3705 = vpack.c.bf16 %v3673, %v3672
  %v3706 = vpack.c.bf16 %v3675, %v3674
  %v3707 = vpack.c.bf16 %v3677, %v3676
  %v3708 = vpack.c.bf16 %v3679, %v3678
  %v3709 = vpack.c.bf16 %v3681, %v3680
  %v3710 = vpack.c.bf16 %v3683, %v3682
  %v3711 = vpack.c.bf16 %v3685, %v3684
  %v3712 = vpack.c.bf16 %v3687, %v3686
  %v3713 = vpack.c.bf16 %v3688, %v3688
  %v3739 = vunpack.c.l.b16 %v3689
  %v3740 = vunpack.c.h.b16 %v3689
  %v3741 = vunpack.c.l.b16 %v3690
  %v3742 = vunpack.c.h.b16 %v3690
  %v3743 = vunpack.c.l.b16 %v3691
  %v3744 = vunpack.c.h.b16 %v3691
  %v3745 = vunpack.c.l.b16 %v3692
  %v3746 = vunpack.c.h.b16 %v3692
  %v3747 = vunpack.c.l.b16 %v3693
  %v3748 = vunpack.c.h.b16 %v3693
  %v3749 = vunpack.c.l.b16 %v3694
  %v3750 = vunpack.c.h.b16 %v3694
  %v3751 = vunpack.c.l.b16 %v3695
  %v3752 = vunpack.c.h.b16 %v3695
  %v3753 = vunpack.c.l.b16 %v3696
  %v3754 = vunpack.c.h.b16 %v3696
  %v3755 = vunpack.c.l.b16 %v3697
  %v3756 = vunpack.c.h.b16 %v3697
  %v3757 = vunpack.c.l.b16 %v3698
  %v3758 = vunpack.c.h.b16 %v3698
  %v3759 = vunpack.c.l.b16 %v3699
  %v3760 = vunpack.c.h.b16 %v3699
  %v3761 = vunpack.c.l.b16 %v3700
  %v3762 = vunpack.c.h.b16 %v3700
  %v3763 = vunpack.c.l.b16 %v3701
  %v3764 = vunpack.c.h.b16 %v3701
  %v3765 = vunpack.c.l.b16 %v3702
  %v3766 = vunpack.c.h.b16 %v3702
  %v3767 = vunpack.c.l.b16 %v3703
  %v3768 = vunpack.c.h.b16 %v3703
  %v3769 = vunpack.c.l.b16 %v3704
  %v3770 = vunpack.c.h.b16 %v3704
  %v3771 = vunpack.c.l.b16 %v3705
  %v3772 = vunpack.c.h.b16 %v3705
  %v3773 = vunpack.c.l.b16 %v3706
  %v3774 = vunpack.c.h.b16 %v3706
  %v3775 = vunpack.c.l.b16 %v3707
  %v3776 = vunpack.c.h.b16 %v3707
  %v3777 = vunpack.c.l.b16 %v3708
  %v3778 = vunpack.c.h.b16 %v3708
  %v3779 = vunpack.c.l.b16 %v3709
  %v3780 = vunpack.c.h.b16 %v3709
  %v3781 = vunpack.c.l.b16 %v3710
  %v3782 = vunpack.c.h.b16 %v3710
  %v3783 = vunpack.c.l.b16 %v3711
  %v3784 = vunpack.c.h.b16 %v3711
  %v3785 = vunpack.c.l.b16 %v3712
  %v3786 = vunpack.c.h.b16 %v3712
  %v3787 = vunpack.c.l.b16 %v3713
  %v3788 = vpack.c.b16 %v3739, %v3739
  %v3789 = vpack.c.b16 %v3740, %v3740
  %v3790 = vpack.c.b16 %v3741, %v3741
  %v3791 = vpack.c.b16 %v3742, %v3742
  %v3792 = vpack.c.b16 %v3743, %v3743
  %v3793 = vpack.c.b16 %v3744, %v3744
  %v3794 = vpack.c.b16 %v3745, %v3745
  %v3795 = vpack.c.b16 %v3746, %v3746
  %v3796 = vpack.c.b16 %v3747, %v3747
  %v3797 = vpack.c.b16 %v3748, %v3748
  %v3798 = vpack.c.b16 %v3749, %v3749
  %v3799 = vpack.c.b16 %v3750, %v3750
  %v3800 = vpack.c.b16 %v3751, %v3751
  %v3801 = vpack.c.b16 %v3752, %v3752
  %v3802 = vpack.c.b16 %v3753, %v3753
  %v3803 = vpack.c.b16 %v3754, %v3754
  %v3804 = vpack.c.b16 %v3755, %v3755
  %v3805 = vpack.c.b16 %v3756, %v3756
  %v3806 = vpack.c.b16 %v3757, %v3757
  %v3807 = vpack.c.b16 %v3758, %v3758
  %v3808 = vpack.c.b16 %v3759, %v3759
  %v3809 = vpack.c.b16 %v3760, %v3760
  %v3810 = vpack.c.b16 %v3761, %v3761
  %v3811 = vpack.c.b16 %v3762, %v3762
  %v3812 = vpack.c.b16 %v3763, %v3763
  %v3813 = vpack.c.b16 %v3764, %v3764
  %v3814 = vpack.c.b16 %v3765, %v3765
  %v3815 = vpack.c.b16 %v3766, %v3766
  %v3816 = vpack.c.b16 %v3767, %v3767
  %v3817 = vpack.c.b16 %v3768, %v3768
  %v3818 = vpack.c.b16 %v3769, %v3769
  %v3819 = vpack.c.b16 %v3770, %v3770
  %v3820 = vpack.c.b16 %v3771, %v3771
  %v3821 = vpack.c.b16 %v3772, %v3772
  %v3822 = vpack.c.b16 %v3773, %v3773
  %v3823 = vpack.c.b16 %v3774, %v3774
  %v3824 = vpack.c.b16 %v3775, %v3775
  %v3825 = vpack.c.b16 %v3776, %v3776
  %v3826 = vpack.c.b16 %v3777, %v3777
  %v3827 = vpack.c.b16 %v3778, %v3778
  %v3828 = vpack.c.b16 %v3779, %v3779
  %v3829 = vpack.c.b16 %v3780, %v3780
  %v3830 = vpack.c.b16 %v3781, %v3781
  %v3831 = vpack.c.b16 %v3782, %v3782
  %v3832 = vpack.c.b16 %v3783, %v3783
  %v3833 = vpack.c.b16 %v3784, %v3784
  %v3834 = vpack.c.b16 %v3785, %v3785
  %v3835 = vpack.c.b16 %v3786, %v3786
  %v3836 = vpack.c.b16 %v3787, %v3787
  %vm3886 = vcmask 257024
  %3887 = vst.msk [vmem:[%s4] sm:$0xf] %vm3886, %v3788
  %3888 = vst.msk [vmem:[%s4 + $0x4] sm:$0xf] %vm3886, %v3789
  %3889 = vst.msk [vmem:[%s4 + $0x8] sm:$0xf] %vm3886, %v3790
  %3890 = vst.msk [vmem:[%s4 + $0xc] sm:$0xf] %vm3886, %v3791
  %3891 = vst.msk [vmem:[%s4 + $0x10] sm:$0xf] %vm3886, %v3792
  %3892 = vst.msk [vmem:[%s4 + $0x14] sm:$0xf] %vm3886, %v3793
  %3893 = vst.msk [vmem:[%s4 + $0x18] sm:$0xf] %vm3886, %v3794
  %3894 = vst.msk [vmem:[%s4 + $0x1c] sm:$0xf] %vm3886, %v3795
  %3895 = vst.msk [vmem:[%s4 + $0x20] sm:$0xf] %vm3886, %v3796
  %3896 = vst.msk [vmem:[%s4 + $0x24] sm:$0xf] %vm3886, %v3797
  %3897 = vst.msk [vmem:[%s4 + $0x28] sm:$0xf] %vm3886, %v3798
  %3898 = vst.msk [vmem:[%s4 + $0x2c] sm:$0xf] %vm3886, %v3799
  %3899 = vst.msk [vmem:[%s4 + $0x30] sm:$0xf] %vm3886, %v3800
  %3900 = vst.msk [vmem:[%s4 + $0x34] sm:$0xf] %vm3886, %v3801
  %3901 = vst.msk [vmem:[%s4 + $0x38] sm:$0xf] %vm3886, %v3802
  %3902 = vst.msk [vmem:[%s4 + $0x3c] sm:$0xf] %vm3886, %v3803
  %3903 = vst.msk [vmem:[%s4 + $0x40] sm:$0xf] %vm3886, %v3804
  %3904 = vst.msk [vmem:[%s4 + $0x44] sm:$0xf] %vm3886, %v3805
  %3905 = vst.msk [vmem:[%s4 + $0x48] sm:$0xf] %vm3886, %v3806
  %3906 = vst.msk [vmem:[%s4 + $0x4c] sm:$0xf] %vm3886, %v3807
  %3907 = vst.msk [vmem:[%s4 + $0x50] sm:$0xf] %vm3886, %v3808
  %3908 = vst.msk [vmem:[%s4 + $0x54] sm:$0xf] %vm3886, %v3809
  %3909 = vst.msk [vmem:[%s4 + $0x58] sm:$0xf] %vm3886, %v3810
  %3910 = vst.msk [vmem:[%s4 + $0x5c] sm:$0xf] %vm3886, %v3811
  %3911 = vst.msk [vmem:[%s4 + $0x60] sm:$0xf] %vm3886, %v3812
  %3912 = vst.msk [vmem:[%s4 + $0x64] sm:$0xf] %vm3886, %v3813
  %3913 = vst.msk [vmem:[%s4 + $0x68] sm:$0xf] %vm3886, %v3814
  %3914 = vst.msk [vmem:[%s4 + $0x6c] sm:$0xf] %vm3886, %v3815
  %3915 = vst.msk [vmem:[%s4 + $0x70] sm:$0xf] %vm3886, %v3816
  %3916 = vst.msk [vmem:[%s4 + $0x74] sm:$0xf] %vm3886, %v3817
  %3917 = vst.msk [vmem:[%s4 + $0x78] sm:$0xf] %vm3886, %v3818
  %3918 = vst.msk [vmem:[%s4 + $0x7c] sm:$0xf] %vm3886, %v3819
  %3919 = vst.msk [vmem:[%s4 + $0x80] sm:$0xf] %vm3886, %v3820
  %3920 = vst.msk [vmem:[%s4 + $0x84] sm:$0xf] %vm3886, %v3821
  %3921 = vst.msk [vmem:[%s4 + $0x88] sm:$0xf] %vm3886, %v3822
  %3922 = vst.msk [vmem:[%s4 + $0x8c] sm:$0xf] %vm3886, %v3823
  %3923 = vst.msk [vmem:[%s4 + $0x90] sm:$0xf] %vm3886, %v3824
  %3924 = vst.msk [vmem:[%s4 + $0x94] sm:$0xf] %vm3886, %v3825
  %3925 = vst.msk [vmem:[%s4 + $0x98] sm:$0xf] %vm3886, %v3826
  %3926 = vst.msk [vmem:[%s4 + $0x9c] sm:$0xf] %vm3886, %v3827
  %3927 = vst.msk [vmem:[%s4 + $0xa0] sm:$0xf] %vm3886, %v3828
  %3928 = vst.msk [vmem:[%s4 + $0xa4] sm:$0xf] %vm3886, %v3829
  %3929 = vst.msk [vmem:[%s4 + $0xa8] sm:$0xf] %vm3886, %v3830
  %3930 = vst.msk [vmem:[%s4 + $0xac] sm:$0xf] %vm3886, %v3831
  %3931 = vst.msk [vmem:[%s4 + $0xb0] sm:$0xf] %vm3886, %v3832
  %3932 = vst.msk [vmem:[%s4 + $0xb4] sm:$0xf] %vm3886, %v3833
  %3933 = vst.msk [vmem:[%s4 + $0xb8] sm:$0xf] %vm3886, %v3834
  %3934 = vst.msk [vmem:[%s4 + $0xbc] sm:$0xf] %vm3886, %v3835
  %3935 = vst.msk [vmem:[%s4 + $0xc0] sm:$0xf] %vm3886, %v3836
  // Predicated region
  $region18: #{model_forward.3} parent=0 // pred_check
    _
  $region19: #{model_forward.3} parent=0 // pred_check_branch
    %3937 = sbr.rel (0) target = $region21
  $region20: #{model_forward.3} parent=0 // pred_region
    _
  $region21: #{model_forward.3} parent=0 // pred_fallthru
    _
  // Predicated region
  $region22: #{model_forward.3} parent=0 // pred_check
    _
  $region23: #{model_forward.3} parent=0 // pred_check_branch
    %3939 = sbr.rel (0) target = $region25
  $region24: #{model_forward.3} parent=0 // pred_region
    _
  $region25: #{model_forward.3} parent=0 // pred_fallthru
    _

// kernel: model_forward.4
$region0: #{model_forward.4}
  #allocation0 [shape = 'u32[]', space=smem, size = 0x4, offset = 0x4, fixed_abs, tag = 'smem constant byte address 0x4 - core index']
  #allocation1 [shape = 'u32[144,128]{1,0:T(1,128)}', space=vmem, size = 0x12000, scoped, tag = 'internal scratch']
  %s0 = inlined_call_operand.vmem [shape: bf16[4,98,288], index: 0, kind: input, shape index: {}]
  %s1 = inlined_call_operand.vmem [shape: bf16[288,16], index: 1, kind: input, shape index: {}]
  %s2 = inlined_call_operand.vmem [shape: f32[1,16], index: 2, kind: input, shape index: {}]
  %s3 = inlined_call_operand.vmem [shape: f32[1,16], index: 3, kind: input, shape index: {}]
  %s4 = inlined_call_operand.vmem [shape: bf16[98,16], index: 4, kind: output, shape index: {}]
  %s5 = sld [smem:[#allocation0]]
  $region26: #{model_forward.4} parent=0
    _
  %s7 = ssub.s32 1, %s5
  %s8 = scalar_select 0, %s7, %s5
  // Predicated region
  $region2: #{model_forward.4} parent=0 // pred_check
    _
  $region3: #{model_forward.4} parent=0 // pred_check_branch
    %10 = sbr.rel (0) target = $region5
  $region4: #{model_forward.4} parent=0 // pred_region
    _
  $region5: #{model_forward.4} parent=0 // pred_fallthru
    _
  // Predicated region
  $region6: #{model_forward.4} parent=0 // pred_check
    _
  $region7: #{model_forward.4} parent=0 // pred_check_branch
    %12 = sbr.rel (0) target = $region9
  $region8: #{model_forward.4} parent=0 // pred_region
    _
  $region9: #{model_forward.4} parent=0 // pred_fallthru
    _
  // Predicated region
  $region10: #{model_forward.4} parent=0 // pred_check
    _
  $region11: #{model_forward.4} parent=0 // pred_check_branch
    %14 = sbr.rel (0) target = $region13
  $region12: #{model_forward.4} parent=0 // pred_region
    _
  $region13: #{model_forward.4} parent=0 // pred_fallthru
    _
  // Predicated region
  $region14: #{model_forward.4} parent=0 // pred_check
    _
  $region15: #{model_forward.4} parent=0 // pred_check_branch
    %16 = sbr.rel (0) target = $region17
  $region16: #{model_forward.4} parent=0 // pred_region
    _
  $region17: #{model_forward.4} parent=0 // pred_fallthru
    _
  %v18 = vld [vmem:[%s0] sm:$0xff]
  %v19 = vld [vmem:[%s0 + $0x8] sm:$0xf]
  %v20 = vld [vmem:[%s0 + $0xc] sm:$0xff]
  %v21 = vld [vmem:[%s0 + $0x14] sm:$0xf]
  %v22 = vld [vmem:[%s0 + $0x18] sm:$0xff]
  %v23 = vld [vmem:[%s0 + $0x20] sm:$0xf]
  %v24 = vld [vmem:[%s0 + $0x24] sm:$0xff]
  %v25 = vld [vmem:[%s0 + $0x2c] sm:$0xf]
  %v26 = vld [vmem:[%s0 + $0x30] sm:$0xff]
  %v27 = vld [vmem:[%s0 + $0x38] sm:$0xf]
  %v28 = vld [vmem:[%s0 + $0x3c] sm:$0xff]
  %v29 = vld [vmem:[%s0 + $0x44] sm:$0xf]
  %v30 = vld [vmem:[%s0 + $0x48] sm:$0xff]
  %v31 = vld [vmem:[%s0 + $0x50] sm:$0xf]
  %v32 = vld [vmem:[%s0 + $0x54] sm:$0xff]
  %v33 = vld [vmem:[%s0 + $0x5c] sm:$0xf]
  %v34 = vld [vmem:[%s0 + $0x60] sm:$0xff]
  %v35 = vld [vmem:[%s0 + $0x68] sm:$0xf]
  %v36 = vld [vmem:[%s0 + $0x6c] sm:$0xff]
  %v37 = vld [vmem:[%s0 + $0x74] sm:$0xf]
  %v38 = vld [vmem:[%s0 + $0x78] sm:$0xff]
  %v39 = vld [vmem:[%s0 + $0x80] sm:$0xf]
  %v40 = vld [vmem:[%s0 + $0x84] sm:$0xff]
  %v41 = vld [vmem:[%s0 + $0x8c] sm:$0xf]
  %v42 = vld [vmem:[%s0 + $0x90] sm:$0x11]
  %v43 = vld [vmem:[%s0 + $0x98] sm:$0x1]
  %v44 = vld [vmem:[%s1] sm:$0xf]
  %v45 = vld [vmem:[%s1 + $0x4] sm:$0xf]
  %v46 = vld [vmem:[%s1 + $0x8] sm:$0xf]
  %v47 = vld [vmem:[%s1 + $0xc] sm:$0xf]
  %v48 = vld [vmem:[%s1 + $0x10] sm:$0xf]
  %v49 = vld [vmem:[%s1 + $0x14] sm:$0xf]
  %v50 = vld [vmem:[%s1 + $0x18] sm:$0xf]
  %v51 = vld [vmem:[%s1 + $0x1c] sm:$0xf]
  %v52 = vld [vmem:[%s1 + $0x20] sm:$0xf]
  %v53 = vld [vmem:[%s1 + $0x24] sm:$0xf]
  %v54 = vld [vmem:[%s1 + $0x28] sm:$0xf]
  %v55 = vld [vmem:[%s1 + $0x2c] sm:$0xf]
  %v56 = vld [vmem:[%s1 + $0x30] sm:$0xf]
  %v57 = vld [vmem:[%s1 + $0x34] sm:$0xf]
  %v58 = vld [vmem:[%s1 + $0x38] sm:$0xf]
  %v59 = vld [vmem:[%s1 + $0x3c] sm:$0xf]
  %v60 = vld [vmem:[%s1 + $0x40] sm:$0xf]
  %v61 = vld [vmem:[%s1 + $0x44] sm:$0xf]
  %v62 = vld [vmem:[%s1 + $0x48] sm:$0xf]
  %v63 = vld [vmem:[%s1 + $0x4c] sm:$0xf]
  %v64 = vld [vmem:[%s1 + $0x50] sm:$0xf]
  %v65 = vld [vmem:[%s1 + $0x54] sm:$0xf]
  %v66 = vld [vmem:[%s1 + $0x58] sm:$0xf]
  %v67 = vld [vmem:[%s1 + $0x5c] sm:$0xf]
  %v68 = vld [vmem:[%s1 + $0x60] sm:$0xf]
  %v69 = vld [vmem:[%s1 + $0x64] sm:$0xf]
  %v70 = vld [vmem:[%s1 + $0x68] sm:$0xf]
  %v71 = vld [vmem:[%s1 + $0x6c] sm:$0xf]
  %v72 = vld [vmem:[%s1 + $0x70] sm:$0xf]
  %v73 = vld [vmem:[%s1 + $0x74] sm:$0xf]
  %v74 = vld [vmem:[%s1 + $0x78] sm:$0xf]
  %v75 = vld [vmem:[%s1 + $0x7c] sm:$0xf]
  %v76 = vld [vmem:[%s1 + $0x80] sm:$0xf]
  %v77 = vld [vmem:[%s1 + $0x84] sm:$0xf]
  %v78 = vld [vmem:[%s1 + $0x88] sm:$0xf]
  %v79 = vld [vmem:[%s1 + $0x8c] sm:$0xf]
  %v106 = vunpack.c.l.b16 %v18
  %v107 = vunpack.c.h.b16 %v18
  %v108 = vunpack.c.l.b16 %v19
  %v109 = vunpack.c.l.b16 %v20
  %v110 = vunpack.c.h.b16 %v20
  %v111 = vunpack.c.l.b16 %v21
  %v112 = vunpack.c.l.b16 %v22
  %v113 = vunpack.c.h.b16 %v22
  %v114 = vunpack.c.l.b16 %v23
  %v115 = vunpack.c.l.b16 %v24
  %v116 = vunpack.c.h.b16 %v24
  %v117 = vunpack.c.l.b16 %v25
  %v118 = vunpack.c.l.b16 %v26
  %v119 = vunpack.c.h.b16 %v26
  %v120 = vunpack.c.l.b16 %v27
  %v121 = vunpack.c.l.b16 %v28
  %v122 = vunpack.c.h.b16 %v28
  %v123 = vunpack.c.l.b16 %v29
  %v124 = vunpack.c.l.b16 %v30
  %v125 = vunpack.c.h.b16 %v30
  %v126 = vunpack.c.l.b16 %v31
  %v127 = vunpack.c.l.b16 %v32
  %v128 = vunpack.c.h.b16 %v32
  %v129 = vunpack.c.l.b16 %v33
  %v130 = vunpack.c.l.b16 %v34
  %v131 = vunpack.c.h.b16 %v34
  %v132 = vunpack.c.l.b16 %v35
  %v133 = vunpack.c.l.b16 %v36
  %v134 = vunpack.c.h.b16 %v36
  %v135 = vunpack.c.l.b16 %v37
  %v136 = vunpack.c.l.b16 %v38
  %v137 = vunpack.c.h.b16 %v38
  %v138 = vunpack.c.l.b16 %v39
  %v139 = vunpack.c.l.b16 %v40
  %v140 = vunpack.c.h.b16 %v40
  %v141 = vunpack.c.l.b16 %v41
  %v142 = vunpack.c.l.b16 %v42
  %v143 = vunpack.c.h.b16 %v42
  %v144 = vunpack.c.l.b16 %v43
  %v145 = vpack.c.b16 %v109, %v106
  %v146 = vpack.c.b16 %v110, %v107
  %v147 = vpack.c.b16 %v111, %v108
  %v148 = vpack.c.b16 %v115, %v112
  %v149 = vpack.c.b16 %v116, %v113
  %v150 = vpack.c.b16 %v117, %v114
  %v151 = vpack.c.b16 %v121, %v118
  %v152 = vpack.c.b16 %v122, %v119
  %v153 = vpack.c.b16 %v123, %v120
  %v154 = vpack.c.b16 %v127, %v124
  %v155 = vpack.c.b16 %v128, %v125
  %v156 = vpack.c.b16 %v129, %v126
  %v157 = vpack.c.b16 %v133, %v130
  %v158 = vpack.c.b16 %v134, %v131
  %v159 = vpack.c.b16 %v135, %v132
  %v160 = vpack.c.b16 %v139, %v136
  %v161 = vpack.c.b16 %v140, %v137
  %v162 = vpack.c.b16 %v141, %v138
  %v163 = vpack.c.b16 %v142, %v142
  %v164 = vpack.c.b16 %v143, %v143
  %v165 = vpack.c.b16 %v144, %v144
  %v216 = vunpack.c.l.b16 %v44
  %v217 = vunpack.c.l.b16 %v45
  %v218 = vunpack.c.l.b16 %v46
  %v219 = vunpack.c.l.b16 %v47
  %v220 = vunpack.c.l.b16 %v48
  %v221 = vunpack.c.l.b16 %v49
  %v222 = vunpack.c.l.b16 %v50
  %v223 = vunpack.c.l.b16 %v51
  %v224 = vunpack.c.l.b16 %v52
  %v225 = vunpack.c.l.b16 %v53
  %v226 = vunpack.c.l.b16 %v54
  %v227 = vunpack.c.l.b16 %v55
  %v228 = vunpack.c.l.b16 %v56
  %v229 = vunpack.c.l.b16 %v57
  %v230 = vunpack.c.l.b16 %v58
  %v231 = vunpack.c.l.b16 %v59
  %v232 = vunpack.c.l.b16 %v60
  %v233 = vunpack.c.l.b16 %v61
  %v234 = vunpack.c.l.b16 %v62
  %v235 = vunpack.c.l.b16 %v63
  %v236 = vunpack.c.l.b16 %v64
  %v237 = vunpack.c.l.b16 %v65
  %v238 = vunpack.c.l.b16 %v66
  %v239 = vunpack.c.l.b16 %v67
  %v240 = vunpack.c.l.b16 %v68
  %v241 = vunpack.c.l.b16 %v69
  %v242 = vunpack.c.l.b16 %v70
  %v243 = vunpack.c.l.b16 %v71
  %v244 = vunpack.c.l.b16 %v72
  %v245 = vunpack.c.l.b16 %v73
  %v246 = vunpack.c.l.b16 %v74
  %v247 = vunpack.c.l.b16 %v75
  %v248 = vunpack.c.l.b16 %v76
  %v249 = vunpack.c.l.b16 %v77
  %v250 = vunpack.c.l.b16 %v78
  %v251 = vunpack.c.l.b16 %v79
  %v252 = vpack.c.b16 %v217, %v216
  %v253 = vpack.c.b16 %v219, %v218
  %v254 = vpack.c.b16 %v221, %v220
  %v255 = vpack.c.b16 %v223, %v222
  %v256 = vpack.c.b16 %v225, %v224
  %v257 = vpack.c.b16 %v227, %v226
  %v258 = vpack.c.b16 %v229, %v228
  %v259 = vpack.c.b16 %v231, %v230
  %v260 = vpack.c.b16 %v233, %v232
  %v261 = vpack.c.b16 %v235, %v234
  %v262 = vpack.c.b16 %v237, %v236
  %v263 = vpack.c.b16 %v239, %v238
  %v264 = vpack.c.b16 %v241, %v240
  %v265 = vpack.c.b16 %v243, %v242
  %v266 = vpack.c.b16 %v245, %v244
  %v267 = vpack.c.b16 %v247, %v246
  %v268 = vpack.c.b16 %v249, %v248
  %v269 = vpack.c.b16 %v251, %v250
  %vm288 = vcmask 261120
  %v290 = vsel %vm288, %v147, 0
  %v293 = vsel %vm288, %v150, 0
  %v296 = vsel %vm288, %v153, 0
  %v299 = vsel %vm288, %v156, 0
  %v302 = vsel %vm288, %v159, 0
  %v305 = vsel %vm288, %v162, 0
  %v308 = vsel %vm288, %v165, 0
  %310 = vmatprep.subr.bf16.mxu0 0
  %311 = vmatpush1.bf16.msra.mxu0 %v259
  %312 = vmatprep.subr.bf16.mxu0 0
  %313 = vmatpush1.bf16.msra.mxu0 %v258
  %314 = vmatprep.subr.bf16.mxu0 0
  %315 = vmatpush1.bf16.msra.mxu0 %v257
  %316 = vmatprep.subr.bf16.mxu0 0
  %317 = vmatpush1.bf16.msra.mxu0 %v256
  %318 = vmatprep.subr.bf16.mxu0 0
  %319 = vmatpush1.bf16.msra.mxu0 %v255
  %320 = vmatprep.subr.bf16.mxu0 0
  %321 = vmatpush1.bf16.msra.mxu0 %v254
  %322 = vmatprep.subr.bf16.mxu0 0
  %323 = vmatpush1.bf16.msra.mxu0 %v253
  %324 = vmatprep.subr.bf16.mxu0 0
  %325 = vmatpush1.bf16.msra.mxu0 %v252
  %326 = vmatprep.subr.bf16.mxu0 0
  %327 = vmatpush2.bf16.msra.mxu0 %v267
  %328 = vmatprep.subr.bf16.mxu0 0
  %329 = vmatpush2.bf16.msra.mxu0 %v266
  %330 = vmatprep.subr.bf16.mxu0 0
  %331 = vmatpush2.bf16.msra.mxu0 %v265
  %332 = vmatprep.subr.bf16.mxu0 0
  %333 = vmatpush2.bf16.msra.mxu0 %v264
  %334 = vmatprep.subr.bf16.mxu0 0
  %335 = vmatpush2.bf16.msra.mxu0 %v263
  %336 = vmatprep.subr.bf16.mxu0 0
  %337 = vmatpush2.bf16.msra.mxu0 %v262
  %338 = vmatprep.subr.bf16.mxu0 0
  %339 = vmatpush2.bf16.msra.mxu0 %v261
  %340 = vmatprep.subr.bf16.mxu0 0
  %341 = vmatpush2.bf16.msra.mxu0 %v260
  %342 = vmatprep.mubr.bf16.mxu0 %v146
  %343 = vmatmul.mubr.bf16.gmra.mxu0 %v145
  %v344 = vpop.f32.mrf.mxu0
  %v345 = vadd.f32 0.0, %v344
  %v346 = vpop.f32.mrf.mxu0
  %v347 = vpop.f32.mrf.mxu0
  %v348 = vadd.f32 0.0, %v347
  %v349 = vpop.f32.mrf.mxu0
  %350 = vmatprep.mubr.bf16.mxu0 %v149
  %351 = vmatmul.mubr.bf16.gmra.mxu0 %v148
  %v352 = vpop.f32.mrf.mxu0
  %v353 = vadd.f32 0.0, %v352
  %v354 = vpop.f32.mrf.mxu0
  %v355 = vpop.f32.mrf.mxu0
  %v356 = vadd.f32 0.0, %v355
  %v357 = vpop.f32.mrf.mxu0
  %358 = vmatprep.mubr.bf16.mxu0 %v152
  %359 = vmatmul.mubr.bf16.gmra.mxu0 %v151
  %v360 = vpop.f32.mrf.mxu0
  %v361 = vadd.f32 0.0, %v360
  %v362 = vpop.f32.mrf.mxu0
  %v363 = vpop.f32.mrf.mxu0
  %v364 = vadd.f32 0.0, %v363
  %v365 = vpop.f32.mrf.mxu0
  %366 = vmatprep.mubr.bf16.mxu0 %v155
  %367 = vmatmul.mubr.bf16.gmra.mxu0 %v154
  %v368 = vpop.f32.mrf.mxu0
  %v369 = vadd.f32 0.0, %v368
  %v370 = vpop.f32.mrf.mxu0
  %v371 = vpop.f32.mrf.mxu0
  %v372 = vadd.f32 0.0, %v371
  %v373 = vpop.f32.mrf.mxu0
  %374 = vmatprep.mubr.bf16.mxu0 %v158
  %375 = vmatmul.mubr.bf16.gmra.mxu0 %v157
  %v376 = vpop.f32.mrf.mxu0
  %v377 = vadd.f32 0.0, %v376
  %v378 = vpop.f32.mrf.mxu0
  %v379 = vpop.f32.mrf.mxu0
  %v380 = vadd.f32 0.0, %v379
  %v381 = vpop.f32.mrf.mxu0
  %382 = vmatprep.mubr.bf16.mxu0 %v161
  %383 = vmatmul.mubr.bf16.gmra.mxu0 %v160
  %v384 = vpop.f32.mrf.mxu0
  %v385 = vadd.f32 0.0, %v384
  %v386 = vpop.f32.mrf.mxu0
  %v387 = vpop.f32.mrf.mxu0
  %v388 = vadd.f32 0.0, %v387
  %v389 = vpop.f32.mrf.mxu0
  %390 = vmatprep.mubr.bf16.mxu0 %v164
  %391 = vmatmul.mubr.bf16.gmra.mxu0 %v163
  %v392 = vpop.f32.mrf.mxu0
  %v393 = vadd.f32 0.0, %v392
  %v394 = vpop.f32.mrf.mxu0
  %v395 = vpop.f32.mrf.mxu0
  %v396 = vpop.f32.mrf.mxu0
  %397 = vdwg.mxu0
  %398 = vmatprep.subr.bf16.mxu0 0
  %399 = vmatpush1.bf16.msra.mxu0 0
  %400 = vmatprep.subr.bf16.mxu0 0
  %401 = vmatpush1.bf16.msra.mxu0 0
  %402 = vmatprep.subr.bf16.mxu0 0
  %403 = vmatpush1.bf16.msra.mxu0 0
  %404 = vmatprep.subr.bf16.mxu0 0
  %405 = vmatpush1.bf16.msra.mxu0 0
  %406 = vmatprep.subr.bf16.mxu0 0
  %407 = vmatpush1.bf16.msra.mxu0 0
  %408 = vmatprep.subr.bf16.mxu0 0
  %409 = vmatpush1.bf16.msra.mxu0 0
  %410 = vmatprep.subr.bf16.mxu0 0
  %411 = vmatpush1.bf16.msra.mxu0 %v269
  %412 = vmatprep.subr.bf16.mxu0 0
  %413 = vmatpush1.bf16.msra.mxu0 %v268
  %414 = vmatprep.subr.bf16.mxu0 0
  %415 = vmatpush2.bf16.msra.mxu0 0
  %416 = vmatprep.subr.bf16.mxu0 0
  %417 = vmatpush2.bf16.msra.mxu0 0
  %418 = vmatprep.subr.bf16.mxu0 0
  %419 = vmatpush2.bf16.msra.mxu0 0
  %420 = vmatprep.subr.bf16.mxu0 0
  %421 = vmatpush2.bf16.msra.mxu0 0
  %422 = vmatprep.subr.bf16.mxu0 0
  %423 = vmatpush2.bf16.msra.mxu0 0
  %424 = vmatprep.subr.bf16.mxu0 0
  %425 = vmatpush2.bf16.msra.mxu0 0
  %426 = vmatprep.subr.bf16.mxu0 0
  %427 = vmatpush2.bf16.msra.mxu0 0
  %428 = vmatprep.subr.bf16.mxu0 0
  %429 = vmatpush2.bf16.msra.mxu0 0
  %430 = vmatprep.mubr.bf16.mxu0 0
  %431 = vmatmul.mubr.bf16.gmra.mxu0 %v290
  %v432 = vpop.f32.mrf.mxu0
  %v433 = vadd.f32 %v345, %v432
  %v434 = vpop.f32.mrf.mxu0
  %v435 = vpop.f32.mrf.mxu0
  %v436 = vadd.f32 %v348, %v435
  %v437 = vpop.f32.mrf.mxu0
  %438 = vmatprep.mubr.bf16.mxu0 0
  %439 = vmatmul.mubr.bf16.gmra.mxu0 %v293
  %v440 = vpop.f32.mrf.mxu0
  %v441 = vadd.f32 %v353, %v440
  %v442 = vpop.f32.mrf.mxu0
  %v443 = vpop.f32.mrf.mxu0
  %v444 = vadd.f32 %v356, %v443
  %v445 = vpop.f32.mrf.mxu0
  %446 = vmatprep.mubr.bf16.mxu0 0
  %447 = vmatmul.mubr.bf16.gmra.mxu0 %v296
  %v448 = vpop.f32.mrf.mxu0
  %v449 = vadd.f32 %v361, %v448
  %v450 = vpop.f32.mrf.mxu0
  %v451 = vpop.f32.mrf.mxu0
  %v452 = vadd.f32 %v364, %v451
  %v453 = vpop.f32.mrf.mxu0
  %454 = vmatprep.mubr.bf16.mxu0 0
  %455 = vmatmul.mubr.bf16.gmra.mxu0 %v299
  %v456 = vpop.f32.mrf.mxu0
  %v457 = vadd.f32 %v369, %v456
  %v458 = vpop.f32.mrf.mxu0
  %v459 = vpop.f32.mrf.mxu0
  %v460 = vadd.f32 %v372, %v459
  %v461 = vpop.f32.mrf.mxu0
  %462 = vmatprep.mubr.bf16.mxu0 0
  %463 = vmatmul.mubr.bf16.gmra.mxu0 %v302
  %v464 = vpop.f32.mrf.mxu0
  %v465 = vadd.f32 %v377, %v464
  %v466 = vpop.f32.mrf.mxu0
  %v467 = vpop.f32.mrf.mxu0
  %v468 = vadd.f32 %v380, %v467
  %v469 = vpop.f32.mrf.mxu0
  %470 = vmatprep.mubr.bf16.mxu0 0
  %471 = vmatmul.mubr.bf16.gmra.mxu0 %v305
  %v472 = vpop.f32.mrf.mxu0
  %v473 = vadd.f32 %v385, %v472
  %v474 = vpop.f32.mrf.mxu0
  %v475 = vpop.f32.mrf.mxu0
  %v476 = vadd.f32 %v388, %v475
  %v477 = vpop.f32.mrf.mxu0
  %478 = vmatprep.mubr.bf16.mxu0 0
  %479 = vmatmul.mubr.bf16.gmra.mxu0 %v308
  %v480 = vpop.f32.mrf.mxu0
  %v481 = vadd.f32 %v393, %v480
  %v482 = vpop.f32.mrf.mxu0
  %v483 = vpop.f32.mrf.mxu0
  %v484 = vpop.f32.mrf.mxu0
  %485 = vdwg.mxu0
  %s486 = scalar_lea.vmem %s0, 156
  %v487 = vld [vmem:[%s486] sm:$0xff]
  %v488 = vld [vmem:[%s486 + $0x8] sm:$0xf]
  %v489 = vld [vmem:[%s486 + $0xc] sm:$0xff]
  %v490 = vld [vmem:[%s486 + $0x14] sm:$0xf]
  %v491 = vld [vmem:[%s486 + $0x18] sm:$0xff]
  %v492 = vld [vmem:[%s486 + $0x20] sm:$0xf]
  %v493 = vld [vmem:[%s486 + $0x24] sm:$0xff]
  %v494 = vld [vmem:[%s486 + $0x2c] sm:$0xf]
  %v495 = vld [vmem:[%s486 + $0x30] sm:$0xff]
  %v496 = vld [vmem:[%s486 + $0x38] sm:$0xf]
  %v497 = vld [vmem:[%s486 + $0x3c] sm:$0xff]
  %v498 = vld [vmem:[%s486 + $0x44] sm:$0xf]
  %v499 = vld [vmem:[%s486 + $0x48] sm:$0xff]
  %v500 = vld [vmem:[%s486 + $0x50] sm:$0xf]
  %v501 = vld [vmem:[%s486 + $0x54] sm:$0xff]
  %v502 = vld [vmem:[%s486 + $0x5c] sm:$0xf]
  %v503 = vld [vmem:[%s486 + $0x60] sm:$0xff]
  %v504 = vld [vmem:[%s486 + $0x68] sm:$0xf]
  %v505 = vld [vmem:[%s486 + $0x6c] sm:$0xff]
  %v506 = vld [vmem:[%s486 + $0x74] sm:$0xf]
  %v507 = vld [vmem:[%s486 + $0x78] sm:$0xff]
  %v508 = vld [vmem:[%s486 + $0x80] sm:$0xf]
  %v509 = vld [vmem:[%s486 + $0x84] sm:$0xff]
  %v510 = vld [vmem:[%s486 + $0x8c] sm:$0xf]
  %v511 = vld [vmem:[%s486 + $0x90] sm:$0x11]
  %v512 = vld [vmem:[%s486 + $0x98] sm:$0x1]
  %v539 = vunpack.c.l.b16 %v487
  %v540 = vunpack.c.h.b16 %v487
  %v541 = vunpack.c.l.b16 %v488
  %v542 = vunpack.c.l.b16 %v489
  %v543 = vunpack.c.h.b16 %v489
  %v544 = vunpack.c.l.b16 %v490
  %v545 = vunpack.c.l.b16 %v491
  %v546 = vunpack.c.h.b16 %v491
  %v547 = vunpack.c.l.b16 %v492
  %v548 = vunpack.c.l.b16 %v493
  %v549 = vunpack.c.h.b16 %v493
  %v550 = vunpack.c.l.b16 %v494
  %v551 = vunpack.c.l.b16 %v495
  %v552 = vunpack.c.h.b16 %v495
  %v553 = vunpack.c.l.b16 %v496
  %v554 = vunpack.c.l.b16 %v497
  %v555 = vunpack.c.h.b16 %v497
  %v556 = vunpack.c.l.b16 %v498
  %v557 = vunpack.c.l.b16 %v499
  %v558 = vunpack.c.h.b16 %v499
  %v559 = vunpack.c.l.b16 %v500
  %v560 = vunpack.c.l.b16 %v501
  %v561 = vunpack.c.h.b16 %v501
  %v562 = vunpack.c.l.b16 %v502
  %v563 = vunpack.c.l.b16 %v503
  %v564 = vunpack.c.h.b16 %v503
  %v565 = vunpack.c.l.b16 %v504
  %v566 = vunpack.c.l.b16 %v505
  %v567 = vunpack.c.h.b16 %v505
  %v568 = vunpack.c.l.b16 %v506
  %v569 = vunpack.c.l.b16 %v507
  %v570 = vunpack.c.h.b16 %v507
  %v571 = vunpack.c.l.b16 %v508
  %v572 = vunpack.c.l.b16 %v509
  %v573 = vunpack.c.h.b16 %v509
  %v574 = vunpack.c.l.b16 %v510
  %v575 = vunpack.c.l.b16 %v511
  %v576 = vunpack.c.h.b16 %v511
  %v577 = vunpack.c.l.b16 %v512
  %v578 = vpack.c.b16 %v542, %v539
  %v579 = vpack.c.b16 %v543, %v540
  %v580 = vpack.c.b16 %v544, %v541
  %v581 = vpack.c.b16 %v548, %v545
  %v582 = vpack.c.b16 %v549, %v546
  %v583 = vpack.c.b16 %v550, %v547
  %v584 = vpack.c.b16 %v554, %v551
  %v585 = vpack.c.b16 %v555, %v552
  %v586 = vpack.c.b16 %v556, %v553
  %v587 = vpack.c.b16 %v560, %v557
  %v588 = vpack.c.b16 %v561, %v558
  %v589 = vpack.c.b16 %v562, %v559
  %v590 = vpack.c.b16 %v566, %v563
  %v591 = vpack.c.b16 %v567, %v564
  %v592 = vpack.c.b16 %v568, %v565
  %v593 = vpack.c.b16 %v572, %v569
  %v594 = vpack.c.b16 %v573, %v570
  %v595 = vpack.c.b16 %v574, %v571
  %v596 = vpack.c.b16 %v575, %v575
  %v597 = vpack.c.b16 %v576, %v576
  %v598 = vpack.c.b16 %v577, %v577
  %v614 = vsel %vm288, %v580, 0
  %v617 = vsel %vm288, %v583, 0
  %v620 = vsel %vm288, %v586, 0
  %v623 = vsel %vm288, %v589, 0
  %v626 = vsel %vm288, %v592, 0
  %v629 = vsel %vm288, %v595, 0
  %v632 = vsel %vm288, %v598, 0
  %634 = vmatprep.subr.bf16.mxu0 0
  %635 = vmatpush1.bf16.msra.mxu0 %v259
  %636 = vmatprep.subr.bf16.mxu0 0
  %637 = vmatpush1.bf16.msra.mxu0 %v258
  %638 = vmatprep.subr.bf16.mxu0 0
  %639 = vmatpush1.bf16.msra.mxu0 %v257
  %640 = vmatprep.subr.bf16.mxu0 0
  %641 = vmatpush1.bf16.msra.mxu0 %v256
  %642 = vmatprep.subr.bf16.mxu0 0
  %643 = vmatpush1.bf16.msra.mxu0 %v255
  %644 = vmatprep.subr.bf16.mxu0 0
  %645 = vmatpush1.bf16.msra.mxu0 %v254
  %646 = vmatprep.subr.bf16.mxu0 0
  %647 = vmatpush1.bf16.msra.mxu0 %v253
  %648 = vmatprep.subr.bf16.mxu0 0
  %649 = vmatpush1.bf16.msra.mxu0 %v252
  %650 = vmatprep.subr.bf16.mxu0 0
  %651 = vmatpush2.bf16.msra.mxu0 %v267
  %652 = vmatprep.subr.bf16.mxu0 0
  %653 = vmatpush2.bf16.msra.mxu0 %v266
  %654 = vmatprep.subr.bf16.mxu0 0
  %655 = vmatpush2.bf16.msra.mxu0 %v265
  %656 = vmatprep.subr.bf16.mxu0 0
  %657 = vmatpush2.bf16.msra.mxu0 %v264
  %658 = vmatprep.subr.bf16.mxu0 0
  %659 = vmatpush2.bf16.msra.mxu0 %v263
  %660 = vmatprep.subr.bf16.mxu0 0
  %661 = vmatpush2.bf16.msra.mxu0 %v262
  %662 = vmatprep.subr.bf16.mxu0 0
  %663 = vmatpush2.bf16.msra.mxu0 %v261
  %664 = vmatprep.subr.bf16.mxu0 0
  %665 = vmatpush2.bf16.msra.mxu0 %v260
  %666 = vmatprep.mubr.bf16.mxu0 %v579
  %667 = vmatmul.mubr.bf16.gmra.mxu0 %v578
  %v668 = vpop.f32.mrf.mxu0
  %v669 = vadd.f32 0.0, %v668
  %v670 = vpop.f32.mrf.mxu0
  %v671 = vpop.f32.mrf.mxu0
  %v672 = vadd.f32 0.0, %v671
  %v673 = vpop.f32.mrf.mxu0
  %674 = vmatprep.mubr.bf16.mxu0 %v582
  %675 = vmatmul.mubr.bf16.gmra.mxu0 %v581
  %v676 = vpop.f32.mrf.mxu0
  %v677 = vadd.f32 0.0, %v676
  %v678 = vpop.f32.mrf.mxu0
  %v679 = vpop.f32.mrf.mxu0
  %v680 = vadd.f32 0.0, %v679
  %v681 = vpop.f32.mrf.mxu0
  %682 = vmatprep.mubr.bf16.mxu0 %v585
  %683 = vmatmul.mubr.bf16.gmra.mxu0 %v584
  %v684 = vpop.f32.mrf.mxu0
  %v685 = vadd.f32 0.0, %v684
  %v686 = vpop.f32.mrf.mxu0
  %v687 = vpop.f32.mrf.mxu0
  %v688 = vadd.f32 0.0, %v687
  %v689 = vpop.f32.mrf.mxu0
  %690 = vmatprep.mubr.bf16.mxu0 %v588
  %691 = vmatmul.mubr.bf16.gmra.mxu0 %v587
  %v692 = vpop.f32.mrf.mxu0
  %v693 = vadd.f32 0.0, %v692
  %v694 = vpop.f32.mrf.mxu0
  %v695 = vpop.f32.mrf.mxu0
  %v696 = vadd.f32 0.0, %v695
  %v697 = vpop.f32.mrf.mxu0
  %698 = vmatprep.mubr.bf16.mxu0 %v591
  %699 = vmatmul.mubr.bf16.gmra.mxu0 %v590
  %v700 = vpop.f32.mrf.mxu0
  %v701 = vadd.f32 0.0, %v700
  %v702 = vpop.f32.mrf.mxu0
  %v703 = vpop.f32.mrf.mxu0
  %v704 = vadd.f32 0.0, %v703
  %v705 = vpop.f32.mrf.mxu0
  %706 = vmatprep.mubr.bf16.mxu0 %v594
  %707 = vmatmul.mubr.bf16.gmra.mxu0 %v593
  %v708 = vpop.f32.mrf.mxu0
  %v709 = vadd.f32 0.0, %v708
  %v710 = vpop.f32.mrf.mxu0
  %v711 = vpop.f32.mrf.mxu0
  %v712 = vadd.f32 0.0, %v711
  %v713 = vpop.f32.mrf.mxu0
  %714 = vmatprep.mubr.bf16.mxu0 %v597
  %715 = vmatmul.mubr.bf16.gmra.mxu0 %v596
  %v716 = vpop.f32.mrf.mxu0
  %v717 = vadd.f32 0.0, %v716
  %v718 = vpop.f32.mrf.mxu0
  %v719 = vpop.f32.mrf.mxu0
  %v720 = vpop.f32.mrf.mxu0
  %721 = vdwg.mxu0
  %722 = vmatprep.subr.bf16.mxu0 0
  %723 = vmatpush1.bf16.msra.mxu0 0
  %724 = vmatprep.subr.bf16.mxu0 0
  %725 = vmatpush1.bf16.msra.mxu0 0
  %726 = vmatprep.subr.bf16.mxu0 0
  %727 = vmatpush1.bf16.msra.mxu0 0
  %728 = vmatprep.subr.bf16.mxu0 0
  %729 = vmatpush1.bf16.msra.mxu0 0
  %730 = vmatprep.subr.bf16.mxu0 0
  %731 = vmatpush1.bf16.msra.mxu0 0
  %732 = vmatprep.subr.bf16.mxu0 0
  %733 = vmatpush1.bf16.msra.mxu0 0
  %734 = vmatprep.subr.bf16.mxu0 0
  %735 = vmatpush1.bf16.msra.mxu0 %v269
  %736 = vmatprep.subr.bf16.mxu0 0
  %737 = vmatpush1.bf16.msra.mxu0 %v268
  %738 = vmatprep.subr.bf16.mxu0 0
  %739 = vmatpush2.bf16.msra.mxu0 0
  %740 = vmatprep.subr.bf16.mxu0 0
  %741 = vmatpush2.bf16.msra.mxu0 0
  %742 = vmatprep.subr.bf16.mxu0 0
  %743 = vmatpush2.bf16.msra.mxu0 0
  %744 = vmatprep.subr.bf16.mxu0 0
  %745 = vmatpush2.bf16.msra.mxu0 0
  %746 = vmatprep.subr.bf16.mxu0 0
  %747 = vmatpush2.bf16.msra.mxu0 0
  %748 = vmatprep.subr.bf16.mxu0 0
  %749 = vmatpush2.bf16.msra.mxu0 0
  %750 = vmatprep.subr.bf16.mxu0 0
  %751 = vmatpush2.bf16.msra.mxu0 0
  %752 = vmatprep.subr.bf16.mxu0 0
  %753 = vmatpush2.bf16.msra.mxu0 0
  %754 = vmatprep.mubr.bf16.mxu0 0
  %755 = vmatmul.mubr.bf16.gmra.mxu0 %v614
  %v756 = vpop.f32.mrf.mxu0
  %v757 = vadd.f32 %v669, %v756
  %v758 = vpop.f32.mrf.mxu0
  %v759 = vpop.f32.mrf.mxu0
  %v760 = vadd.f32 %v672, %v759
  %v761 = vpop.f32.mrf.mxu0
  %762 = vmatprep.mubr.bf16.mxu0 0
  %763 = vmatmul.mubr.bf16.gmra.mxu0 %v617
  %v764 = vpop.f32.mrf.mxu0
  %v765 = vadd.f32 %v677, %v764
  %v766 = vpop.f32.mrf.mxu0
  %v767 = vpop.f32.mrf.mxu0
  %v768 = vadd.f32 %v680, %v767
  %v769 = vpop.f32.mrf.mxu0
  %770 = vmatprep.mubr.bf16.mxu0 0
  %771 = vmatmul.mubr.bf16.gmra.mxu0 %v620
  %v772 = vpop.f32.mrf.mxu0
  %v773 = vadd.f32 %v685, %v772
  %v774 = vpop.f32.mrf.mxu0
  %v775 = vpop.f32.mrf.mxu0
  %v776 = vadd.f32 %v688, %v775
  %v777 = vpop.f32.mrf.mxu0
  %778 = vmatprep.mubr.bf16.mxu0 0
  %779 = vmatmul.mubr.bf16.gmra.mxu0 %v623
  %v780 = vpop.f32.mrf.mxu0
  %v781 = vadd.f32 %v693, %v780
  %v782 = vpop.f32.mrf.mxu0
  %v783 = vpop.f32.mrf.mxu0
  %v784 = vadd.f32 %v696, %v783
  %v785 = vpop.f32.mrf.mxu0
  %786 = vmatprep.mubr.bf16.mxu0 0
  %787 = vmatmul.mubr.bf16.gmra.mxu0 %v626
  %v788 = vpop.f32.mrf.mxu0
  %v789 = vadd.f32 %v701, %v788
  %v790 = vpop.f32.mrf.mxu0
  %v791 = vpop.f32.mrf.mxu0
  %v792 = vadd.f32 %v704, %v791
  %v793 = vpop.f32.mrf.mxu0
  %794 = vmatprep.mubr.bf16.mxu0 0
  %795 = vmatmul.mubr.bf16.gmra.mxu0 %v629
  %v796 = vpop.f32.mrf.mxu0
  %v797 = vadd.f32 %v709, %v796
  %v798 = vpop.f32.mrf.mxu0
  %v799 = vpop.f32.mrf.mxu0
  %v800 = vadd.f32 %v712, %v799
  %v801 = vpop.f32.mrf.mxu0
  %802 = vmatprep.mubr.bf16.mxu0 0
  %803 = vmatmul.mubr.bf16.gmra.mxu0 %v632
  %v804 = vpop.f32.mrf.mxu0
  %v805 = vadd.f32 %v717, %v804
  %v806 = vpop.f32.mrf.mxu0
  %v807 = vpop.f32.mrf.mxu0
  %v808 = vpop.f32.mrf.mxu0
  %809 = vdwg.mxu0
  %s810 = scalar_lea.vmem %s0, 312
  %v811 = vld [vmem:[%s810] sm:$0xff]
  %v812 = vld [vmem:[%s810 + $0x8] sm:$0xf]
  %v813 = vld [vmem:[%s810 + $0xc] sm:$0xff]
  %v814 = vld [vmem:[%s810 + $0x14] sm:$0xf]
  %v815 = vld [vmem:[%s810 + $0x18] sm:$0xff]
  %v816 = vld [vmem:[%s810 + $0x20] sm:$0xf]
  %v817 = vld [vmem:[%s810 + $0x24] sm:$0xff]
  %v818 = vld [vmem:[%s810 + $0x2c] sm:$0xf]
  %v819 = vld [vmem:[%s810 + $0x30] sm:$0xff]
  %v820 = vld [vmem:[%s810 + $0x38] sm:$0xf]
  %v821 = vld [vmem:[%s810 + $0x3c] sm:$0xff]
  %v822 = vld [vmem:[%s810 + $0x44] sm:$0xf]
  %v823 = vld [vmem:[%s810 + $0x48] sm:$0xff]
  %v824 = vld [vmem:[%s810 + $0x50] sm:$0xf]
  %v825 = vld [vmem:[%s810 + $0x54] sm:$0xff]
  %v826 = vld [vmem:[%s810 + $0x5c] sm:$0xf]
  %v827 = vld [vmem:[%s810 + $0x60] sm:$0xff]
  %v828 = vld [vmem:[%s810 + $0x68] sm:$0xf]
  %v829 = vld [vmem:[%s810 + $0x6c] sm:$0xff]
  %v830 = vld [vmem:[%s810 + $0x74] sm:$0xf]
  %v831 = vld [vmem:[%s810 + $0x78] sm:$0xff]
  %v832 = vld [vmem:[%s810 + $0x80] sm:$0xf]
  %v833 = vld [vmem:[%s810 + $0x84] sm:$0xff]
  %v834 = vld [vmem:[%s810 + $0x8c] sm:$0xf]
  %v835 = vld [vmem:[%s810 + $0x90] sm:$0x11]
  %v836 = vld [vmem:[%s810 + $0x98] sm:$0x1]
  %v863 = vunpack.c.l.b16 %v811
  %v864 = vunpack.c.h.b16 %v811
  %v865 = vunpack.c.l.b16 %v812
  %v866 = vunpack.c.l.b16 %v813
  %v867 = vunpack.c.h.b16 %v813
  %v868 = vunpack.c.l.b16 %v814
  %v869 = vunpack.c.l.b16 %v815
  %v870 = vunpack.c.h.b16 %v815
  %v871 = vunpack.c.l.b16 %v816
  %v872 = vunpack.c.l.b16 %v817
  %v873 = vunpack.c.h.b16 %v817
  %v874 = vunpack.c.l.b16 %v818
  %v875 = vunpack.c.l.b16 %v819
  %v876 = vunpack.c.h.b16 %v819
  %v877 = vunpack.c.l.b16 %v820
  %v878 = vunpack.c.l.b16 %v821
  %v879 = vunpack.c.h.b16 %v821
  %v880 = vunpack.c.l.b16 %v822
  %v881 = vunpack.c.l.b16 %v823
  %v882 = vunpack.c.h.b16 %v823
  %v883 = vunpack.c.l.b16 %v824
  %v884 = vunpack.c.l.b16 %v825
  %v885 = vunpack.c.h.b16 %v825
  %v886 = vunpack.c.l.b16 %v826
  %v887 = vunpack.c.l.b16 %v827
  %v888 = vunpack.c.h.b16 %v827
  %v889 = vunpack.c.l.b16 %v828
  %v890 = vunpack.c.l.b16 %v829
  %v891 = vunpack.c.h.b16 %v829
  %v892 = vunpack.c.l.b16 %v830
  %v893 = vunpack.c.l.b16 %v831
  %v894 = vunpack.c.h.b16 %v831
  %v895 = vunpack.c.l.b16 %v832
  %v896 = vunpack.c.l.b16 %v833
  %v897 = vunpack.c.h.b16 %v833
  %v898 = vunpack.c.l.b16 %v834
  %v899 = vunpack.c.l.b16 %v835
  %v900 = vunpack.c.h.b16 %v835
  %v901 = vunpack.c.l.b16 %v836
  %v902 = vpack.c.b16 %v866, %v863
  %v903 = vpack.c.b16 %v867, %v864
  %v904 = vpack.c.b16 %v868, %v865
  %v905 = vpack.c.b16 %v872, %v869
  %v906 = vpack.c.b16 %v873, %v870
  %v907 = vpack.c.b16 %v874, %v871
  %v908 = vpack.c.b16 %v878, %v875
  %v909 = vpack.c.b16 %v879, %v876
  %v910 = vpack.c.b16 %v880, %v877
  %v911 = vpack.c.b16 %v884, %v881
  %v912 = vpack.c.b16 %v885, %v882
  %v913 = vpack.c.b16 %v886, %v883
  %v914 = vpack.c.b16 %v890, %v887
  %v915 = vpack.c.b16 %v891, %v888
  %v916 = vpack.c.b16 %v892, %v889
  %v917 = vpack.c.b16 %v896, %v893
  %v918 = vpack.c.b16 %v897, %v894
  %v919 = vpack.c.b16 %v898, %v895
  %v920 = vpack.c.b16 %v899, %v899
  %v921 = vpack.c.b16 %v900, %v900
  %v922 = vpack.c.b16 %v901, %v901
  %v938 = vsel %vm288, %v904, 0
  %v941 = vsel %vm288, %v907, 0
  %v944 = vsel %vm288, %v910, 0
  %v947 = vsel %vm288, %v913, 0
  %v950 = vsel %vm288, %v916, 0
  %v953 = vsel %vm288, %v919, 0
  %v956 = vsel %vm288, %v922, 0
  %958 = vmatprep.subr.bf16.mxu0 0
  %959 = vmatpush1.bf16.msra.mxu0 %v259
  %960 = vmatprep.subr.bf16.mxu0 0
  %961 = vmatpush1.bf16.msra.mxu0 %v258
  %962 = vmatprep.subr.bf16.mxu0 0
  %963 = vmatpush1.bf16.msra.mxu0 %v257
  %964 = vmatprep.subr.bf16.mxu0 0
  %965 = vmatpush1.bf16.msra.mxu0 %v256
  %966 = vmatprep.subr.bf16.mxu0 0
  %967 = vmatpush1.bf16.msra.mxu0 %v255
  %968 = vmatprep.subr.bf16.mxu0 0
  %969 = vmatpush1.bf16.msra.mxu0 %v254
  %970 = vmatprep.subr.bf16.mxu0 0
  %971 = vmatpush1.bf16.msra.mxu0 %v253
  %972 = vmatprep.subr.bf16.mxu0 0
  %973 = vmatpush1.bf16.msra.mxu0 %v252
  %974 = vmatprep.subr.bf16.mxu0 0
  %975 = vmatpush2.bf16.msra.mxu0 %v267
  %976 = vmatprep.subr.bf16.mxu0 0
  %977 = vmatpush2.bf16.msra.mxu0 %v266
  %978 = vmatprep.subr.bf16.mxu0 0
  %979 = vmatpush2.bf16.msra.mxu0 %v265
  %980 = vmatprep.subr.bf16.mxu0 0
  %981 = vmatpush2.bf16.msra.mxu0 %v264
  %982 = vmatprep.subr.bf16.mxu0 0
  %983 = vmatpush2.bf16.msra.mxu0 %v263
  %984 = vmatprep.subr.bf16.mxu0 0
  %985 = vmatpush2.bf16.msra.mxu0 %v262
  %986 = vmatprep.subr.bf16.mxu0 0
  %987 = vmatpush2.bf16.msra.mxu0 %v261
  %988 = vmatprep.subr.bf16.mxu0 0
  %989 = vmatpush2.bf16.msra.mxu0 %v260
  %990 = vmatprep.mubr.bf16.mxu0 %v903
  %991 = vmatmul.mubr.bf16.gmra.mxu0 %v902
  %v992 = vpop.f32.mrf.mxu0
  %v993 = vadd.f32 0.0, %v992
  %v994 = vpop.f32.mrf.mxu0
  %v995 = vpop.f32.mrf.mxu0
  %v996 = vadd.f32 0.0, %v995
  %v997 = vpop.f32.mrf.mxu0
  %998 = vmatprep.mubr.bf16.mxu0 %v906
  %999 = vmatmul.mubr.bf16.gmra.mxu0 %v905
  %v1000 = vpop.f32.mrf.mxu0
  %v1001 = vadd.f32 0.0, %v1000
  %v1002 = vpop.f32.mrf.mxu0
  %v1003 = vpop.f32.mrf.mxu0
  %v1004 = vadd.f32 0.0, %v1003
  %v1005 = vpop.f32.mrf.mxu0
  %1006 = vmatprep.mubr.bf16.mxu0 %v909
  %1007 = vmatmul.mubr.bf16.gmra.mxu0 %v908
  %v1008 = vpop.f32.mrf.mxu0
  %v1009 = vadd.f32 0.0, %v1008
  %v1010 = vpop.f32.mrf.mxu0
  %v1011 = vpop.f32.mrf.mxu0
  %v1012 = vadd.f32 0.0, %v1011
  %v1013 = vpop.f32.mrf.mxu0
  %1014 = vmatprep.mubr.bf16.mxu0 %v912
  %1015 = vmatmul.mubr.bf16.gmra.mxu0 %v911
  %v1016 = vpop.f32.mrf.mxu0
  %v1017 = vadd.f32 0.0, %v1016
  %v1018 = vpop.f32.mrf.mxu0
  %v1019 = vpop.f32.mrf.mxu0
  %v1020 = vadd.f32 0.0, %v1019
  %v1021 = vpop.f32.mrf.mxu0
  %1022 = vmatprep.mubr.bf16.mxu0 %v915
  %1023 = vmatmul.mubr.bf16.gmra.mxu0 %v914
  %v1024 = vpop.f32.mrf.mxu0
  %v1025 = vadd.f32 0.0, %v1024
  %v1026 = vpop.f32.mrf.mxu0
  %v1027 = vpop.f32.mrf.mxu0
  %v1028 = vadd.f32 0.0, %v1027
  %v1029 = vpop.f32.mrf.mxu0
  %1030 = vmatprep.mubr.bf16.mxu0 %v918
  %1031 = vmatmul.mubr.bf16.gmra.mxu0 %v917
  %v1032 = vpop.f32.mrf.mxu0
  %v1033 = vadd.f32 0.0, %v1032
  %v1034 = vpop.f32.mrf.mxu0
  %v1035 = vpop.f32.mrf.mxu0
  %v1036 = vadd.f32 0.0, %v1035
  %v1037 = vpop.f32.mrf.mxu0
  %1038 = vmatprep.mubr.bf16.mxu0 %v921
  %1039 = vmatmul.mubr.bf16.gmra.mxu0 %v920
  %v1040 = vpop.f32.mrf.mxu0
  %v1041 = vadd.f32 0.0, %v1040
  %v1042 = vpop.f32.mrf.mxu0
  %v1043 = vpop.f32.mrf.mxu0
  %v1044 = vpop.f32.mrf.mxu0
  %1045 = vdwg.mxu0
  %1046 = vmatprep.subr.bf16.mxu0 0
  %1047 = vmatpush1.bf16.msra.mxu0 0
  %1048 = vmatprep.subr.bf16.mxu0 0
  %1049 = vmatpush1.bf16.msra.mxu0 0
  %1050 = vmatprep.subr.bf16.mxu0 0
  %1051 = vmatpush1.bf16.msra.mxu0 0
  %1052 = vmatprep.subr.bf16.mxu0 0
  %1053 = vmatpush1.bf16.msra.mxu0 0
  %1054 = vmatprep.subr.bf16.mxu0 0
  %1055 = vmatpush1.bf16.msra.mxu0 0
  %1056 = vmatprep.subr.bf16.mxu0 0
  %1057 = vmatpush1.bf16.msra.mxu0 0
  %1058 = vmatprep.subr.bf16.mxu0 0
  %1059 = vmatpush1.bf16.msra.mxu0 %v269
  %1060 = vmatprep.subr.bf16.mxu0 0
  %1061 = vmatpush1.bf16.msra.mxu0 %v268
  %1062 = vmatprep.subr.bf16.mxu0 0
  %1063 = vmatpush2.bf16.msra.mxu0 0
  %1064 = vmatprep.subr.bf16.mxu0 0
  %1065 = vmatpush2.bf16.msra.mxu0 0
  %1066 = vmatprep.subr.bf16.mxu0 0
  %1067 = vmatpush2.bf16.msra.mxu0 0
  %1068 = vmatprep.subr.bf16.mxu0 0
  %1069 = vmatpush2.bf16.msra.mxu0 0
  %1070 = vmatprep.subr.bf16.mxu0 0
  %1071 = vmatpush2.bf16.msra.mxu0 0
  %1072 = vmatprep.subr.bf16.mxu0 0
  %1073 = vmatpush2.bf16.msra.mxu0 0
  %1074 = vmatprep.subr.bf16.mxu0 0
  %1075 = vmatpush2.bf16.msra.mxu0 0
  %1076 = vmatprep.subr.bf16.mxu0 0
  %1077 = vmatpush2.bf16.msra.mxu0 0
  %1078 = vmatprep.mubr.bf16.mxu0 0
  %1079 = vmatmul.mubr.bf16.gmra.mxu0 %v938
  %v1080 = vpop.f32.mrf.mxu0
  %v1081 = vadd.f32 %v993, %v1080
  %v1082 = vpop.f32.mrf.mxu0
  %v1083 = vpop.f32.mrf.mxu0
  %v1084 = vadd.f32 %v996, %v1083
  %v1085 = vpop.f32.mrf.mxu0
  %1086 = vmatprep.mubr.bf16.mxu0 0
  %1087 = vmatmul.mubr.bf16.gmra.mxu0 %v941
  %v1088 = vpop.f32.mrf.mxu0
  %v1089 = vadd.f32 %v1001, %v1088
  %v1090 = vpop.f32.mrf.mxu0
  %v1091 = vpop.f32.mrf.mxu0
  %v1092 = vadd.f32 %v1004, %v1091
  %v1093 = vpop.f32.mrf.mxu0
  %1094 = vmatprep.mubr.bf16.mxu0 0
  %1095 = vmatmul.mubr.bf16.gmra.mxu0 %v944
  %v1096 = vpop.f32.mrf.mxu0
  %v1097 = vadd.f32 %v1009, %v1096
  %v1098 = vpop.f32.mrf.mxu0
  %v1099 = vpop.f32.mrf.mxu0
  %v1100 = vadd.f32 %v1012, %v1099
  %v1101 = vpop.f32.mrf.mxu0
  %1102 = vmatprep.mubr.bf16.mxu0 0
  %1103 = vmatmul.mubr.bf16.gmra.mxu0 %v947
  %v1104 = vpop.f32.mrf.mxu0
  %v1105 = vadd.f32 %v1017, %v1104
  %v1106 = vpop.f32.mrf.mxu0
  %v1107 = vpop.f32.mrf.mxu0
  %v1108 = vadd.f32 %v1020, %v1107
  %v1109 = vpop.f32.mrf.mxu0
  %1110 = vmatprep.mubr.bf16.mxu0 0
  %1111 = vmatmul.mubr.bf16.gmra.mxu0 %v950
  %v1112 = vpop.f32.mrf.mxu0
  %v1113 = vadd.f32 %v1025, %v1112
  %v1114 = vpop.f32.mrf.mxu0
  %v1115 = vpop.f32.mrf.mxu0
  %v1116 = vadd.f32 %v1028, %v1115
  %v1117 = vpop.f32.mrf.mxu0
  %1118 = vmatprep.mubr.bf16.mxu0 0
  %1119 = vmatmul.mubr.bf16.gmra.mxu0 %v953
  %v1120 = vpop.f32.mrf.mxu0
  %v1121 = vadd.f32 %v1033, %v1120
  %v1122 = vpop.f32.mrf.mxu0
  %v1123 = vpop.f32.mrf.mxu0
  %v1124 = vadd.f32 %v1036, %v1123
  %v1125 = vpop.f32.mrf.mxu0
  %1126 = vmatprep.mubr.bf16.mxu0 0
  %1127 = vmatmul.mubr.bf16.gmra.mxu0 %v956
  %v1128 = vpop.f32.mrf.mxu0
  %v1129 = vadd.f32 %v1041, %v1128
  %v1130 = vpop.f32.mrf.mxu0
  %v1131 = vpop.f32.mrf.mxu0
  %v1132 = vpop.f32.mrf.mxu0
  %1133 = vdwg.mxu0
  %s1134 = scalar_lea.vmem %s0, 468
  %v1135 = vld [vmem:[%s1134] sm:$0xff]
  %v1136 = vld [vmem:[%s1134 + $0x8] sm:$0xf]
  %v1137 = vld [vmem:[%s1134 + $0xc] sm:$0xff]
  %v1138 = vld [vmem:[%s1134 + $0x14] sm:$0xf]
  %v1139 = vld [vmem:[%s1134 + $0x18] sm:$0xff]
  %v1140 = vld [vmem:[%s1134 + $0x20] sm:$0xf]
  %v1141 = vld [vmem:[%s1134 + $0x24] sm:$0xff]
  %v1142 = vld [vmem:[%s1134 + $0x2c] sm:$0xf]
  %v1143 = vld [vmem:[%s1134 + $0x30] sm:$0xff]
  %v1144 = vld [vmem:[%s1134 + $0x38] sm:$0xf]
  %v1145 = vld [vmem:[%s1134 + $0x3c] sm:$0xff]
  %v1146 = vld [vmem:[%s1134 + $0x44] sm:$0xf]
  %v1147 = vld [vmem:[%s1134 + $0x48] sm:$0xff]
  %v1148 = vld [vmem:[%s1134 + $0x50] sm:$0xf]
  %v1149 = vld [vmem:[%s1134 + $0x54] sm:$0xff]
  %v1150 = vld [vmem:[%s1134 + $0x5c] sm:$0xf]
  %v1151 = vld [vmem:[%s1134 + $0x60] sm:$0xff]
  %v1152 = vld [vmem:[%s1134 + $0x68] sm:$0xf]
  %v1153 = vld [vmem:[%s1134 + $0x6c] sm:$0xff]
  %v1154 = vld [vmem:[%s1134 + $0x74] sm:$0xf]
  %v1155 = vld [vmem:[%s1134 + $0x78] sm:$0xff]
  %v1156 = vld [vmem:[%s1134 + $0x80] sm:$0xf]
  %v1157 = vld [vmem:[%s1134 + $0x84] sm:$0xff]
  %v1158 = vld [vmem:[%s1134 + $0x8c] sm:$0xf]
  %v1159 = vld [vmem:[%s1134 + $0x90] sm:$0x11]
  %v1160 = vld [vmem:[%s1134 + $0x98] sm:$0x1]
  %v1187 = vunpack.c.l.b16 %v1135
  %v1188 = vunpack.c.h.b16 %v1135
  %v1189 = vunpack.c.l.b16 %v1136
  %v1190 = vunpack.c.l.b16 %v1137
  %v1191 = vunpack.c.h.b16 %v1137
  %v1192 = vunpack.c.l.b16 %v1138
  %v1193 = vunpack.c.l.b16 %v1139
  %v1194 = vunpack.c.h.b16 %v1139
  %v1195 = vunpack.c.l.b16 %v1140
  %v1196 = vunpack.c.l.b16 %v1141
  %v1197 = vunpack.c.h.b16 %v1141
  %v1198 = vunpack.c.l.b16 %v1142
  %v1199 = vunpack.c.l.b16 %v1143
  %v1200 = vunpack.c.h.b16 %v1143
  %v1201 = vunpack.c.l.b16 %v1144
  %v1202 = vunpack.c.l.b16 %v1145
  %v1203 = vunpack.c.h.b16 %v1145
  %v1204 = vunpack.c.l.b16 %v1146
  %v1205 = vunpack.c.l.b16 %v1147
  %v1206 = vunpack.c.h.b16 %v1147
  %v1207 = vunpack.c.l.b16 %v1148
  %v1208 = vunpack.c.l.b16 %v1149
  %v1209 = vunpack.c.h.b16 %v1149
  %v1210 = vunpack.c.l.b16 %v1150
  %v1211 = vunpack.c.l.b16 %v1151
  %v1212 = vunpack.c.h.b16 %v1151
  %v1213 = vunpack.c.l.b16 %v1152
  %v1214 = vunpack.c.l.b16 %v1153
  %v1215 = vunpack.c.h.b16 %v1153
  %v1216 = vunpack.c.l.b16 %v1154
  %v1217 = vunpack.c.l.b16 %v1155
  %v1218 = vunpack.c.h.b16 %v1155
  %v1219 = vunpack.c.l.b16 %v1156
  %v1220 = vunpack.c.l.b16 %v1157
  %v1221 = vunpack.c.h.b16 %v1157
  %v1222 = vunpack.c.l.b16 %v1158
  %v1223 = vunpack.c.l.b16 %v1159
  %v1224 = vunpack.c.h.b16 %v1159
  %v1225 = vunpack.c.l.b16 %v1160
  %v1226 = vpack.c.b16 %v1190, %v1187
  %v1227 = vpack.c.b16 %v1191, %v1188
  %v1228 = vpack.c.b16 %v1192, %v1189
  %v1229 = vpack.c.b16 %v1196, %v1193
  %v1230 = vpack.c.b16 %v1197, %v1194
  %v1231 = vpack.c.b16 %v1198, %v1195
  %v1232 = vpack.c.b16 %v1202, %v1199
  %v1233 = vpack.c.b16 %v1203, %v1200
  %v1234 = vpack.c.b16 %v1204, %v1201
  %v1235 = vpack.c.b16 %v1208, %v1205
  %v1236 = vpack.c.b16 %v1209, %v1206
  %v1237 = vpack.c.b16 %v1210, %v1207
  %v1238 = vpack.c.b16 %v1214, %v1211
  %v1239 = vpack.c.b16 %v1215, %v1212
  %v1240 = vpack.c.b16 %v1216, %v1213
  %v1241 = vpack.c.b16 %v1220, %v1217
  %v1242 = vpack.c.b16 %v1221, %v1218
  %v1243 = vpack.c.b16 %v1222, %v1219
  %v1244 = vpack.c.b16 %v1223, %v1223
  %v1245 = vpack.c.b16 %v1224, %v1224
  %v1246 = vpack.c.b16 %v1225, %v1225
  %v1262 = vsel %vm288, %v1228, 0
  %v1265 = vsel %vm288, %v1231, 0
  %v1268 = vsel %vm288, %v1234, 0
  %v1271 = vsel %vm288, %v1237, 0
  %v1274 = vsel %vm288, %v1240, 0
  %v1277 = vsel %vm288, %v1243, 0
  %v1280 = vsel %vm288, %v1246, 0
  %1282 = vmatprep.subr.bf16.mxu0 0
  %1283 = vmatpush1.bf16.msra.mxu0 %v259
  %1284 = vmatprep.subr.bf16.mxu0 0
  %1285 = vmatpush1.bf16.msra.mxu0 %v258
  %1286 = vmatprep.subr.bf16.mxu0 0
  %1287 = vmatpush1.bf16.msra.mxu0 %v257
  %1288 = vmatprep.subr.bf16.mxu0 0
  %1289 = vmatpush1.bf16.msra.mxu0 %v256
  %1290 = vmatprep.subr.bf16.mxu0 0
  %1291 = vmatpush1.bf16.msra.mxu0 %v255
  %1292 = vmatprep.subr.bf16.mxu0 0
  %1293 = vmatpush1.bf16.msra.mxu0 %v254
  %1294 = vmatprep.subr.bf16.mxu0 0
  %1295 = vmatpush1.bf16.msra.mxu0 %v253
  %1296 = vmatprep.subr.bf16.mxu0 0
  %1297 = vmatpush1.bf16.msra.mxu0 %v252
  %1298 = vmatprep.subr.bf16.mxu0 0
  %1299 = vmatpush2.bf16.msra.mxu0 %v267
  %1300 = vmatprep.subr.bf16.mxu0 0
  %1301 = vmatpush2.bf16.msra.mxu0 %v266
  %1302 = vmatprep.subr.bf16.mxu0 0
  %1303 = vmatpush2.bf16.msra.mxu0 %v265
  %1304 = vmatprep.subr.bf16.mxu0 0
  %1305 = vmatpush2.bf16.msra.mxu0 %v264
  %1306 = vmatprep.subr.bf16.mxu0 0
  %1307 = vmatpush2.bf16.msra.mxu0 %v263
  %1308 = vmatprep.subr.bf16.mxu0 0
  %1309 = vmatpush2.bf16.msra.mxu0 %v262
  %1310 = vmatprep.subr.bf16.mxu0 0
  %1311 = vmatpush2.bf16.msra.mxu0 %v261
  %1312 = vmatprep.subr.bf16.mxu0 0
  %1313 = vmatpush2.bf16.msra.mxu0 %v260
  %1314 = vmatprep.mubr.bf16.mxu0 %v1227
  %1315 = vmatmul.mubr.bf16.gmra.mxu0 %v1226
  %v1316 = vpop.f32.mrf.mxu0
  %v1317 = vadd.f32 0.0, %v1316
  %v1318 = vpop.f32.mrf.mxu0
  %v1319 = vpop.f32.mrf.mxu0
  %v1320 = vadd.f32 0.0, %v1319
  %v1321 = vpop.f32.mrf.mxu0
  %1322 = vmatprep.mubr.bf16.mxu0 %v1230
  %1323 = vmatmul.mubr.bf16.gmra.mxu0 %v1229
  %v1324 = vpop.f32.mrf.mxu0
  %v1325 = vadd.f32 0.0, %v1324
  %v1326 = vpop.f32.mrf.mxu0
  %v1327 = vpop.f32.mrf.mxu0
  %v1328 = vadd.f32 0.0, %v1327
  %v1329 = vpop.f32.mrf.mxu0
  %1330 = vmatprep.mubr.bf16.mxu0 %v1233
  %1331 = vmatmul.mubr.bf16.gmra.mxu0 %v1232
  %v1332 = vpop.f32.mrf.mxu0
  %v1333 = vadd.f32 0.0, %v1332
  %v1334 = vpop.f32.mrf.mxu0
  %v1335 = vpop.f32.mrf.mxu0
  %v1336 = vadd.f32 0.0, %v1335
  %v1337 = vpop.f32.mrf.mxu0
  %1338 = vmatprep.mubr.bf16.mxu0 %v1236
  %1339 = vmatmul.mubr.bf16.gmra.mxu0 %v1235
  %v1340 = vpop.f32.mrf.mxu0
  %v1341 = vadd.f32 0.0, %v1340
  %v1342 = vpop.f32.mrf.mxu0
  %v1343 = vpop.f32.mrf.mxu0
  %v1344 = vadd.f32 0.0, %v1343
  %v1345 = vpop.f32.mrf.mxu0
  %1346 = vmatprep.mubr.bf16.mxu0 %v1239
  %1347 = vmatmul.mubr.bf16.gmra.mxu0 %v1238
  %v1348 = vpop.f32.mrf.mxu0
  %v1349 = vadd.f32 0.0, %v1348
  %v1350 = vpop.f32.mrf.mxu0
  %v1351 = vpop.f32.mrf.mxu0
  %v1352 = vadd.f32 0.0, %v1351
  %v1353 = vpop.f32.mrf.mxu0
  %1354 = vmatprep.mubr.bf16.mxu0 %v1242
  %1355 = vmatmul.mubr.bf16.gmra.mxu0 %v1241
  %v1356 = vpop.f32.mrf.mxu0
  %v1357 = vadd.f32 0.0, %v1356
  %v1358 = vpop.f32.mrf.mxu0
  %v1359 = vpop.f32.mrf.mxu0
  %v1360 = vadd.f32 0.0, %v1359
  %v1361 = vpop.f32.mrf.mxu0
  %1362 = vmatprep.mubr.bf16.mxu0 %v1245
  %1363 = vmatmul.mubr.bf16.gmra.mxu0 %v1244
  %v1364 = vpop.f32.mrf.mxu0
  %v1365 = vadd.f32 0.0, %v1364
  %v1366 = vpop.f32.mrf.mxu0
  %v1367 = vpop.f32.mrf.mxu0
  %v1368 = vpop.f32.mrf.mxu0
  %1369 = vdwg.mxu0
  %1370 = vmatprep.subr.bf16.mxu0 0
  %1371 = vmatpush1.bf16.msra.mxu0 0
  %1372 = vmatprep.subr.bf16.mxu0 0
  %1373 = vmatpush1.bf16.msra.mxu0 0
  %1374 = vmatprep.subr.bf16.mxu0 0
  %1375 = vmatpush1.bf16.msra.mxu0 0
  %1376 = vmatprep.subr.bf16.mxu0 0
  %1377 = vmatpush1.bf16.msra.mxu0 0
  %1378 = vmatprep.subr.bf16.mxu0 0
  %1379 = vmatpush1.bf16.msra.mxu0 0
  %1380 = vmatprep.subr.bf16.mxu0 0
  %1381 = vmatpush1.bf16.msra.mxu0 0
  %1382 = vmatprep.subr.bf16.mxu0 0
  %1383 = vmatpush1.bf16.msra.mxu0 %v269
  %1384 = vmatprep.subr.bf16.mxu0 0
  %1385 = vmatpush1.bf16.msra.mxu0 %v268
  %1386 = vmatprep.subr.bf16.mxu0 0
  %1387 = vmatpush2.bf16.msra.mxu0 0
  %1388 = vmatprep.subr.bf16.mxu0 0
  %1389 = vmatpush2.bf16.msra.mxu0 0
  %1390 = vmatprep.subr.bf16.mxu0 0
  %1391 = vmatpush2.bf16.msra.mxu0 0
  %1392 = vmatprep.subr.bf16.mxu0 0
  %1393 = vmatpush2.bf16.msra.mxu0 0
  %1394 = vmatprep.subr.bf16.mxu0 0
  %1395 = vmatpush2.bf16.msra.mxu0 0
  %1396 = vmatprep.subr.bf16.mxu0 0
  %1397 = vmatpush2.bf16.msra.mxu0 0
  %1398 = vmatprep.subr.bf16.mxu0 0
  %1399 = vmatpush2.bf16.msra.mxu0 0
  %1400 = vmatprep.subr.bf16.mxu0 0
  %1401 = vmatpush2.bf16.msra.mxu0 0
  %1402 = vmatprep.mubr.bf16.mxu0 0
  %1403 = vmatmul.mubr.bf16.gmra.mxu0 %v1262
  %v1404 = vpop.f32.mrf.mxu0
  %v1405 = vadd.f32 %v1317, %v1404
  %v1406 = vpop.f32.mrf.mxu0
  %v1407 = vpop.f32.mrf.mxu0
  %v1408 = vadd.f32 %v1320, %v1407
  %v1409 = vpop.f32.mrf.mxu0
  %1410 = vmatprep.mubr.bf16.mxu0 0
  %1411 = vmatmul.mubr.bf16.gmra.mxu0 %v1265
  %v1412 = vpop.f32.mrf.mxu0
  %v1413 = vadd.f32 %v1325, %v1412
  %v1414 = vpop.f32.mrf.mxu0
  %v1415 = vpop.f32.mrf.mxu0
  %v1416 = vadd.f32 %v1328, %v1415
  %v1417 = vpop.f32.mrf.mxu0
  %1418 = vmatprep.mubr.bf16.mxu0 0
  %1419 = vmatmul.mubr.bf16.gmra.mxu0 %v1268
  %v1420 = vpop.f32.mrf.mxu0
  %v1421 = vadd.f32 %v1333, %v1420
  %v1422 = vpop.f32.mrf.mxu0
  %v1423 = vpop.f32.mrf.mxu0
  %v1424 = vadd.f32 %v1336, %v1423
  %v1425 = vpop.f32.mrf.mxu0
  %1426 = vmatprep.mubr.bf16.mxu0 0
  %1427 = vmatmul.mubr.bf16.gmra.mxu0 %v1271
  %v1428 = vpop.f32.mrf.mxu0
  %v1429 = vadd.f32 %v1341, %v1428
  %v1430 = vpop.f32.mrf.mxu0
  %v1431 = vpop.f32.mrf.mxu0
  %v1432 = vadd.f32 %v1344, %v1431
  %v1433 = vpop.f32.mrf.mxu0
  %1434 = vmatprep.mubr.bf16.mxu0 0
  %1435 = vmatmul.mubr.bf16.gmra.mxu0 %v1274
  %v1436 = vpop.f32.mrf.mxu0
  %v1437 = vadd.f32 %v1349, %v1436
  %v1438 = vpop.f32.mrf.mxu0
  %v1439 = vpop.f32.mrf.mxu0
  %v1440 = vadd.f32 %v1352, %v1439
  %v1441 = vpop.f32.mrf.mxu0
  %1442 = vmatprep.mubr.bf16.mxu0 0
  %1443 = vmatmul.mubr.bf16.gmra.mxu0 %v1277
  %v1444 = vpop.f32.mrf.mxu0
  %v1445 = vadd.f32 %v1357, %v1444
  %v1446 = vpop.f32.mrf.mxu0
  %v1447 = vpop.f32.mrf.mxu0
  %v1448 = vadd.f32 %v1360, %v1447
  %v1449 = vpop.f32.mrf.mxu0
  %1450 = vmatprep.mubr.bf16.mxu0 0
  %1451 = vmatmul.mubr.bf16.gmra.mxu0 %v1280
  %v1452 = vpop.f32.mrf.mxu0
  %v1453 = vadd.f32 %v1365, %v1452
  %v1454 = vpop.f32.mrf.mxu0
  %v1455 = vpop.f32.mrf.mxu0
  %v1456 = vpop.f32.mrf.mxu0
  %1457 = vdwg.mxu0
  %vm1458 = vcmask 130048
  %v1459 = vsel %vm1458, %v433, 0.0
  %v1460 = vsel %vm1458, %v436, 0.0
  %v1461 = vadd.f32 %v1459, %v1460
  %v1462 = vsel %vm1458, %v441, 0.0
  %v1463 = vadd.f32 %v1461, %v1462
  %v1464 = vsel %vm1458, %v444, 0.0
  %v1465 = vadd.f32 %v1463, %v1464
  %v1466 = vsel %vm1458, %v449, 0.0
  %v1467 = vadd.f32 %v1465, %v1466
  %v1468 = vsel %vm1458, %v452, 0.0
  %v1469 = vadd.f32 %v1467, %v1468
  %v1470 = vsel %vm1458, %v457, 0.0
  %v1471 = vadd.f32 %v1469, %v1470
  %v1472 = vsel %vm1458, %v460, 0.0
  %v1473 = vadd.f32 %v1471, %v1472
  %v1474 = vsel %vm1458, %v465, 0.0
  %v1475 = vadd.f32 %v1473, %v1474
  %v1476 = vsel %vm1458, %v468, 0.0
  %v1477 = vadd.f32 %v1475, %v1476
  %v1478 = vsel %vm1458, %v473, 0.0
  %v1479 = vadd.f32 %v1477, %v1478
  %v1480 = vsel %vm1458, %v476, 0.0
  %v1481 = vadd.f32 %v1479, %v1480
  %vm1482 = vcmask 123904
  %v1483 = vsel %vm1482, %v481, 0.0
  %v1484 = vadd.f32 %v1481, %v1483
  %v1485 = vrot.slane %v1484, 4
  %v1486 = vadd.f32 %v1484, %v1485
  %v1487 = vrot.slane %v1486, 2
  %v1488 = vadd.f32 %v1486, %v1487
  %v1489 = vrot.slane %v1488, 1
  %v1490 = vadd.f32 %v1488, %v1489
  %v1491 = vsel %vm1458, %v757, 0.0
  %v1492 = vsel %vm1458, %v760, 0.0
  %v1493 = vadd.f32 %v1491, %v1492
  %v1494 = vsel %vm1458, %v765, 0.0
  %v1495 = vadd.f32 %v1493, %v1494
  %v1496 = vsel %vm1458, %v768, 0.0
  %v1497 = vadd.f32 %v1495, %v1496
  %v1498 = vsel %vm1458, %v773, 0.0
  %v1499 = vadd.f32 %v1497, %v1498
  %v1500 = vsel %vm1458, %v776, 0.0
  %v1501 = vadd.f32 %v1499, %v1500
  %v1502 = vsel %vm1458, %v781, 0.0
  %v1503 = vadd.f32 %v1501, %v1502
  %v1504 = vsel %vm1458, %v784, 0.0
  %v1505 = vadd.f32 %v1503, %v1504
  %v1506 = vsel %vm1458, %v789, 0.0
  %v1507 = vadd.f32 %v1505, %v1506
  %v1508 = vsel %vm1458, %v792, 0.0
  %v1509 = vadd.f32 %v1507, %v1508
  %v1510 = vsel %vm1458, %v797, 0.0
  %v1511 = vadd.f32 %v1509, %v1510
  %v1512 = vsel %vm1458, %v800, 0.0
  %v1513 = vadd.f32 %v1511, %v1512
  %v1514 = vsel %vm1482, %v805, 0.0
  %v1515 = vadd.f32 %v1513, %v1514
  %v1516 = vrot.slane %v1515, 4
  %v1517 = vadd.f32 %v1515, %v1516
  %v1518 = vrot.slane %v1517, 2
  %v1519 = vadd.f32 %v1517, %v1518
  %v1520 = vrot.slane %v1519, 1
  %v1521 = vadd.f32 %v1519, %v1520
  %v1522 = vadd.f32 %v1490, %v1521
  %v1523 = vsel %vm1458, %v1081, 0.0
  %v1524 = vsel %vm1458, %v1084, 0.0
  %v1525 = vadd.f32 %v1523, %v1524
  %v1526 = vsel %vm1458, %v1089, 0.0
  %v1527 = vadd.f32 %v1525, %v1526
  %v1528 = vsel %vm1458, %v1092, 0.0
  %v1529 = vadd.f32 %v1527, %v1528
  %v1530 = vsel %vm1458, %v1097, 0.0
  %v1531 = vadd.f32 %v1529, %v1530
  %v1532 = vsel %vm1458, %v1100, 0.0
  %v1533 = vadd.f32 %v1531, %v1532
  %v1534 = vsel %vm1458, %v1105, 0.0
  %v1535 = vadd.f32 %v1533, %v1534
  %v1536 = vsel %vm1458, %v1108, 0.0
  %v1537 = vadd.f32 %v1535, %v1536
  %v1538 = vsel %vm1458, %v1113, 0.0
  %v1539 = vadd.f32 %v1537, %v1538
  %v1540 = vsel %vm1458, %v1116, 0.0
  %v1541 = vadd.f32 %v1539, %v1540
  %v1542 = vsel %vm1458, %v1121, 0.0
  %v1543 = vadd.f32 %v1541, %v1542
  %v1544 = vsel %vm1458, %v1124, 0.0
  %v1545 = vadd.f32 %v1543, %v1544
  %v1546 = vsel %vm1482, %v1129, 0.0
  %v1547 = vadd.f32 %v1545, %v1546
  %v1548 = vrot.slane %v1547, 4
  %v1549 = vadd.f32 %v1547, %v1548
  %v1550 = vrot.slane %v1549, 2
  %v1551 = vadd.f32 %v1549, %v1550
  %v1552 = vrot.slane %v1551, 1
  %v1553 = vadd.f32 %v1551, %v1552
  %v1554 = vadd.f32 %v1522, %v1553
  %v1555 = vsel %vm1458, %v1405, 0.0
  %v1556 = vsel %vm1458, %v1408, 0.0
  %v1557 = vadd.f32 %v1555, %v1556
  %v1558 = vsel %vm1458, %v1413, 0.0
  %v1559 = vadd.f32 %v1557, %v1558
  %v1560 = vsel %vm1458, %v1416, 0.0
  %v1561 = vadd.f32 %v1559, %v1560
  %v1562 = vsel %vm1458, %v1421, 0.0
  %v1563 = vadd.f32 %v1561, %v1562
  %v1564 = vsel %vm1458, %v1424, 0.0
  %v1565 = vadd.f32 %v1563, %v1564
  %v1566 = vsel %vm1458, %v1429, 0.0
  %v1567 = vadd.f32 %v1565, %v1566
  %v1568 = vsel %vm1458, %v1432, 0.0
  %v1569 = vadd.f32 %v1567, %v1568
  %v1570 = vsel %vm1458, %v1437, 0.0
  %v1571 = vadd.f32 %v1569, %v1570
  %v1572 = vsel %vm1458, %v1440, 0.0
  %v1573 = vadd.f32 %v1571, %v1572
  %v1574 = vsel %vm1458, %v1445, 0.0
  %v1575 = vadd.f32 %v1573, %v1574
  %v1576 = vsel %vm1458, %v1448, 0.0
  %v1577 = vadd.f32 %v1575, %v1576
  %v1578 = vsel %vm1482, %v1453, 0.0
  %v1579 = vadd.f32 %v1577, %v1578
  %v1580 = vrot.slane %v1579, 4
  %v1581 = vadd.f32 %v1579, %v1580
  %v1582 = vrot.slane %v1581, 2
  %v1583 = vadd.f32 %v1581, %v1582
  %v1584 = vrot.slane %v1583, 1
  %v1585 = vadd.f32 %v1583, %v1584
  %v1586 = vadd.f32 %v1554, %v1585
  %v1587 = vmul.f32 %v433, %v433
  %v1588 = vmul.f32 %v436, %v436
  %v1589 = vmul.f32 %v441, %v441
  %v1590 = vmul.f32 %v444, %v444
  %v1591 = vmul.f32 %v449, %v449
  %v1592 = vmul.f32 %v452, %v452
  %v1593 = vmul.f32 %v457, %v457
  %v1594 = vmul.f32 %v460, %v460
  %v1595 = vmul.f32 %v465, %v465
  %v1596 = vmul.f32 %v468, %v468
  %v1597 = vmul.f32 %v473, %v473
  %v1598 = vmul.f32 %v476, %v476
  %v1599 = vmul.f32 %v481, %v481
  %v1600 = vsel %vm1458, %v1587, 0.0
  %v1601 = vsel %vm1458, %v1588, 0.0
  %v1602 = vadd.f32 %v1600, %v1601
  %v1603 = vsel %vm1458, %v1589, 0.0
  %v1604 = vadd.f32 %v1602, %v1603
  %v1605 = vsel %vm1458, %v1590, 0.0
  %v1606 = vadd.f32 %v1604, %v1605
  %v1607 = vsel %vm1458, %v1591, 0.0
  %v1608 = vadd.f32 %v1606, %v1607
  %v1609 = vsel %vm1458, %v1592, 0.0
  %v1610 = vadd.f32 %v1608, %v1609
  %v1611 = vsel %vm1458, %v1593, 0.0
  %v1612 = vadd.f32 %v1610, %v1611
  %v1613 = vsel %vm1458, %v1594, 0.0
  %v1614 = vadd.f32 %v1612, %v1613
  %v1615 = vsel %vm1458, %v1595, 0.0
  %v1616 = vadd.f32 %v1614, %v1615
  %v1617 = vsel %vm1458, %v1596, 0.0
  %v1618 = vadd.f32 %v1616, %v1617
  %v1619 = vsel %vm1458, %v1597, 0.0
  %v1620 = vadd.f32 %v1618, %v1619
  %v1621 = vsel %vm1458, %v1598, 0.0
  %v1622 = vadd.f32 %v1620, %v1621
  %v1623 = vsel %vm1482, %v1599, 0.0
  %v1624 = vadd.f32 %v1622, %v1623
  %v1625 = vrot.slane %v1624, 4
  %v1626 = vadd.f32 %v1624, %v1625
  %v1627 = vrot.slane %v1626, 2
  %v1628 = vadd.f32 %v1626, %v1627
  %v1629 = vrot.slane %v1628, 1
  %v1630 = vadd.f32 %v1628, %v1629
  %v1631 = vmul.f32 %v757, %v757
  %v1632 = vmul.f32 %v760, %v760
  %v1633 = vmul.f32 %v765, %v765
  %v1634 = vmul.f32 %v768, %v768
  %v1635 = vmul.f32 %v773, %v773
  %v1636 = vmul.f32 %v776, %v776
  %v1637 = vmul.f32 %v781, %v781
  %v1638 = vmul.f32 %v784, %v784
  %v1639 = vmul.f32 %v789, %v789
  %v1640 = vmul.f32 %v792, %v792
  %v1641 = vmul.f32 %v797, %v797
  %v1642 = vmul.f32 %v800, %v800
  %v1643 = vmul.f32 %v805, %v805
  %v1644 = vsel %vm1458, %v1631, 0.0
  %v1645 = vsel %vm1458, %v1632, 0.0
  %v1646 = vadd.f32 %v1644, %v1645
  %v1647 = vsel %vm1458, %v1633, 0.0
  %v1648 = vadd.f32 %v1646, %v1647
  %v1649 = vsel %vm1458, %v1634, 0.0
  %v1650 = vadd.f32 %v1648, %v1649
  %v1651 = vsel %vm1458, %v1635, 0.0
  %v1652 = vadd.f32 %v1650, %v1651
  %v1653 = vsel %vm1458, %v1636, 0.0
  %v1654 = vadd.f32 %v1652, %v1653
  %v1655 = vsel %vm1458, %v1637, 0.0
  %v1656 = vadd.f32 %v1654, %v1655
  %v1657 = vsel %vm1458, %v1638, 0.0
  %v1658 = vadd.f32 %v1656, %v1657
  %v1659 = vsel %vm1458, %v1639, 0.0
  %v1660 = vadd.f32 %v1658, %v1659
  %v1661 = vsel %vm1458, %v1640, 0.0
  %v1662 = vadd.f32 %v1660, %v1661
  %v1663 = vsel %vm1458, %v1641, 0.0
  %v1664 = vadd.f32 %v1662, %v1663
  %v1665 = vsel %vm1458, %v1642, 0.0
  %v1666 = vadd.f32 %v1664, %v1665
  %v1667 = vsel %vm1482, %v1643, 0.0
  %v1668 = vadd.f32 %v1666, %v1667
  %v1669 = vrot.slane %v1668, 4
  %v1670 = vadd.f32 %v1668, %v1669
  %v1671 = vrot.slane %v1670, 2
  %v1672 = vadd.f32 %v1670, %v1671
  %v1673 = vrot.slane %v1672, 1
  %v1674 = vadd.f32 %v1672, %v1673
  %v1675 = vadd.f32 %v1630, %v1674
  %v1676 = vmul.f32 %v1081, %v1081
  %v1677 = vmul.f32 %v1084, %v1084
  %v1678 = vmul.f32 %v1089, %v1089
  %v1679 = vmul.f32 %v1092, %v1092
  %v1680 = vmul.f32 %v1097, %v1097
  %v1681 = vmul.f32 %v1100, %v1100
  %v1682 = vmul.f32 %v1105, %v1105
  %v1683 = vmul.f32 %v1108, %v1108
  %v1684 = vmul.f32 %v1113, %v1113
  %v1685 = vmul.f32 %v1116, %v1116
  %v1686 = vmul.f32 %v1121, %v1121
  %v1687 = vmul.f32 %v1124, %v1124
  %v1688 = vmul.f32 %v1129, %v1129
  %v1689 = vsel %vm1458, %v1676, 0.0
  %v1690 = vsel %vm1458, %v1677, 0.0
  %v1691 = vadd.f32 %v1689, %v1690
  %v1692 = vsel %vm1458, %v1678, 0.0
  %v1693 = vadd.f32 %v1691, %v1692
  %v1694 = vsel %vm1458, %v1679, 0.0
  %v1695 = vadd.f32 %v1693, %v1694
  %v1696 = vsel %vm1458, %v1680, 0.0
  %v1697 = vadd.f32 %v1695, %v1696
  %v1698 = vsel %vm1458, %v1681, 0.0
  %v1699 = vadd.f32 %v1697, %v1698
  %v1700 = vsel %vm1458, %v1682, 0.0
  %v1701 = vadd.f32 %v1699, %v1700
  %v1702 = vsel %vm1458, %v1683, 0.0
  %v1703 = vadd.f32 %v1701, %v1702
  %v1704 = vsel %vm1458, %v1684, 0.0
  %v1705 = vadd.f32 %v1703, %v1704
  %v1706 = vsel %vm1458, %v1685, 0.0
  %v1707 = vadd.f32 %v1705, %v1706
  %v1708 = vsel %vm1458, %v1686, 0.0
  %v1709 = vadd.f32 %v1707, %v1708
  %v1710 = vsel %vm1458, %v1687, 0.0
  %v1711 = vadd.f32 %v1709, %v1710
  %v1712 = vsel %vm1482, %v1688, 0.0
  %v1713 = vadd.f32 %v1711, %v1712
  %v1714 = vrot.slane %v1713, 4
  %v1715 = vadd.f32 %v1713, %v1714
  %v1716 = vrot.slane %v1715, 2
  %v1717 = vadd.f32 %v1715, %v1716
  %v1718 = vrot.slane %v1717, 1
  %v1719 = vadd.f32 %v1717, %v1718
  %v1720 = vadd.f32 %v1675, %v1719
  %v1721 = vmul.f32 %v1405, %v1405
  %v1722 = vmul.f32 %v1408, %v1408
  %v1723 = vmul.f32 %v1413, %v1413
  %v1724 = vmul.f32 %v1416, %v1416
  %v1725 = vmul.f32 %v1421, %v1421
  %v1726 = vmul.f32 %v1424, %v1424
  %v1727 = vmul.f32 %v1429, %v1429
  %v1728 = vmul.f32 %v1432, %v1432
  %v1729 = vmul.f32 %v1437, %v1437
  %v1730 = vmul.f32 %v1440, %v1440
  %v1731 = vmul.f32 %v1445, %v1445
  %v1732 = vmul.f32 %v1448, %v1448
  %v1733 = vmul.f32 %v1453, %v1453
  %v1734 = vsel %vm1458, %v1721, 0.0
  %v1735 = vsel %vm1458, %v1722, 0.0
  %v1736 = vadd.f32 %v1734, %v1735
  %v1737 = vsel %vm1458, %v1723, 0.0
  %v1738 = vadd.f32 %v1736, %v1737
  %v1739 = vsel %vm1458, %v1724, 0.0
  %v1740 = vadd.f32 %v1738, %v1739
  %v1741 = vsel %vm1458, %v1725, 0.0
  %v1742 = vadd.f32 %v1740, %v1741
  %v1743 = vsel %vm1458, %v1726, 0.0
  %v1744 = vadd.f32 %v1742, %v1743
  %v1745 = vsel %vm1458, %v1727, 0.0
  %v1746 = vadd.f32 %v1744, %v1745
  %v1747 = vsel %vm1458, %v1728, 0.0
  %v1748 = vadd.f32 %v1746, %v1747
  %v1749 = vsel %vm1458, %v1729, 0.0
  %v1750 = vadd.f32 %v1748, %v1749
  %v1751 = vsel %vm1458, %v1730, 0.0
  %v1752 = vadd.f32 %v1750, %v1751
  %v1753 = vsel %vm1458, %v1731, 0.0
  %v1754 = vadd.f32 %v1752, %v1753
  %v1755 = vsel %vm1458, %v1732, 0.0
  %v1756 = vadd.f32 %v1754, %v1755
  %v1757 = vsel %vm1482, %v1733, 0.0
  %v1758 = vadd.f32 %v1756, %v1757
  %v1759 = vrot.slane %v1758, 4
  %v1760 = vadd.f32 %v1758, %v1759
  %v1761 = vrot.slane %v1760, 2
  %v1762 = vadd.f32 %v1760, %v1761
  %v1763 = vrot.slane %v1762, 1
  %v1764 = vadd.f32 %v1762, %v1763
  %v1765 = vadd.f32 %v1720, %v1764
  %v1766 = vmul.f32 %v1586, 0.0025510204
  %v1767 = vmul.f32 %v1765, 0.0025510204
  %v1768 = vmul.f32 %v1766, %v1766
  %v1769 = vsub.f32 %v1767, %v1768
  %v1770 = vmax.f32 %v1769, 0.0
  %v1771 = vld [vmem:[%s2] sm:$0x1]
  %v1772 = vadd.f32 %v1770, 1e-05
  %v1773 = vrsqrt.pop %v1772
  %v1774 = vmul.f32 %v1771, %v1773
  %v1775 = vld [vmem:[%s3] sm:$0x1]
  %v1776 = vmul.f32 %v1766, %v1774
  %v1777 = vsub.f32 %v1775, %v1776
  %v1779 = vlaneseq
  %v1780 = vshrl.u32 %v1779, 7
  %v1781 = vsub.s32 0, %v1780
  %v1782 = vrot.slane %v1774, %v1781
  %v1784 = vmul.f32 %v433, %v1782
  %v1785 = vmul.f32 %v436, %v1782
  %v1786 = vmul.f32 %v441, %v1782
  %v1787 = vmul.f32 %v444, %v1782
  %v1788 = vmul.f32 %v449, %v1782
  %v1789 = vmul.f32 %v452, %v1782
  %v1790 = vmul.f32 %v457, %v1782
  %v1791 = vmul.f32 %v460, %v1782
  %v1792 = vmul.f32 %v465, %v1782
  %v1793 = vmul.f32 %v468, %v1782
  %v1794 = vmul.f32 %v473, %v1782
  %v1795 = vmul.f32 %v476, %v1782
  %v1796 = vmul.f32 %v481, %v1782
  %v1798 = vlaneseq
  %v1799 = vshrl.u32 %v1798, 7
  %v1800 = vsub.s32 0, %v1799
  %v1801 = vrot.slane %v1777, %v1800
  %v1803 = vadd.f32 %v1784, %v1801
  %v1804 = vadd.f32 %v1785, %v1801
  %v1805 = vadd.f32 %v1786, %v1801
  %v1806 = vadd.f32 %v1787, %v1801
  %v1807 = vadd.f32 %v1788, %v1801
  %v1808 = vadd.f32 %v1789, %v1801
  %v1809 = vadd.f32 %v1790, %v1801
  %v1810 = vadd.f32 %v1791, %v1801
  %v1811 = vadd.f32 %v1792, %v1801
  %v1812 = vadd.f32 %v1793, %v1801
  %v1813 = vadd.f32 %v1794, %v1801
  %v1814 = vadd.f32 %v1795, %v1801
  %v1815 = vadd.f32 %v1796, %v1801
  %v1816 = vmul.f32 %v757, %v1782
  %v1817 = vmul.f32 %v760, %v1782
  %v1818 = vmul.f32 %v765, %v1782
  %v1819 = vmul.f32 %v768, %v1782
  %v1820 = vmul.f32 %v773, %v1782
  %v1821 = vmul.f32 %v776, %v1782
  %v1822 = vmul.f32 %v781, %v1782
  %v1823 = vmul.f32 %v784, %v1782
  %v1824 = vmul.f32 %v789, %v1782
  %v1825 = vmul.f32 %v792, %v1782
  %v1826 = vmul.f32 %v797, %v1782
  %v1827 = vmul.f32 %v800, %v1782
  %v1828 = vmul.f32 %v805, %v1782
  %v1829 = vadd.f32 %v1816, %v1801
  %v1830 = vadd.f32 %v1817, %v1801
  %v1831 = vadd.f32 %v1818, %v1801
  %v1832 = vadd.f32 %v1819, %v1801
  %v1833 = vadd.f32 %v1820, %v1801
  %v1834 = vadd.f32 %v1821, %v1801
  %v1835 = vadd.f32 %v1822, %v1801
  %v1836 = vadd.f32 %v1823, %v1801
  %v1837 = vadd.f32 %v1824, %v1801
  %v1838 = vadd.f32 %v1825, %v1801
  %v1839 = vadd.f32 %v1826, %v1801
  %v1840 = vadd.f32 %v1827, %v1801
  %v1841 = vadd.f32 %v1828, %v1801
  %v1842 = vmax.f32 %v1803, %v1829
  %v1843 = vmax.f32 %v1804, %v1830
  %v1844 = vmax.f32 %v1805, %v1831
  %v1845 = vmax.f32 %v1806, %v1832
  %v1846 = vmax.f32 %v1807, %v1833
  %v1847 = vmax.f32 %v1808, %v1834
  %v1848 = vmax.f32 %v1809, %v1835
  %v1849 = vmax.f32 %v1810, %v1836
  %v1850 = vmax.f32 %v1811, %v1837
  %v1851 = vmax.f32 %v1812, %v1838
  %v1852 = vmax.f32 %v1813, %v1839
  %v1853 = vmax.f32 %v1814, %v1840
  %v1854 = vmax.f32 %v1815, %v1841
  %v1855 = vmul.f32 %v1081, %v1782
  %v1856 = vmul.f32 %v1084, %v1782
  %v1857 = vmul.f32 %v1089, %v1782
  %v1858 = vmul.f32 %v1092, %v1782
  %v1859 = vmul.f32 %v1097, %v1782
  %v1860 = vmul.f32 %v1100, %v1782
  %v1861 = vmul.f32 %v1105, %v1782
  %v1862 = vmul.f32 %v1108, %v1782
  %v1863 = vmul.f32 %v1113, %v1782
  %v1864 = vmul.f32 %v1116, %v1782
  %v1865 = vmul.f32 %v1121, %v1782
  %v1866 = vmul.f32 %v1124, %v1782
  %v1867 = vmul.f32 %v1129, %v1782
  %v1868 = vadd.f32 %v1855, %v1801
  %v1869 = vadd.f32 %v1856, %v1801
  %v1870 = vadd.f32 %v1857, %v1801
  %v1871 = vadd.f32 %v1858, %v1801
  %v1872 = vadd.f32 %v1859, %v1801
  %v1873 = vadd.f32 %v1860, %v1801
  %v1874 = vadd.f32 %v1861, %v1801
  %v1875 = vadd.f32 %v1862, %v1801
  %v1876 = vadd.f32 %v1863, %v1801
  %v1877 = vadd.f32 %v1864, %v1801
  %v1878 = vadd.f32 %v1865, %v1801
  %v1879 = vadd.f32 %v1866, %v1801
  %v1880 = vadd.f32 %v1867, %v1801
  %v1881 = vmul.f32 %v1405, %v1782
  %v1882 = vmul.f32 %v1408, %v1782
  %v1883 = vmul.f32 %v1413, %v1782
  %v1884 = vmul.f32 %v1416, %v1782
  %v1885 = vmul.f32 %v1421, %v1782
  %v1886 = vmul.f32 %v1424, %v1782
  %v1887 = vmul.f32 %v1429, %v1782
  %v1888 = vmul.f32 %v1432, %v1782
  %v1889 = vmul.f32 %v1437, %v1782
  %v1890 = vmul.f32 %v1440, %v1782
  %v1891 = vmul.f32 %v1445, %v1782
  %v1892 = vmul.f32 %v1448, %v1782
  %v1893 = vmul.f32 %v1453, %v1782
  %v1894 = vadd.f32 %v1881, %v1801
  %v1895 = vadd.f32 %v1882, %v1801
  %v1896 = vadd.f32 %v1883, %v1801
  %v1897 = vadd.f32 %v1884, %v1801
  %v1898 = vadd.f32 %v1885, %v1801
  %v1899 = vadd.f32 %v1886, %v1801
  %v1900 = vadd.f32 %v1887, %v1801
  %v1901 = vadd.f32 %v1888, %v1801
  %v1902 = vadd.f32 %v1889, %v1801
  %v1903 = vadd.f32 %v1890, %v1801
  %v1904 = vadd.f32 %v1891, %v1801
  %v1905 = vadd.f32 %v1892, %v1801
  %v1906 = vadd.f32 %v1893, %v1801
  %v1907 = vmax.f32 %v1868, %v1894
  %v1908 = vmax.f32 %v1869, %v1895
  %v1909 = vmax.f32 %v1870, %v1896
  %v1910 = vmax.f32 %v1871, %v1897
  %v1911 = vmax.f32 %v1872, %v1898
  %v1912 = vmax.f32 %v1873, %v1899
  %v1913 = vmax.f32 %v1874, %v1900
  %v1914 = vmax.f32 %v1875, %v1901
  %v1915 = vmax.f32 %v1876, %v1902
  %v1916 = vmax.f32 %v1877, %v1903
  %v1917 = vmax.f32 %v1878, %v1904
  %v1918 = vmax.f32 %v1879, %v1905
  %v1919 = vmax.f32 %v1880, %v1906
  %v1920 = vmax.f32 %v1842, %v1907
  %v1921 = vmax.f32 %v1843, %v1908
  %v1922 = vmax.f32 %v1844, %v1909
  %v1923 = vmax.f32 %v1845, %v1910
  %v1924 = vmax.f32 %v1846, %v1911
  %v1925 = vmax.f32 %v1847, %v1912
  %v1926 = vmax.f32 %v1848, %v1913
  %v1927 = vmax.f32 %v1849, %v1914
  %v1928 = vmax.f32 %v1850, %v1915
  %v1929 = vmax.f32 %v1851, %v1916
  %v1930 = vmax.f32 %v1852, %v1917
  %v1931 = vmax.f32 %v1853, %v1918
  %v1932 = vmax.f32 %v1854, %v1919
  %vm1933 = vcmp.gt.f32.partialorder %v1920, 0.0
  %vm1934 = vcmp.gt.f32.partialorder %v1921, 0.0
  %vm1935 = vcmp.gt.f32.partialorder %v1922, 0.0
  %vm1936 = vcmp.gt.f32.partialorder %v1923, 0.0
  %vm1937 = vcmp.gt.f32.partialorder %v1924, 0.0
  %vm1938 = vcmp.gt.f32.partialorder %v1925, 0.0
  %vm1939 = vcmp.gt.f32.partialorder %v1926, 0.0
  %vm1940 = vcmp.gt.f32.partialorder %v1927, 0.0
  %vm1941 = vcmp.gt.f32.partialorder %v1928, 0.0
  %vm1942 = vcmp.gt.f32.partialorder %v1929, 0.0
  %vm1943 = vcmp.gt.f32.partialorder %v1930, 0.0
  %vm1944 = vcmp.gt.f32.partialorder %v1931, 0.0
  %vm1945 = vcmp.gt.f32.partialorder %v1932, 0.0
  %v1946 = vmul.f32 %v1920, 0.01
  %v1947 = vmul.f32 %v1921, 0.01
  %v1948 = vmul.f32 %v1922, 0.01
  %v1949 = vmul.f32 %v1923, 0.01
  %v1950 = vmul.f32 %v1924, 0.01
  %v1951 = vmul.f32 %v1925, 0.01
  %v1952 = vmul.f32 %v1926, 0.01
  %v1953 = vmul.f32 %v1927, 0.01
  %v1954 = vmul.f32 %v1928, 0.01
  %v1955 = vmul.f32 %v1929, 0.01
  %v1956 = vmul.f32 %v1930, 0.01
  %v1957 = vmul.f32 %v1931, 0.01
  %v1958 = vmul.f32 %v1932, 0.01
  %v1959 = vsel %vm1933, %v1920, %v1946
  %v1960 = vsel %vm1934, %v1921, %v1947
  %v1961 = vsel %vm1935, %v1922, %v1948
  %v1962 = vsel %vm1936, %v1923, %v1949
  %v1963 = vsel %vm1937, %v1924, %v1950
  %v1964 = vsel %vm1938, %v1925, %v1951
  %v1965 = vsel %vm1939, %v1926, %v1952
  %v1966 = vsel %vm1940, %v1927, %v1953
  %v1967 = vsel %vm1941, %v1928, %v1954
  %v1968 = vsel %vm1942, %v1929, %v1955
  %v1969 = vsel %vm1943, %v1930, %v1956
  %v1970 = vsel %vm1944, %v1931, %v1957
  %v1971 = vsel %vm1945, %v1932, %v1958
  %v1972 = vpack.c.bf16 %v1960, %v1959
  %v1973 = vpack.c.bf16 %v1962, %v1961
  %v1974 = vpack.c.bf16 %v1964, %v1963
  %v1975 = vpack.c.bf16 %v1966, %v1965
  %v1976 = vpack.c.bf16 %v1968, %v1967
  %v1977 = vpack.c.bf16 %v1970, %v1969
  %v1978 = vpack.c.bf16 %v1971, %v1971
  %v1986 = vunpack.c.l.b16 %v1972
  %v1987 = vunpack.c.h.b16 %v1972
  %v1988 = vunpack.c.l.b16 %v1973
  %v1989 = vunpack.c.h.b16 %v1973
  %v1990 = vunpack.c.l.b16 %v1974
  %v1991 = vunpack.c.h.b16 %v1974
  %v1992 = vunpack.c.l.b16 %v1975
  %v1993 = vunpack.c.h.b16 %v1975
  %v1994 = vunpack.c.l.b16 %v1976
  %v1995 = vunpack.c.h.b16 %v1976
  %v1996 = vunpack.c.l.b16 %v1977
  %v1997 = vunpack.c.h.b16 %v1977
  %v1998 = vunpack.c.l.b16 %v1978
  %v1999 = vpack.c.b16 %v1986, %v1986
  %v2000 = vpack.c.b16 %v1987, %v1987
  %v2001 = vpack.c.b16 %v1988, %v1988
  %v2002 = vpack.c.b16 %v1989, %v1989
  %v2003 = vpack.c.b16 %v1990, %v1990
  %v2004 = vpack.c.b16 %v1991, %v1991
  %v2005 = vpack.c.b16 %v1992, %v1992
  %v2006 = vpack.c.b16 %v1993, %v1993
  %v2007 = vpack.c.b16 %v1994, %v1994
  %v2008 = vpack.c.b16 %v1995, %v1995
  %v2009 = vpack.c.b16 %v1996, %v1996
  %v2010 = vpack.c.b16 %v1997, %v1997
  %v2011 = vpack.c.b16 %v1998, %v1998
  %vm2025 = vcmask 125952
  %2026 = vst.msk [vmem:[%s4] sm:$0xf] %vm2025, %v1999
  %2027 = vst.msk [vmem:[%s4 + $0x4] sm:$0xf] %vm2025, %v2000
  %2028 = vst.msk [vmem:[%s4 + $0x8] sm:$0xf] %vm2025, %v2001
  %2029 = vst.msk [vmem:[%s4 + $0xc] sm:$0xf] %vm2025, %v2002
  %2030 = vst.msk [vmem:[%s4 + $0x10] sm:$0xf] %vm2025, %v2003
  %2031 = vst.msk [vmem:[%s4 + $0x14] sm:$0xf] %vm2025, %v2004
  %2032 = vst.msk [vmem:[%s4 + $0x18] sm:$0xf] %vm2025, %v2005
  %2033 = vst.msk [vmem:[%s4 + $0x1c] sm:$0xf] %vm2025, %v2006
  %2034 = vst.msk [vmem:[%s4 + $0x20] sm:$0xf] %vm2025, %v2007
  %2035 = vst.msk [vmem:[%s4 + $0x24] sm:$0xf] %vm2025, %v2008
  %2036 = vst.msk [vmem:[%s4 + $0x28] sm:$0xf] %vm2025, %v2009
  %2037 = vst.msk [vmem:[%s4 + $0x2c] sm:$0xf] %vm2025, %v2010
  %vm2038 = vcmask 122880
  %2039 = vst.msk [vmem:[%s4 + $0x30] sm:$0x1] %vm2038, %v2011
  // Predicated region
  $region18: #{model_forward.4} parent=0 // pred_check
    _
  $region19: #{model_forward.4} parent=0 // pred_check_branch
    %2041 = sbr.rel (0) target = $region21
  $region20: #{model_forward.4} parent=0 // pred_region
    _
  $region21: #{model_forward.4} parent=0 // pred_fallthru
    _
  // Predicated region
  $region22: #{model_forward.4} parent=0 // pred_check
    _
  $region23: #{model_forward.4} parent=0 // pred_check_branch
    %2043 = sbr.rel (0) target = $region25
  $region24: #{model_forward.4} parent=0 // pred_region
    _
  $region25: #{model_forward.4} parent=0 // pred_fallthru
    _

// kernel: model_forward.5
$region0: #{model_forward.5}
  #allocation0 [shape = 'u32[]', space=smem, size = 0x4, offset = 0x4, fixed_abs, tag = 'smem constant byte address 0x4 - core index']
  #allocation1 [shape = 'u32[144,128]{1,0:T(1,128)}', space=vmem, size = 0x12000, scoped, tag = 'internal scratch']
  %s0 = inlined_call_operand.vmem [shape: bf16[2,784], index: 0, kind: input, shape index: {}]
  %s1 = inlined_call_operand.vmem [shape: bf16[784,128], index: 1, kind: input, shape index: {}]
  %s2 = inlined_call_operand.vmem [shape: f32[1,128], index: 2, kind: input, shape index: {}]
  %s3 = inlined_call_operand.vmem [shape: f32[2,128], index: 3, kind: input, shape index: {}]
  %s4 = inlined_call_operand.vmem [shape: bf16[128,128], index: 4, kind: input, shape index: {}]
  %s5 = inlined_call_operand.vmem [shape: f32[1,128], index: 5, kind: input, shape index: {}]
  %s6 = inlined_call_operand.hbm [shape: f32[2,128], index: 6, kind: output, shape index: {}]
  %s7 = sld [smem:[#allocation0]]
  $region34: #{model_forward.5} parent=0
    _
  %s9 = ssub.s32 1, %s7
  %s10 = scalar_select 0, %s9, %s7
  $region1: #{model_forward.5} parent=0
    #allocation2 [shape = 'u8[1024]{0}', space=vmem, size = 0x400, scoped, tag = 'output window, operand 0, single buffered']
    #allocation3 [shape = 's32[1]{0}', space=sflag, size = 0x4, scoped, tag = 'scoped memory for model_forward.5']
    %11 = vsyncpa [#allocation3], 0
    // Predicated region
    $region2: #{model_forward.5} parent=1 // pred_check
      _
    $region3: #{model_forward.5} parent=1 // pred_check_branch
      %13 = sbr.rel (0) target = $region5
    $region4: #{model_forward.5} parent=1 // pred_region
      _
    $region5: #{model_forward.5} parent=1 // pred_fallthru
      _
    // Predicated region
    $region6: #{model_forward.5} parent=1 // pred_check
      _
    $region7: #{model_forward.5} parent=1 // pred_check_branch
      %15 = sbr.rel (0) target = $region9
    $region8: #{model_forward.5} parent=1 // pred_region
      _
    $region9: #{model_forward.5} parent=1 // pred_fallthru
      _
    // Predicated region
    $region10: #{model_forward.5} parent=1 // pred_check
      _
    $region11: #{model_forward.5} parent=1 // pred_check_branch
      %17 = sbr.rel (0) target = $region13
    $region12: #{model_forward.5} parent=1 // pred_region
      _
    $region13: #{model_forward.5} parent=1 // pred_fallthru
      _
    // Predicated region
    $region14: #{model_forward.5} parent=1 // pred_check
      _
    $region15: #{model_forward.5} parent=1 // pred_check_branch
      %19 = sbr.rel (0) target = $region17
    $region16: #{model_forward.5} parent=1 // pred_region
      _
    $region17: #{model_forward.5} parent=1 // pred_fallthru
      _
    // Predicated region
    $region18: #{model_forward.5} parent=1 // pred_check
      _
    $region19: #{model_forward.5} parent=1 // pred_check_branch
      %21 = sbr.rel (0) target = $region21
    $region20: #{model_forward.5} parent=1 // pred_region
      _
    $region21: #{model_forward.5} parent=1 // pred_fallthru
      _
    // Predicated region
    $region22: #{model_forward.5} parent=1 // pred_check
      _
    $region23: #{model_forward.5} parent=1 // pred_check_branch
      %23 = sbr.rel (0) target = $region25
    $region24: #{model_forward.5} parent=1 // pred_region
      _
    $region25: #{model_forward.5} parent=1 // pred_fallthru
      _
    %v25 = vld [vmem:[%s0] sm:$0x7f]
    %v26 = vld [vmem:[%s1] sm:$0xf]
    %v27 = vld [vmem:[%s1 + $0x4] sm:$0xf]
    %v28 = vld [vmem:[%s1 + $0x8] sm:$0xf]
    %v29 = vld [vmem:[%s1 + $0xc] sm:$0xf]
    %v30 = vld [vmem:[%s1 + $0x10] sm:$0xf]
    %v31 = vld [vmem:[%s1 + $0x14] sm:$0xf]
    %v32 = vld [vmem:[%s1 + $0x18] sm:$0xf]
    %v33 = vld [vmem:[%s1 + $0x1c] sm:$0xf]
    %v34 = vld [vmem:[%s1 + $0x20] sm:$0xf]
    %v35 = vld [vmem:[%s1 + $0x24] sm:$0xf]
    %v36 = vld [vmem:[%s1 + $0x28] sm:$0xf]
    %v37 = vld [vmem:[%s1 + $0x2c] sm:$0xf]
    %v38 = vld [vmem:[%s1 + $0x30] sm:$0xf]
    %v39 = vld [vmem:[%s1 + $0x34] sm:$0xf]
    %v40 = vld [vmem:[%s1 + $0x38] sm:$0xf]
    %v41 = vld [vmem:[%s1 + $0x3c] sm:$0xf]
    %v42 = vld [vmem:[%s1 + $0x40] sm:$0xf]
    %v43 = vld [vmem:[%s1 + $0x44] sm:$0xf]
    %v44 = vld [vmem:[%s1 + $0x48] sm:$0xf]
    %v45 = vld [vmem:[%s1 + $0x4c] sm:$0xf]
    %v46 = vld [vmem:[%s1 + $0x50] sm:$0xf]
    %v47 = vld [vmem:[%s1 + $0x54] sm:$0xf]
    %v48 = vld [vmem:[%s1 + $0x58] sm:$0xf]
    %v49 = vld [vmem:[%s1 + $0x5c] sm:$0xf]
    %v50 = vld [vmem:[%s1 + $0x60] sm:$0xf]
    %v51 = vld [vmem:[%s1 + $0x64] sm:$0xf]
    %v52 = vld [vmem:[%s1 + $0x68] sm:$0xf]
    %v53 = vld [vmem:[%s1 + $0x6c] sm:$0xf]
    %v54 = vld [vmem:[%s1 + $0x70] sm:$0xf]
    %v55 = vld [vmem:[%s1 + $0x74] sm:$0xf]
    %v56 = vld [vmem:[%s1 + $0x78] sm:$0xf]
    %v57 = vld [vmem:[%s1 + $0x7c] sm:$0xf]
    %v58 = vld [vmem:[%s1 + $0x80] sm:$0xf]
    %v59 = vld [vmem:[%s1 + $0x84] sm:$0xf]
    %v60 = vld [vmem:[%s1 + $0x88] sm:$0xf]
    %v61 = vld [vmem:[%s1 + $0x8c] sm:$0xf]
    %v62 = vld [vmem:[%s1 + $0x90] sm:$0xf]
    %v63 = vld [vmem:[%s1 + $0x94] sm:$0xf]
    %v64 = vld [vmem:[%s1 + $0x98] sm:$0xf]
    %v65 = vld [vmem:[%s1 + $0x9c] sm:$0xf]
    %v66 = vld [vmem:[%s1 + $0xa0] sm:$0xf]
    %v67 = vld [vmem:[%s1 + $0xa4] sm:$0xf]
    %v68 = vld [vmem:[%s1 + $0xa8] sm:$0xf]
    %v69 = vld [vmem:[%s1 + $0xac] sm:$0xf]
    %v70 = vld [vmem:[%s1 + $0xb0] sm:$0xf]
    %v71 = vld [vmem:[%s1 + $0xb4] sm:$0xf]
    %v72 = vld [vmem:[%s1 + $0xb8] sm:$0xf]
    %v73 = vld [vmem:[%s1 + $0xbc] sm:$0xf]
    %v74 = vld [vmem:[%s1 + $0xc0] sm:$0xf]
    %v75 = vld [vmem:[%s1 + $0xc4] sm:$0xf]
    %v76 = vld [vmem:[%s1 + $0xc8] sm:$0xf]
    %v77 = vld [vmem:[%s1 + $0xcc] sm:$0xf]
    %v78 = vld [vmem:[%s1 + $0xd0] sm:$0xf]
    %v79 = vld [vmem:[%s1 + $0xd4] sm:$0xf]
    %v80 = vld [vmem:[%s1 + $0xd8] sm:$0xf]
    %v81 = vld [vmem:[%s1 + $0xdc] sm:$0xf]
    %v82 = vld [vmem:[%s1 + $0xe0] sm:$0xf]
    %v83 = vld [vmem:[%s1 + $0xe4] sm:$0xf]
    %v84 = vld [vmem:[%s1 + $0xe8] sm:$0xf]
    %v85 = vld [vmem:[%s1 + $0xec] sm:$0xf]
    %v86 = vld [vmem:[%s1 + $0xf0] sm:$0xf]
    %v87 = vld [vmem:[%s1 + $0xf4] sm:$0xf]
    %v88 = vld [vmem:[%s1 + $0xf8] sm:$0xf]
    %v89 = vld [vmem:[%s1 + $0xfc] sm:$0xf]
    %v90 = vld [vmem:[%s1 + $0x100] sm:$0xf]
    %v91 = vld [vmem:[%s1 + $0x104] sm:$0xf]
    %v92 = vld [vmem:[%s1 + $0x108] sm:$0xf]
    %v93 = vld [vmem:[%s1 + $0x10c] sm:$0xf]
    %v94 = vld [vmem:[%s1 + $0x110] sm:$0xf]
    %v95 = vld [vmem:[%s1 + $0x114] sm:$0xf]
    %v96 = vld [vmem:[%s1 + $0x118] sm:$0xf]
    %v97 = vld [vmem:[%s1 + $0x11c] sm:$0xf]
    %v98 = vld [vmem:[%s1 + $0x120] sm:$0xf]
    %v99 = vld [vmem:[%s1 + $0x124] sm:$0xf]
    %v100 = vld [vmem:[%s1 + $0x128] sm:$0xf]
    %v101 = vld [vmem:[%s1 + $0x12c] sm:$0xf]
    %v102 = vld [vmem:[%s1 + $0x130] sm:$0xf]
    %v103 = vld [vmem:[%s1 + $0x134] sm:$0xf]
    %v104 = vld [vmem:[%s1 + $0x138] sm:$0xf]
    %v105 = vld [vmem:[%s1 + $0x13c] sm:$0xf]
    %v106 = vld [vmem:[%s1 + $0x140] sm:$0xf]
    %v107 = vld [vmem:[%s1 + $0x144] sm:$0xf]
    %v108 = vld [vmem:[%s1 + $0x148] sm:$0xf]
    %v109 = vld [vmem:[%s1 + $0x14c] sm:$0xf]
    %v110 = vld [vmem:[%s1 + $0x150] sm:$0xf]
    %v111 = vld [vmem:[%s1 + $0x154] sm:$0xf]
    %v112 = vld [vmem:[%s1 + $0x158] sm:$0xf]
    %v113 = vld [vmem:[%s1 + $0x15c] sm:$0xf]
    %v114 = vld [vmem:[%s1 + $0x160] sm:$0xf]
    %v115 = vld [vmem:[%s1 + $0x164] sm:$0xf]
    %v116 = vld [vmem:[%s1 + $0x168] sm:$0xf]
    %v117 = vld [vmem:[%s1 + $0x16c] sm:$0xf]
    %v118 = vld [vmem:[%s1 + $0x170] sm:$0xf]
    %v119 = vld [vmem:[%s1 + $0x174] sm:$0xf]
    %v120 = vld [vmem:[%s1 + $0x178] sm:$0xf]
    %v121 = vld [vmem:[%s1 + $0x17c] sm:$0xf]
    %v122 = vld [vmem:[%s1 + $0x180] sm:$0xf]
    %v123 = vld [vmem:[%s1 + $0x184] sm:$0xf]
    %v124 = vld [vmem:[%s2] sm:$0x1]
    %v126 = vlaneseq
    %v127 = vshrl.u32 %v126, 7
    %v128 = vsub.s32 0, %v127
    %v129 = vrot.slane %v124, %v128
    %v132 = vcombine.high %v25, %v25
    %v134 = vunpack.c.l.s4 1966171168
    %v135 = vunpack.c.0.s8 %v134
    %v136 = vlaneseq
    %v137 = vshrl.u32 %v136, 7
    %v138 = vsub.s32 %v135, %v137
    %v139 = vrot.slane %v25, %v138
    %v141 = vunpack.c.l.s4 1966171168
    %v142 = vunpack.c.0.s8 %v141
    %v143 = vlaneseq
    %v144 = vshrl.u32 %v143, 7
    %v145 = vsub.s32 %v142, %v144
    %v146 = vrot.slane %v132, %v145
    %v147 = vcombine.high %v139, %v139
    %v148 = vcombine.high %v146, %v146
    %v150 = vunpack.c.l.s4 1966171168
    %v151 = vunpack.c.0.s8 %v150
    %v152 = vlaneseq
    %v153 = vshrl.u32 %v152, 7
    %v154 = vsub.s32 %v151, %v153
    %v155 = vrot.slane %v139, %v154
    %v157 = vunpack.c.l.s4 1966171168
    %v158 = vunpack.c.0.s8 %v157
    %v159 = vlaneseq
    %v160 = vshrl.u32 %v159, 7
    %v161 = vsub.s32 %v158, %v160
    %v162 = vrot.slane %v146, %v161
    %v164 = vunpack.c.l.s4 1966171168
    %v165 = vunpack.c.0.s8 %v164
    %v166 = vlaneseq
    %v167 = vshrl.u32 %v166, 7
    %v168 = vsub.s32 %v165, %v167
    %v169 = vrot.slane %v147, %v168
    %v171 = vunpack.c.l.s4 1966171168
    %v172 = vunpack.c.0.s8 %v171
    %v173 = vlaneseq
    %v174 = vshrl.u32 %v173, 7
    %v175 = vsub.s32 %v172, %v174
    %v176 = vrot.slane %v148, %v175
    %v177 = vcombine.high %v155, %v155
    %v178 = vcombine.high %v162, %v162
    %v179 = vcombine.high %v169, %v169
    %v284 = vunpack.c.l.b16 %v26
    %v285 = vunpack.c.l.b16 %v27
    %v286 = vunpack.c.l.b16 %v28
    %v287 = vunpack.c.l.b16 %v29
    %v288 = vunpack.c.l.b16 %v30
    %v289 = vunpack.c.l.b16 %v31
    %v290 = vunpack.c.l.b16 %v32
    %v291 = vunpack.c.l.b16 %v33
    %v292 = vunpack.c.l.b16 %v34
    %v293 = vunpack.c.l.b16 %v35
    %v294 = vunpack.c.l.b16 %v36
    %v295 = vunpack.c.l.b16 %v37
    %v296 = vunpack.c.l.b16 %v38
    %v297 = vunpack.c.l.b16 %v39
    %v298 = vunpack.c.l.b16 %v40
    %v299 = vunpack.c.l.b16 %v41
    %v300 = vunpack.c.l.b16 %v42
    %v301 = vunpack.c.l.b16 %v43
    %v302 = vunpack.c.l.b16 %v44
    %v303 = vunpack.c.l.b16 %v45
    %v304 = vunpack.c.l.b16 %v46
    %v305 = vunpack.c.l.b16 %v47
    %v306 = vunpack.c.l.b16 %v48
    %v307 = vunpack.c.l.b16 %v49
    %v308 = vunpack.c.l.b16 %v50
    %v309 = vunpack.c.l.b16 %v51
    %v310 = vunpack.c.l.b16 %v52
    %v311 = vunpack.c.l.b16 %v53
    %v312 = vunpack.c.l.b16 %v54
    %v313 = vunpack.c.l.b16 %v55
    %v314 = vunpack.c.l.b16 %v56
    %v315 = vunpack.c.l.b16 %v57
    %v316 = vunpack.c.l.b16 %v58
    %v317 = vunpack.c.l.b16 %v59
    %v318 = vunpack.c.l.b16 %v60
    %v319 = vunpack.c.l.b16 %v61
    %v320 = vunpack.c.l.b16 %v62
    %v321 = vunpack.c.l.b16 %v63
    %v322 = vunpack.c.l.b16 %v64
    %v323 = vunpack.c.l.b16 %v65
    %v324 = vunpack.c.l.b16 %v66
    %v325 = vunpack.c.l.b16 %v67
    %v326 = vunpack.c.l.b16 %v68
    %v327 = vunpack.c.l.b16 %v69
    %v328 = vunpack.c.l.b16 %v70
    %v329 = vunpack.c.l.b16 %v71
    %v330 = vunpack.c.l.b16 %v72
    %v331 = vunpack.c.l.b16 %v73
    %v332 = vunpack.c.l.b16 %v74
    %v333 = vunpack.c.l.b16 %v75
    %v334 = vunpack.c.l.b16 %v76
    %v335 = vunpack.c.l.b16 %v77
    %v336 = vunpack.c.l.b16 %v78
    %v337 = vunpack.c.l.b16 %v79
    %v338 = vunpack.c.l.b16 %v80
    %v339 = vunpack.c.l.b16 %v81
    %v340 = vunpack.c.l.b16 %v82
    %v341 = vunpack.c.l.b16 %v83
    %v342 = vunpack.c.l.b16 %v84
    %v343 = vunpack.c.l.b16 %v85
    %v344 = vunpack.c.l.b16 %v86
    %v345 = vunpack.c.l.b16 %v87
    %v346 = vunpack.c.l.b16 %v88
    %v347 = vunpack.c.l.b16 %v89
    %v348 = vunpack.c.l.b16 %v90
    %v349 = vunpack.c.l.b16 %v91
    %v350 = vunpack.c.l.b16 %v92
    %v351 = vunpack.c.l.b16 %v93
    %v352 = vunpack.c.l.b16 %v94
    %v353 = vunpack.c.l.b16 %v95
    %v354 = vunpack.c.l.b16 %v96
    %v355 = vunpack.c.l.b16 %v97
    %v356 = vunpack.c.l.b16 %v98
    %v357 = vunpack.c.l.b16 %v99
    %v358 = vunpack.c.l.b16 %v100
    %v359 = vunpack.c.l.b16 %v101
    %v360 = vunpack.c.l.b16 %v102
    %v361 = vunpack.c.l.b16 %v103
    %v362 = vunpack.c.l.b16 %v104
    %v363 = vunpack.c.l.b16 %v105
    %v364 = vunpack.c.l.b16 %v106
    %v365 = vunpack.c.l.b16 %v107
    %v366 = vunpack.c.l.b16 %v108
    %v367 = vunpack.c.l.b16 %v109
    %v368 = vunpack.c.l.b16 %v110
    %v369 = vunpack.c.l.b16 %v111
    %v370 = vunpack.c.l.b16 %v112
    %v371 = vunpack.c.l.b16 %v113
    %v372 = vunpack.c.l.b16 %v114
    %v373 = vunpack.c.l.b16 %v115
    %v374 = vunpack.c.l.b16 %v116
    %v375 = vunpack.c.l.b16 %v117
    %v376 = vunpack.c.l.b16 %v118
    %v377 = vunpack.c.l.b16 %v119
    %v378 = vunpack.c.l.b16 %v120
    %v379 = vunpack.c.l.b16 %v121
    %v380 = vunpack.c.l.b16 %v122
    %v381 = vunpack.c.l.b16 %v123
    %v382 = vpack.c.b16 %v285, %v284
    %v383 = vpack.c.b16 %v287, %v286
    %v384 = vpack.c.b16 %v289, %v288
    %v385 = vpack.c.b16 %v291, %v290
    %v386 = vpack.c.b16 %v293, %v292
    %v387 = vpack.c.b16 %v295, %v294
    %v388 = vpack.c.b16 %v297, %v296
    %v389 = vpack.c.b16 %v299, %v298
    %v390 = vpack.c.b16 %v301, %v300
    %v391 = vpack.c.b16 %v303, %v302
    %v392 = vpack.c.b16 %v305, %v304
    %v393 = vpack.c.b16 %v307, %v306
    %v394 = vpack.c.b16 %v309, %v308
    %v395 = vpack.c.b16 %v311, %v310
    %v396 = vpack.c.b16 %v313, %v312
    %v397 = vpack.c.b16 %v315, %v314
    %v398 = vpack.c.b16 %v317, %v316
    %v399 = vpack.c.b16 %v319, %v318
    %v400 = vpack.c.b16 %v321, %v320
    %v401 = vpack.c.b16 %v323, %v322
    %v402 = vpack.c.b16 %v325, %v324
    %v403 = vpack.c.b16 %v327, %v326
    %v404 = vpack.c.b16 %v329, %v328
    %v405 = vpack.c.b16 %v331, %v330
    %v406 = vpack.c.b16 %v333, %v332
    %v407 = vpack.c.b16 %v335, %v334
    %v408 = vpack.c.b16 %v337, %v336
    %v409 = vpack.c.b16 %v339, %v338
    %v410 = vpack.c.b16 %v341, %v340
    %v411 = vpack.c.b16 %v343, %v342
    %v412 = vpack.c.b16 %v345, %v344
    %v413 = vpack.c.b16 %v347, %v346
    %v414 = vpack.c.b16 %v349, %v348
    %v415 = vpack.c.b16 %v351, %v350
    %v416 = vpack.c.b16 %v353, %v352
    %v417 = vpack.c.b16 %v355, %v354
    %v418 = vpack.c.b16 %v357, %v356
    %v419 = vpack.c.b16 %v359, %v358
    %v420 = vpack.c.b16 %v361, %v360
    %v421 = vpack.c.b16 %v363, %v362
    %v422 = vpack.c.b16 %v365, %v364
    %v423 = vpack.c.b16 %v367, %v366
    %v424 = vpack.c.b16 %v369, %v368
    %v425 = vpack.c.b16 %v371, %v370
    %v426 = vpack.c.b16 %v373, %v372
    %v427 = vpack.c.b16 %v375, %v374
    %v428 = vpack.c.b16 %v377, %v376
    %v429 = vpack.c.b16 %v379, %v378
    %v430 = vpack.c.b16 %v381, %v380
    %vm480 = vcmask 130048
    %v482 = vsel %vm480, %v178, 0
    %484 = vmatprep.subr.bf16.mxu0 0
    %485 = vmatpush1.bf16.msra.mxu0 %v389
    %486 = vmatprep.subr.bf16.mxu0 0
    %487 = vmatpush1.bf16.msra.mxu0 %v388
    %488 = vmatprep.subr.bf16.mxu0 0
    %489 = vmatpush1.bf16.msra.mxu0 %v387
    %490 = vmatprep.subr.bf16.mxu0 0
    %491 = vmatpush1.bf16.msra.mxu0 %v386
    %492 = vmatprep.subr.bf16.mxu0 0
    %493 = vmatpush1.bf16.msra.mxu0 %v385
    %494 = vmatprep.subr.bf16.mxu0 0
    %495 = vmatpush1.bf16.msra.mxu0 %v384
    %496 = vmatprep.subr.bf16.mxu0 0
    %497 = vmatpush1.bf16.msra.mxu0 %v383
    %498 = vmatprep.subr.bf16.mxu0 0
    %499 = vmatpush1.bf16.msra.mxu0 %v382
    %500 = vmatprep.subr.bf16.mxu0 0
    %501 = vmatpush2.bf16.msra.mxu0 %v397
    %502 = vmatprep.subr.bf16.mxu0 0
    %503 = vmatpush2.bf16.msra.mxu0 %v396
    %504 = vmatprep.subr.bf16.mxu0 0
    %505 = vmatpush2.bf16.msra.mxu0 %v395
    %506 = vmatprep.subr.bf16.mxu0 0
    %507 = vmatpush2.bf16.msra.mxu0 %v394
    %508 = vmatprep.subr.bf16.mxu0 0
    %509 = vmatpush2.bf16.msra.mxu0 %v393
    %510 = vmatprep.subr.bf16.mxu0 0
    %511 = vmatpush2.bf16.msra.mxu0 %v392
    %512 = vmatprep.subr.bf16.mxu0 0
    %513 = vmatpush2.bf16.msra.mxu0 %v391
    %514 = vmatprep.subr.bf16.mxu0 0
    %515 = vmatpush2.bf16.msra.mxu0 %v390
    %516 = vmatprep.mubr.bf16.mxu0 %v169
    %517 = vmatmul.mubr.bf16.gmra.mxu0 %v155
    %v518 = vpop.f32.mrf.mxu0
    %v519 = vadd.f32 %v129, %v518
    %v520 = vpop.f32.mrf.mxu0
    %v521 = vpop.f32.mrf.mxu0
    %v522 = vpop.f32.mrf.mxu0
    %523 = vdwg.mxu0
    %524 = vmatprep.subr.bf16.mxu0 0
    %525 = vmatpush1.bf16.msra.mxu0 %v405
    %526 = vmatprep.subr.bf16.mxu0 0
    %527 = vmatpush1.bf16.msra.mxu0 %v404
    %528 = vmatprep.subr.bf16.mxu0 0
    %529 = vmatpush1.bf16.msra.mxu0 %v403
    %530 = vmatprep.subr.bf16.mxu0 0
    %531 = vmatpush1.bf16.msra.mxu0 %v402
    %532 = vmatprep.subr.bf16.mxu0 0
    %533 = vmatpush1.bf16.msra.mxu0 %v401
    %534 = vmatprep.subr.bf16.mxu0 0
    %535 = vmatpush1.bf16.msra.mxu0 %v400
    %536 = vmatprep.subr.bf16.mxu0 0
    %537 = vmatpush1.bf16.msra.mxu0 %v399
    %538 = vmatprep.subr.bf16.mxu0 0
    %539 = vmatpush1.bf16.msra.mxu0 %v398
    %540 = vmatprep.subr.bf16.mxu0 0
    %541 = vmatpush2.bf16.msra.mxu0 %v413
    %542 = vmatprep.subr.bf16.mxu0 0
    %543 = vmatpush2.bf16.msra.mxu0 %v412
    %544 = vmatprep.subr.bf16.mxu0 0
    %545 = vmatpush2.bf16.msra.mxu0 %v411
    %546 = vmatprep.subr.bf16.mxu0 0
    %547 = vmatpush2.bf16.msra.mxu0 %v410
    %548 = vmatprep.subr.bf16.mxu0 0
    %549 = vmatpush2.bf16.msra.mxu0 %v409
    %550 = vmatprep.subr.bf16.mxu0 0
    %551 = vmatpush2.bf16.msra.mxu0 %v408
    %552 = vmatprep.subr.bf16.mxu0 0
    %553 = vmatpush2.bf16.msra.mxu0 %v407
    %554 = vmatprep.subr.bf16.mxu0 0
    %555 = vmatpush2.bf16.msra.mxu0 %v406
    %556 = vmatprep.mubr.bf16.mxu0 %v179
    %557 = vmatmul.mubr.bf16.gmra.mxu0 %v177
    %v558 = vpop.f32.mrf.mxu0
    %v559 = vadd.f32 %v519, %v558
    %v560 = vpop.f32.mrf.mxu0
    %v561 = vpop.f32.mrf.mxu0
    %v562 = vpop.f32.mrf.mxu0
    %563 = vdwg.mxu0
    %564 = vmatprep.subr.bf16.mxu0 0
    %565 = vmatpush1.bf16.msra.mxu0 %v421
    %566 = vmatprep.subr.bf16.mxu0 0
    %567 = vmatpush1.bf16.msra.mxu0 %v420
    %568 = vmatprep.subr.bf16.mxu0 0
    %569 = vmatpush1.bf16.msra.mxu0 %v419
    %570 = vmatprep.subr.bf16.mxu0 0
    %571 = vmatpush1.bf16.msra.mxu0 %v418
    %572 = vmatprep.subr.bf16.mxu0 0
    %573 = vmatpush1.bf16.msra.mxu0 %v417
    %574 = vmatprep.subr.bf16.mxu0 0
    %575 = vmatpush1.bf16.msra.mxu0 %v416
    %576 = vmatprep.subr.bf16.mxu0 0
    %577 = vmatpush1.bf16.msra.mxu0 %v415
    %578 = vmatprep.subr.bf16.mxu0 0
    %579 = vmatpush1.bf16.msra.mxu0 %v414
    %580 = vmatprep.subr.bf16.mxu0 0
    %581 = vmatpush2.bf16.msra.mxu0 %v429
    %582 = vmatprep.subr.bf16.mxu0 0
    %583 = vmatpush2.bf16.msra.mxu0 %v428
    %584 = vmatprep.subr.bf16.mxu0 0
    %585 = vmatpush2.bf16.msra.mxu0 %v427
    %586 = vmatprep.subr.bf16.mxu0 0
    %587 = vmatpush2.bf16.msra.mxu0 %v426
    %588 = vmatprep.subr.bf16.mxu0 0
    %589 = vmatpush2.bf16.msra.mxu0 %v425
    %590 = vmatprep.subr.bf16.mxu0 0
    %591 = vmatpush2.bf16.msra.mxu0 %v424
    %592 = vmatprep.subr.bf16.mxu0 0
    %593 = vmatpush2.bf16.msra.mxu0 %v423
    %594 = vmatprep.subr.bf16.mxu0 0
    %595 = vmatpush2.bf16.msra.mxu0 %v422
    %596 = vmatprep.mubr.bf16.mxu0 %v176
    %597 = vmatmul.mubr.bf16.gmra.mxu0 %v162
    %v598 = vpop.f32.mrf.mxu0
    %v599 = vadd.f32 %v559, %v598
    %v600 = vpop.f32.mrf.mxu0
    %v601 = vpop.f32.mrf.mxu0
    %v602 = vpop.f32.mrf.mxu0
    %603 = vdwg.mxu0
    %604 = vmatprep.subr.bf16.mxu0 0
    %605 = vmatpush1.bf16.msra.mxu0 0
    %606 = vmatprep.subr.bf16.mxu0 0
    %607 = vmatpush1.bf16.msra.mxu0 0
    %608 = vmatprep.subr.bf16.mxu0 0
    %609 = vmatpush1.bf16.msra.mxu0 0
    %610 = vmatprep.subr.bf16.mxu0 0
    %611 = vmatpush1.bf16.msra.mxu0 0
    %612 = vmatprep.subr.bf16.mxu0 0
    %613 = vmatpush1.bf16.msra.mxu0 0
    %614 = vmatprep.subr.bf16.mxu0 0
    %615 = vmatpush1.bf16.msra.mxu0 0
    %616 = vmatprep.subr.bf16.mxu0 0
    %617 = vmatpush1.bf16.msra.mxu0 0
    %618 = vmatprep.subr.bf16.mxu0 0
    %619 = vmatpush1.bf16.msra.mxu0 %v430
    %620 = vmatprep.subr.bf16.mxu0 0
    %621 = vmatpush2.bf16.msra.mxu0 0
    %622 = vmatprep.subr.bf16.mxu0 0
    %623 = vmatpush2.bf16.msra.mxu0 0
    %624 = vmatprep.subr.bf16.mxu0 0
    %625 = vmatpush2.bf16.msra.mxu0 0
    %626 = vmatprep.subr.bf16.mxu0 0
    %627 = vmatpush2.bf16.msra.mxu0 0
    %628 = vmatprep.subr.bf16.mxu0 0
    %629 = vmatpush2.bf16.msra.mxu0 0
    %630 = vmatprep.subr.bf16.mxu0 0
    %631 = vmatpush2.bf16.msra.mxu0 0
    %632 = vmatprep.subr.bf16.mxu0 0
    %633 = vmatpush2.bf16.msra.mxu0 0
    %634 = vmatprep.subr.bf16.mxu0 0
    %635 = vmatpush2.bf16.msra.mxu0 0
    %636 = vmatprep.mubr.bf16.mxu0 0
    %637 = vmatmul.mubr.bf16.gmra.mxu0 %v482
    %v638 = vpop.f32.mrf.mxu0
    %v639 = vadd.f32 %v599, %v638
    %v640 = vpop.f32.mrf.mxu0
    %v641 = vpop.f32.mrf.mxu0
    %v642 = vpop.f32.mrf.mxu0
    %643 = vdwg.mxu0
    %v644 = vld [vmem:[%s3] sm:$0x3]
    %v645 = vmul.f32 %v639, %v644
    %vm646 = vcmp.gt.f32.partialorder %v645, 0.0
    %v647 = vmul.f32 %v645, 0.01
    %v648 = vsel %vm646, %v645, %v647
    %v649 = vpack.c.bf16 %v648, %v648
    %v650 = vld [vmem:[%s4] sm:$0xf]
    %v651 = vld [vmem:[%s4 + $0x4] sm:$0xf]
    %v652 = vld [vmem:[%s4 + $0x8] sm:$0xf]
    %v653 = vld [vmem:[%s4 + $0xc] sm:$0xf]
    %v654 = vld [vmem:[%s4 + $0x10] sm:$0xf]
    %v655 = vld [vmem:[%s4 + $0x14] sm:$0xf]
    %v656 = vld [vmem:[%s4 + $0x18] sm:$0xf]
    %v657 = vld [vmem:[%s4 + $0x1c] sm:$0xf]
    %v658 = vld [vmem:[%s4 + $0x20] sm:$0xf]
    %v659 = vld [vmem:[%s4 + $0x24] sm:$0xf]
    %v660 = vld [vmem:[%s4 + $0x28] sm:$0xf]
    %v661 = vld [vmem:[%s4 + $0x2c] sm:$0xf]
    %v662 = vld [vmem:[%s4 + $0x30] sm:$0xf]
    %v663 = vld [vmem:[%s4 + $0x34] sm:$0xf]
    %v664 = vld [vmem:[%s4 + $0x38] sm:$0xf]
    %v665 = vld [vmem:[%s4 + $0x3c] sm:$0xf]
    %v666 = vld [vmem:[%s5] sm:$0x1]
    %v668 = vlaneseq
    %v669 = vshrl.u32 %v668, 7
    %v670 = vsub.s32 0, %v669
    %v671 = vrot.slane %v666, %v670
    %v689 = vunpack.c.l.b16 %v650
    %v690 = vunpack.c.l.b16 %v651
    %v691 = vunpack.c.l.b16 %v652
    %v692 = vunpack.c.l.b16 %v653
    %v693 = vunpack.c.l.b16 %v654
    %v694 = vunpack.c.l.b16 %v655
    %v695 = vunpack.c.l.b16 %v656
    %v696 = vunpack.c.l.b16 %v657
    %v697 = vunpack.c.l.b16 %v658
    %v698 = vunpack.c.l.b16 %v659
    %v699 = vunpack.c.l.b16 %v660
    %v700 = vunpack.c.l.b16 %v661
    %v701 = vunpack.c.l.b16 %v662
    %v702 = vunpack.c.l.b16 %v663
    %v703 = vunpack.c.l.b16 %v664
    %v704 = vunpack.c.l.b16 %v665
    %v705 = vpack.c.b16 %v690, %v689
    %v706 = vpack.c.b16 %v692, %v691
    %v707 = vpack.c.b16 %v694, %v693
    %v708 = vpack.c.b16 %v696, %v695
    %v709 = vpack.c.b16 %v698, %v697
    %v710 = vpack.c.b16 %v700, %v699
    %v711 = vpack.c.b16 %v702, %v701
    %v712 = vpack.c.b16 %v704, %v703
    %721 = vmatprep.subr.bf16.mxu0 0
    %722 = vmatpush1.bf16.msra.mxu0 %v712
    %723 = vmatprep.subr.bf16.mxu0 0
    %724 = vmatpush1.bf16.msra.mxu0 %v711
    %725 = vmatprep.subr.bf16.mxu0 0
    %726 = vmatpush1.bf16.msra.mxu0 %v710
    %727 = vmatprep.subr.bf16.mxu0 0
    %728 = vmatpush1.bf16.msra.mxu0 %v709
    %729 = vmatprep.subr.bf16.mxu0 0
    %730 = vmatpush1.bf16.msra.mxu0 %v708
    %731 = vmatprep.subr.bf16.mxu0 0
    %732 = vmatpush1.bf16.msra.mxu0 %v707
    %733 = vmatprep.subr.bf16.mxu0 0
    %734 = vmatpush1.bf16.msra.mxu0 %v706
    %735 = vmatprep.subr.bf16.mxu0 0
    %736 = vmatpush1.bf16.msra.mxu0 %v705
    %737 = vmatprep.subr.bf16.mxu0 0
    %738 = vmatpush2.bf16.msra.mxu0 0
    %739 = vmatprep.subr.bf16.mxu0 0
    %740 = vmatpush2.bf16.msra.mxu0 0
    %741 = vmatprep.subr.bf16.mxu0 0
    %742 = vmatpush2.bf16.msra.mxu0 0
    %743 = vmatprep.subr.bf16.mxu0 0
    %744 = vmatpush2.bf16.msra.mxu0 0
    %745 = vmatprep.subr.bf16.mxu0 0
    %746 = vmatpush2.bf16.msra.mxu0 0
    %747 = vmatprep.subr.bf16.mxu0 0
    %748 = vmatpush2.bf16.msra.mxu0 0
    %749 = vmatprep.subr.bf16.mxu0 0
    %750 = vmatpush2.bf16.msra.mxu0 0
    %751 = vmatprep.subr.bf16.mxu0 0
    %752 = vmatpush2.bf16.msra.mxu0 0
    %753 = vmatprep.mubr.bf16.mxu0 0
    %754 = vmatmul.mubr.bf16.gmra.mxu0 %v649
    %v755 = vpop.f32.mrf.mxu0
    %v756 = vadd.f32 %v671, %v755
    %v757 = vpop.f32.mrf.mxu0
    %v758 = vpop.f32.mrf.mxu0
    %v759 = vpop.f32.mrf.mxu0
    %760 = vdwg.mxu0
    %761 = vst [vmem:[#allocation2] sm:$0x3] %v756
    // Predicated region
    $region26: #{model_forward.5} parent=1 // pred_check
      _
    $region27: #{model_forward.5} parent=1 // pred_check_branch
      %763 = sbr.rel (0) target = $region29
    $region28: #{model_forward.5} parent=1 // pred_region
      %s765 = ssub.s32 32, 32
      %766 = vsyncadd [#allocation3], %s765
      %s768 = sshll.u32 [#allocation2], 4
      %s769 = int_to_ptr.vmem [resolvable:$true] %s768
      %771 = dma.vmem_to_hbm [thread:$0]  %s769, 32, %s6, [#allocation3]
    $region29: #{model_forward.5} parent=1 // pred_fallthru
      _
    // Predicated region
    $region30: #{model_forward.5} parent=1 // pred_check
      _
    $region31: #{model_forward.5} parent=1 // pred_check_branch
      %773 = sbr.rel (0) target = $region33
    $region32: #{model_forward.5} parent=1 // pred_region
      %774 = dma.done [#allocation3], 32
    $region33: #{model_forward.5} parent=1 // pred_fallthru
      _
    %775 = vsyncpa [#allocation3], 1

</llo_original>
